<compile_context>
chip_gen: v5e
topology: v5e:2x2
jax: 0.10.0
libtpu: 0.0.40
codegen_flags: <defaults>
</compile_context>

<pallas_src>
import jax
import jax.numpy as jnp
from jax import lax
from jax.experimental import pallas as pl
from jax.experimental.pallas import tpu as pltpu

HIDDEN = 512
OUT_PAD = 128          # final Linear padded from 1 -> 128 output lanes (lane-dense store)
BN_EPS = 1e-5
NUM_BLOCKS = 4
LAYER_GRID_THRESHOLD = 256   # batch size above which the layer-gridded kernel is used
VMEM_LIMIT_BYTES = 48 * 1024 * 1024   # < 64 MiB (v7x physical), << 128 MiB (v5e/v6e)


# ---------------------------------------------------------------------------
# Kernel 1: grid-less full-block kernel (small batch / latency-bound regime).
# ---------------------------------------------------------------------------
def domain_classifier_kernel(h_ref, w_ref, w5_ref, gb_ref, b5_ref, out_ref):
    x = h_ref[...]                                # (B, 512) bf16
    inv_b = 1.0 / x.shape[0]                      # static batch size

    for i in range(NUM_BLOCKS):
        # Linear (bias dropped: cancelled by the following batch-stats BN).
        z = jnp.dot(x, w_ref[i], preferred_element_type=jnp.float32)   # (B,512) f32

        # BatchNorm1d (training mode): single-pass moments, folded affine.
        s1 = jnp.sum(z, axis=0, keepdims=True)
        s2 = jnp.sum(z * z, axis=0, keepdims=True)
        mean = s1 * inv_b
        var = jnp.maximum(s2 * inv_b - mean * mean, 0.0)   # clamp f32 cancellation
        scale = gb_ref[i, 0:1, :] * lax.rsqrt(var + BN_EPS)
        shift = gb_ref[i, 1:2, :] - mean * scale

        # BN + ReLU as one FMA + max; carry activation in bf16 (next MXU LHS dtype).
        x = jnp.maximum(z * scale + shift, 0.0).astype(jnp.bfloat16)

    # Final Linear(512, 1) padded to 128 output lanes.
    y = jnp.dot(x, w5_ref[...], preferred_element_type=jnp.float32) + b5_ref[...]
    out_ref[...] = y.astype(out_ref.dtype)


# ---------------------------------------------------------------------------
# Kernel 2: layer-gridded kernel (large batch): weight DMA for layer i+1 is
# double-buffered by Pallas underneath layer i's matmul + BN.
# ---------------------------------------------------------------------------
def domain_classifier_kernel_gridded(h_ref, w_ref, w5_ref, gb_ref, b5_ref,
                                     out_ref, x_ref):
    i = pl.program_id(0)
    last = pl.num_programs(0) - 1

    @pl.when(i == 0)
    def _():
        x_ref[...] = h_ref[...]                   # h already bf16

    x = x_ref[...]                                # (B, 512) bf16
    inv_b = 1.0 / x.shape[0]

    # Linear (bias dropped), per-layer weight block (1,512,512) -> (512,512).
    z = jnp.dot(x, w_ref[0], preferred_element_type=jnp.float32)

    # BatchNorm1d (training mode) - the whole batch lives in this invocation.
    s1 = jnp.sum(z, axis=0, keepdims=True)
    s2 = jnp.sum(z * z, axis=0, keepdims=True)
    mean = s1 * inv_b
    var = jnp.maximum(s2 * inv_b - mean * mean, 0.0)
    scale = gb_ref[0, 0:1, :] * lax.rsqrt(var + BN_EPS)
    shift = gb_ref[0, 1:2, :] - mean * scale

    x_new = jnp.maximum(z * scale + shift, 0.0).astype(jnp.bfloat16)
    x_ref[...] = x_new

    @pl.when(i == last)
    def _():
        y = jnp.dot(x_new, w5_ref[...], preferred_element_type=jnp.float32) + b5_ref[...]
        out_ref[...] = y.astype(out_ref.dtype)


# ---------------------------------------------------------------------------
# Wrapper
# ---------------------------------------------------------------------------
def domain_classifier(h, params, *, layer_grid_threshold=LAYER_GRID_THRESHOLD):
    """h: (B, 512) float; params = (w_stack, w5_pad, gb_stack, b5_row)."""
    w_stack, w5_pad, gb_stack, b5_row = params
    B = h.shape[0]
    h_bf16 = h.astype(jnp.bfloat16)               # cast once; MXU LHS is bf16 anyway

    param_bytes = (w_stack.size * w_stack.dtype.itemsize
                   + w5_pad.size * w5_pad.dtype.itemsize
                   + gb_stack.size * gb_stack.dtype.itemsize
                   + b5_row.size * b5_row.dtype.itemsize)
    cost = pl.CostEstimate(
        flops=2 * B * HIDDEN * HIDDEN * NUM_BLOCKS + 2 * B * HIDDEN * OUT_PAD,
        transcendentals=NUM_BLOCKS * HIDDEN,
        bytes_accessed=param_bytes + h_bf16.size * 2 + B * OUT_PAD * 4,
    )

    if B < layer_grid_threshold:
        # Tiny / latency-bound: single full-block invocation, everything in VMEM.
        y_pad = pl.pallas_call(
            domain_classifier_kernel,
            out_shape=jax.ShapeDtypeStruct((B, OUT_PAD), jnp.float32),
            in_specs=[pl.BlockSpec(memory_space=pltpu.MemorySpace.VMEM)] * 5,
            out_specs=pl.BlockSpec(memory_space=pltpu.MemorySpace.VMEM),
            compiler_params=pltpu.CompilerParams(vmem_limit_bytes=VMEM_LIMIT_BYTES),
            cost_estimate=cost,
        )(h_bf16, w_stack, w5_pad, gb_stack, b5_row)
    else:
        # Larger batch: grid over the layer index; per-layer weight DMA is
        # double-buffered by the Pallas pipeline under the previous layer's work.
        y_pad = pl.pallas_call(
            domain_classifier_kernel_gridded,
            out_shape=jax.ShapeDtypeStruct((B, OUT_PAD), jnp.float32),
            grid_spec=pltpu.PrefetchScalarGridSpec(
                num_scalar_prefetch=0,
                grid=(NUM_BLOCKS,),
                in_specs=[
                    pl.BlockSpec((B, HIDDEN), lambda i: (0, 0)),            # h (resident)
                    pl.BlockSpec((1, HIDDEN, HIDDEN), lambda i: (i, 0, 0)), # layer weight
                    pl.BlockSpec((HIDDEN, OUT_PAD), lambda i: (0, 0)),      # final weight
                    pl.BlockSpec((1, 8, HIDDEN), lambda i: (i, 0, 0)),      # gamma/beta
                    pl.BlockSpec((1, OUT_PAD), lambda i: (0, 0)),           # b5 row
                ],
                out_specs=pl.BlockSpec((B, OUT_PAD), lambda i: (0, 0)),
                scratch_shapes=[pltpu.VMEM((B, HIDDEN), jnp.bfloat16)],     # carried x
            ),
            compiler_params=pltpu.CompilerParams(
                dimension_semantics=("arbitrary",),
                vmem_limit_bytes=VMEM_LIMIT_BYTES,
            ),
            cost_estimate=cost,
        )(h_bf16, w_stack, w5_pad, gb_stack, b5_row)

    return y_pad[:, :1]                            # true (B, 1) output


# ---------------------------------------------------------------------------
# Parameter construction / packing
# ---------------------------------------------------------------------------
def init_torch_like_params(key):
    """Deterministic synthetic parameters in PyTorch layout (W: (out,in), vectors 1-D)."""
    keys = jax.random.split(key, 18)
    layers = []
    idx = 0
    for _ in range(NUM_BLOCKS):
        w = jax.random.normal(keys[idx], (HIDDEN, HIDDEN), jnp.float32) / jnp.sqrt(HIDDEN); idx += 1
        b = 0.01 * jax.random.normal(keys[idx], (HIDDEN,), jnp.float32); idx += 1
        g = 1.0 + 0.1 * jax.random.normal(keys[idx], (HIDDEN,), jnp.float32); idx += 1
        be = 0.1 * jax.random.normal(keys[idx], (HIDDEN,), jnp.float32); idx += 1
        layers.append((w, b, g, be))
    w5 = jax.random.normal(keys[16], (1, HIDDEN), jnp.float32) / jnp.sqrt(HIDDEN)
    b5 = 0.01 * jax.random.normal(keys[17], (1,), jnp.float32)
    return layers, (w5, b5)


def pack_params(layers, final):
    """Pack PyTorch-layout params into the kernel's consolidated arrays.

    Hidden-layer Linear biases are deliberately dropped: Linear-bias followed by
    BatchNorm with batch statistics cancels exactly (mean absorbs the bias,
    variance is shift-invariant), so the forward pass is unchanged.
    """
    # 4 hidden weights stacked, pre-transposed to (in,out), bf16 (one DMA, native MXU dtype).
    w_stack = jnp.stack([w.T for (w, _, _, _) in layers]).astype(jnp.bfloat16)  # (4,512,512)

    # Per-layer gamma/beta rows (row 0 = gamma, row 1 = beta, rows 2..7 padding).
    gb_stack = jnp.zeros((NUM_BLOCKS, 8, HIDDEN), jnp.float32)
    for i, (_, _, g, be) in enumerate(layers):
        gb_stack = gb_stack.at[i, 0].set(g)
        gb_stack = gb_stack.at[i, 1].set(be)

    w5, b5 = final
    # Zero-pad final weight/bias to 128 output lanes (lane-dense matmul + store).
    w5_pad = jnp.zeros((HIDDEN, OUT_PAD), jnp.float32).at[:, 0].set(w5[0]).astype(jnp.bfloat16)
    b5_row = jnp.zeros((1, OUT_PAD), jnp.float32).at[0, 0].set(b5[0])
    return w_stack, w5_pad, gb_stack, b5_row


# ---------------------------------------------------------------------------
# References
# ---------------------------------------------------------------------------
def reference_forward_packed(h, params):
    """Pure-JAX reference mirroring the kernel numerics (bf16 weights/activations)."""
    w_stack, w5_pad, gb_stack, b5_row = params
    x = h.astype(jnp.bfloat16)
    for i in range(NUM_BLOCKS):
        z = jnp.dot(x, w_stack[i], preferred_element_type=jnp.float32)
        mean = jnp.mean(z, axis=0, keepdims=True)
        var = jnp.maximum(jnp.mean(z * z, axis=0, keepdims=True) - mean * mean, 0.0)
        scale = gb_stack[i, 0:1, :] * lax.rsqrt(var + BN_EPS)
        shift = gb_stack[i, 1:2, :] - mean * scale
        x = jnp.maximum(z * scale + shift, 0.0).astype(jnp.bfloat16)
    y = jnp.dot(x, w5_pad, preferred_element_type=jnp.float32) + b5_row
    return y[:, :1]


def reference_forward_fp32(h, layers, final):
    """Original PyTorch semantics (training mode): f32 Linear(+bias) -> BN(batch stats) -> ReLU."""
    x = h
    for (w, b, g, be) in layers:
        z = x @ w.T + b
        mean = jnp.mean(z, axis=0, keepdims=True)
        var = jnp.mean((z - mean) ** 2, axis=0, keepdims=True)     # biased variance
        x = jnp.maximum(g * (z - mean) * lax.rsqrt(var + BN_EPS) + be, 0.0)
    w5, b5 = final
    return x @ w5.T + b5


# ---------------------------------------------------------------------------
if __name__ == "__main__":
    key = jax.random.PRNGKey(0)
    key_h, key_h2, key_p = jax.random.split(key, 3)

    layers, final = init_torch_like_params(key_p)
    params = pack_params(layers, final)

    # Small batch -> grid-less full-block kernel (BatchNorm1d training mode needs B > 1).
    B = 8
    h = jax.random.normal(key_h, (B, HIDDEN), jnp.float32)
    y = jax.block_until_ready(domain_classifier(h, params))
    assert y.shape == (B, 1)

    y_ref = reference_forward_packed(h, params)
    assert jnp.allclose(y, y_ref, atol=1e-2, rtol=1e-2), "small-batch kernel vs packed reference mismatch"

    y_fp32 = reference_forward_fp32(h, layers, final)
    assert jnp.allclose(y, y_fp32, atol=1e-1, rtol=1e-1), "small-batch kernel vs fp32 torch-semantics mismatch"

    # Layer-gridded path (force it via the threshold so shapes stay small).
    B2 = 64
    h2 = jax.random.normal(key_h2, (B2, HIDDEN), jnp.float32)
    y2 = jax.block_until_ready(domain_classifier(h2, params, layer_grid_threshold=1))
    assert y2.shape == (B2, 1)
    y2_ref = reference_forward_packed(h2, params)
    assert jnp.allclose(y2, y2_ref, atol=1e-2, rtol=1e-2), "gridded kernel vs packed reference mismatch"

    print("KERNEL_OK")
</pallas_src>

<mosaic_0001>
module attributes {stable_mosaic.version = 11 : i64} {
  func.func @domain_classifier_kernel(%arg0: memref<8x512xbf16, #tpu.memory_space<vmem>>, %arg1: memref<4x512x512xbf16, #tpu.memory_space<vmem>>, %arg2: memref<512x128xbf16, #tpu.memory_space<vmem>>, %arg3: memref<4x8x512xf32, #tpu.memory_space<vmem>>, %arg4: memref<1x128xf32, #tpu.memory_space<vmem>>, %arg5: memref<8x128xf32, #tpu.memory_space<vmem>>) attributes {dimension_semantics = [], scalar_prefetch = 0 : i64, scratch_operands = 0 : i64, tpu.core_type = #tpu.core_type<tc>} {
    %c0 = arith.constant 0 : index
    %c0_0 = arith.constant 0 : index
    %0 = vector.load %arg0[%c0, %c0_0] : memref<8x512xbf16, #tpu.memory_space<vmem>>, vector<8x512xbf16>
    %c0_1 = arith.constant 0 : index
    %c0_2 = arith.constant 0 : index
    %c0_3 = arith.constant 0 : index
    %1 = vector.load %arg1[%c0_1, %c0_2, %c0_3] : memref<4x512x512xbf16, #tpu.memory_space<vmem>>, vector<1x512x512xbf16>
    %2 = vector.shape_cast %1 : vector<1x512x512xbf16> to vector<512x512xbf16>
    %cst = arith.constant dense<0.000000e+00> : vector<8x512xf32>
    %3 = tpu.matmul %0, %2, %cst {dimension_numbers = #tpu.dot_dimension_numbers<[1], [0], [0], [1], [0, 0, 1, 1], [], []>} : vector<8x512xbf16>, vector<512x512xbf16>, vector<8x512xf32> -> vector<8x512xf32>
    %cst_4 = arith.constant dense<0.000000e+00> : vector<512xf32>
    %4 = vector.multi_reduction <add>, %3, %cst_4 [0] : vector<8x512xf32> to vector<512xf32>
    %5 = vector.shape_cast %4 : vector<512xf32> to vector<1x512xf32>
    %6 = arith.mulf %3, %3 : vector<8x512xf32>
    %cst_5 = arith.constant dense<0.000000e+00> : vector<512xf32>
    %7 = vector.multi_reduction <add>, %6, %cst_5 [0] : vector<8x512xf32> to vector<512xf32>
    %8 = vector.shape_cast %7 : vector<512xf32> to vector<1x512xf32>
    %cst_6 = arith.constant 1.250000e-01 : f32
    %9 = vector.broadcast %cst_6 : f32 to vector<1x512xf32>
    %10 = arith.mulf %5, %9 : vector<1x512xf32>
    %cst_7 = arith.constant 1.250000e-01 : f32
    %11 = vector.broadcast %cst_7 : f32 to vector<1x512xf32>
    %12 = arith.mulf %8, %11 : vector<1x512xf32>
    %13 = arith.mulf %10, %10 : vector<1x512xf32>
    %14 = arith.subf %12, %13 : vector<1x512xf32>
    %cst_8 = arith.constant 0.000000e+00 : f32
    %15 = vector.broadcast %cst_8 : f32 to vector<1x512xf32>
    %16 = arith.maximumf %14, %15 : vector<1x512xf32>
    %c0_9 = arith.constant 0 : index
    %c0_10 = arith.constant 0 : index
    %c0_11 = arith.constant 0 : index
    %17 = vector.load %arg3[%c0_9, %c0_10, %c0_11] : memref<4x8x512xf32, #tpu.memory_space<vmem>>, vector<1x1x512xf32>
    %18 = vector.shape_cast %17 : vector<1x1x512xf32> to vector<1x512xf32>
    %cst_12 = arith.constant 9.99999974E-6 : f32
    %19 = vector.broadcast %cst_12 : f32 to vector<1x512xf32>
    %20 = arith.addf %16, %19 : vector<1x512xf32>
    %21 = math.rsqrt %20 : vector<1x512xf32>
    %22 = arith.mulf %18, %21 : vector<1x512xf32>
    %c0_13 = arith.constant 0 : index
    %c1 = arith.constant 1 : index
    %c0_14 = arith.constant 0 : index
    %23 = vector.load %arg3[%c0_13, %c1, %c0_14] : memref<4x8x512xf32, #tpu.memory_space<vmem>>, vector<1x1x512xf32>
    %24 = vector.shape_cast %23 : vector<1x1x512xf32> to vector<1x512xf32>
    %25 = arith.mulf %10, %22 : vector<1x512xf32>
    %26 = arith.subf %24, %25 : vector<1x512xf32>
    %27 = vector.broadcast %22 : vector<1x512xf32> to vector<8x512xf32>
    %28 = arith.mulf %3, %27 : vector<8x512xf32>
    %29 = vector.broadcast %26 : vector<1x512xf32> to vector<8x512xf32>
    %30 = arith.addf %28, %29 : vector<8x512xf32>
    %cst_15 = arith.constant 0.000000e+00 : f32
    %31 = vector.broadcast %cst_15 : f32 to vector<8x512xf32>
    %32 = arith.maximumf %30, %31 : vector<8x512xf32>
    %33 = arith.truncf %32 : vector<8x512xf32> to vector<8x512xbf16>
    %c1_16 = arith.constant 1 : index
    %c0_17 = arith.constant 0 : index
    %c0_18 = arith.constant 0 : index
    %34 = vector.load %arg1[%c1_16, %c0_17, %c0_18] : memref<4x512x512xbf16, #tpu.memory_space<vmem>>, vector<1x512x512xbf16>
    %35 = vector.shape_cast %34 : vector<1x512x512xbf16> to vector<512x512xbf16>
    %cst_19 = arith.constant dense<0.000000e+00> : vector<8x512xf32>
    %36 = tpu.matmul %33, %35, %cst_19 {dimension_numbers = #tpu.dot_dimension_numbers<[1], [0], [0], [1], [0, 0, 1, 1], [], []>} : vector<8x512xbf16>, vector<512x512xbf16>, vector<8x512xf32> -> vector<8x512xf32>
    %cst_20 = arith.constant dense<0.000000e+00> : vector<512xf32>
    %37 = vector.multi_reduction <add>, %36, %cst_20 [0] : vector<8x512xf32> to vector<512xf32>
    %38 = vector.shape_cast %37 : vector<512xf32> to vector<1x512xf32>
    %39 = arith.mulf %36, %36 : vector<8x512xf32>
    %cst_21 = arith.constant dense<0.000000e+00> : vector<512xf32>
    %40 = vector.multi_reduction <add>, %39, %cst_21 [0] : vector<8x512xf32> to vector<512xf32>
    %41 = vector.shape_cast %40 : vector<512xf32> to vector<1x512xf32>
    %cst_22 = arith.constant 1.250000e-01 : f32
    %42 = vector.broadcast %cst_22 : f32 to vector<1x512xf32>
    %43 = arith.mulf %38, %42 : vector<1x512xf32>
    %cst_23 = arith.constant 1.250000e-01 : f32
    %44 = vector.broadcast %cst_23 : f32 to vector<1x512xf32>
    %45 = arith.mulf %41, %44 : vector<1x512xf32>
    %46 = arith.mulf %43, %43 : vector<1x512xf32>
    %47 = arith.subf %45, %46 : vector<1x512xf32>
    %cst_24 = arith.constant 0.000000e+00 : f32
    %48 = vector.broadcast %cst_24 : f32 to vector<1x512xf32>
    %49 = arith.maximumf %47, %48 : vector<1x512xf32>
    %c1_25 = arith.constant 1 : index
    %c0_26 = arith.constant 0 : index
    %c0_27 = arith.constant 0 : index
    %50 = vector.load %arg3[%c1_25, %c0_26, %c0_27] : memref<4x8x512xf32, #tpu.memory_space<vmem>>, vector<1x1x512xf32>
    %51 = vector.shape_cast %50 : vector<1x1x512xf32> to vector<1x512xf32>
    %cst_28 = arith.constant 9.99999974E-6 : f32
    %52 = vector.broadcast %cst_28 : f32 to vector<1x512xf32>
    %53 = arith.addf %49, %52 : vector<1x512xf32>
    %54 = math.rsqrt %53 : vector<1x512xf32>
    %55 = arith.mulf %51, %54 : vector<1x512xf32>
    %c1_29 = arith.constant 1 : index
    %c1_30 = arith.constant 1 : index
    %c0_31 = arith.constant 0 : index
    %56 = vector.load %arg3[%c1_29, %c1_30, %c0_31] : memref<4x8x512xf32, #tpu.memory_space<vmem>>, vector<1x1x512xf32>
    %57 = vector.shape_cast %56 : vector<1x1x512xf32> to vector<1x512xf32>
    %58 = arith.mulf %43, %55 : vector<1x512xf32>
    %59 = arith.subf %57, %58 : vector<1x512xf32>
    %60 = vector.broadcast %55 : vector<1x512xf32> to vector<8x512xf32>
    %61 = arith.mulf %36, %60 : vector<8x512xf32>
    %62 = vector.broadcast %59 : vector<1x512xf32> to vector<8x512xf32>
    %63 = arith.addf %61, %62 : vector<8x512xf32>
    %cst_32 = arith.constant 0.000000e+00 : f32
    %64 = vector.broadcast %cst_32 : f32 to vector<8x512xf32>
    %65 = arith.maximumf %63, %64 : vector<8x512xf32>
    %66 = arith.truncf %65 : vector<8x512xf32> to vector<8x512xbf16>
    %c2 = arith.constant 2 : index
    %c0_33 = arith.constant 0 : index
    %c0_34 = arith.constant 0 : index
    %67 = vector.load %arg1[%c2, %c0_33, %c0_34] : memref<4x512x512xbf16, #tpu.memory_space<vmem>>, vector<1x512x512xbf16>
    %68 = vector.shape_cast %67 : vector<1x512x512xbf16> to vector<512x512xbf16>
    %cst_35 = arith.constant dense<0.000000e+00> : vector<8x512xf32>
    %69 = tpu.matmul %66, %68, %cst_35 {dimension_numbers = #tpu.dot_dimension_numbers<[1], [0], [0], [1], [0, 0, 1, 1], [], []>} : vector<8x512xbf16>, vector<512x512xbf16>, vector<8x512xf32> -> vector<8x512xf32>
    %cst_36 = arith.constant dense<0.000000e+00> : vector<512xf32>
    %70 = vector.multi_reduction <add>, %69, %cst_36 [0] : vector<8x512xf32> to vector<512xf32>
    %71 = vector.shape_cast %70 : vector<512xf32> to vector<1x512xf32>
    %72 = arith.mulf %69, %69 : vector<8x512xf32>
    %cst_37 = arith.constant dense<0.000000e+00> : vector<512xf32>
    %73 = vector.multi_reduction <add>, %72, %cst_37 [0] : vector<8x512xf32> to vector<512xf32>
    %74 = vector.shape_cast %73 : vector<512xf32> to vector<1x512xf32>
    %cst_38 = arith.constant 1.250000e-01 : f32
    %75 = vector.broadcast %cst_38 : f32 to vector<1x512xf32>
    %76 = arith.mulf %71, %75 : vector<1x512xf32>
    %cst_39 = arith.constant 1.250000e-01 : f32
    %77 = vector.broadcast %cst_39 : f32 to vector<1x512xf32>
    %78 = arith.mulf %74, %77 : vector<1x512xf32>
    %79 = arith.mulf %76, %76 : vector<1x512xf32>
    %80 = arith.subf %78, %79 : vector<1x512xf32>
    %cst_40 = arith.constant 0.000000e+00 : f32
    %81 = vector.broadcast %cst_40 : f32 to vector<1x512xf32>
    %82 = arith.maximumf %80, %81 : vector<1x512xf32>
    %c2_41 = arith.constant 2 : index
    %c0_42 = arith.constant 0 : index
    %c0_43 = arith.constant 0 : index
    %83 = vector.load %arg3[%c2_41, %c0_42, %c0_43] : memref<4x8x512xf32, #tpu.memory_space<vmem>>, vector<1x1x512xf32>
    %84 = vector.shape_cast %83 : vector<1x1x512xf32> to vector<1x512xf32>
    %cst_44 = arith.constant 9.99999974E-6 : f32
    %85 = vector.broadcast %cst_44 : f32 to vector<1x512xf32>
    %86 = arith.addf %82, %85 : vector<1x512xf32>
    %87 = math.rsqrt %86 : vector<1x512xf32>
    %88 = arith.mulf %84, %87 : vector<1x512xf32>
    %c2_45 = arith.constant 2 : index
    %c1_46 = arith.constant 1 : index
    %c0_47 = arith.constant 0 : index
    %89 = vector.load %arg3[%c2_45, %c1_46, %c0_47] : memref<4x8x512xf32, #tpu.memory_space<vmem>>, vector<1x1x512xf32>
    %90 = vector.shape_cast %89 : vector<1x1x512xf32> to vector<1x512xf32>
    %91 = arith.mulf %76, %88 : vector<1x512xf32>
    %92 = arith.subf %90, %91 : vector<1x512xf32>
    %93 = vector.broadcast %88 : vector<1x512xf32> to vector<8x512xf32>
    %94 = arith.mulf %69, %93 : vector<8x512xf32>
    %95 = vector.broadcast %92 : vector<1x512xf32> to vector<8x512xf32>
    %96 = arith.addf %94, %95 : vector<8x512xf32>
    %cst_48 = arith.constant 0.000000e+00 : f32
    %97 = vector.broadcast %cst_48 : f32 to vector<8x512xf32>
    %98 = arith.maximumf %96, %97 : vector<8x512xf32>
    %99 = arith.truncf %98 : vector<8x512xf32> to vector<8x512xbf16>
    %c3 = arith.constant 3 : index
    %c0_49 = arith.constant 0 : index
    %c0_50 = arith.constant 0 : index
    %100 = vector.load %arg1[%c3, %c0_49, %c0_50] : memref<4x512x512xbf16, #tpu.memory_space<vmem>>, vector<1x512x512xbf16>
    %101 = vector.shape_cast %100 : vector<1x512x512xbf16> to vector<512x512xbf16>
    %cst_51 = arith.constant dense<0.000000e+00> : vector<8x512xf32>
    %102 = tpu.matmul %99, %101, %cst_51 {dimension_numbers = #tpu.dot_dimension_numbers<[1], [0], [0], [1], [0, 0, 1, 1], [], []>} : vector<8x512xbf16>, vector<512x512xbf16>, vector<8x512xf32> -> vector<8x512xf32>
    %cst_52 = arith.constant dense<0.000000e+00> : vector<512xf32>
    %103 = vector.multi_reduction <add>, %102, %cst_52 [0] : vector<8x512xf32> to vector<512xf32>
    %104 = vector.shape_cast %103 : vector<512xf32> to vector<1x512xf32>
    %105 = arith.mulf %102, %102 : vector<8x512xf32>
    %cst_53 = arith.constant dense<0.000000e+00> : vector<512xf32>
    %106 = vector.multi_reduction <add>, %105, %cst_53 [0] : vector<8x512xf32> to vector<512xf32>
    %107 = vector.shape_cast %106 : vector<512xf32> to vector<1x512xf32>
    %cst_54 = arith.constant 1.250000e-01 : f32
    %108 = vector.broadcast %cst_54 : f32 to vector<1x512xf32>
    %109 = arith.mulf %104, %108 : vector<1x512xf32>
    %cst_55 = arith.constant 1.250000e-01 : f32
    %110 = vector.broadcast %cst_55 : f32 to vector<1x512xf32>
    %111 = arith.mulf %107, %110 : vector<1x512xf32>
    %112 = arith.mulf %109, %109 : vector<1x512xf32>
    %113 = arith.subf %111, %112 : vector<1x512xf32>
    %cst_56 = arith.constant 0.000000e+00 : f32
    %114 = vector.broadcast %cst_56 : f32 to vector<1x512xf32>
    %115 = arith.maximumf %113, %114 : vector<1x512xf32>
    %c3_57 = arith.constant 3 : index
    %c0_58 = arith.constant 0 : index
    %c0_59 = arith.constant 0 : index
    %116 = vector.load %arg3[%c3_57, %c0_58, %c0_59] : memref<4x8x512xf32, #tpu.memory_space<vmem>>, vector<1x1x512xf32>
    %117 = vector.shape_cast %116 : vector<1x1x512xf32> to vector<1x512xf32>
    %cst_60 = arith.constant 9.99999974E-6 : f32
    %118 = vector.broadcast %cst_60 : f32 to vector<1x512xf32>
    %119 = arith.addf %115, %118 : vector<1x512xf32>
    %120 = math.rsqrt %119 : vector<1x512xf32>
    %121 = arith.mulf %117, %120 : vector<1x512xf32>
    %c3_61 = arith.constant 3 : index
    %c1_62 = arith.constant 1 : index
    %c0_63 = arith.constant 0 : index
    %122 = vector.load %arg3[%c3_61, %c1_62, %c0_63] : memref<4x8x512xf32, #tpu.memory_space<vmem>>, vector<1x1x512xf32>
    %123 = vector.shape_cast %122 : vector<1x1x512xf32> to vector<1x512xf32>
    %124 = arith.mulf %109, %121 : vector<1x512xf32>
    %125 = arith.subf %123, %124 : vector<1x512xf32>
    %126 = vector.broadcast %121 : vector<1x512xf32> to vector<8x512xf32>
    %127 = arith.mulf %102, %126 : vector<8x512xf32>
    %128 = vector.broadcast %125 : vector<1x512xf32> to vector<8x512xf32>
    %129 = arith.addf %127, %128 : vector<8x512xf32>
    %cst_64 = arith.constant 0.000000e+00 : f32
    %130 = vector.broadcast %cst_64 : f32 to vector<8x512xf32>
    %131 = arith.maximumf %129, %130 : vector<8x512xf32>
    %132 = arith.truncf %131 : vector<8x512xf32> to vector<8x512xbf16>
    %c0_65 = arith.constant 0 : index
    %c0_66 = arith.constant 0 : index
    %133 = vector.load %arg2[%c0_65, %c0_66] : memref<512x128xbf16, #tpu.memory_space<vmem>>, vector<512x128xbf16>
    %cst_67 = arith.constant dense<0.000000e+00> : vector<8x128xf32>
    %134 = tpu.matmul %132, %133, %cst_67 {dimension_numbers = #tpu.dot_dimension_numbers<[1], [0], [0], [1], [0, 0, 1, 1], [], []>} : vector<8x512xbf16>, vector<512x128xbf16>, vector<8x128xf32> -> vector<8x128xf32>
    %c0_68 = arith.constant 0 : index
    %c0_69 = arith.constant 0 : index
    %135 = vector.load %arg4[%c0_68, %c0_69] : memref<1x128xf32, #tpu.memory_space<vmem>>, vector<1x128xf32>
    %136 = vector.broadcast %135 : vector<1x128xf32> to vector<8x128xf32>
    %137 = arith.addf %134, %136 : vector<8x128xf32>
    %c0_70 = arith.constant 0 : index
    %c0_71 = arith.constant 0 : index
    %138 = vector.load %arg5[%c0_70, %c0_71] : memref<8x128xf32, #tpu.memory_space<vmem>>, vector<8x128xf32>
    tpu.vector_store %arg5[%c0_70, %c0_71], %137 {strides = array<i32>} : memref<8x128xf32, #tpu.memory_space<vmem>>, vector<8x128xf32>,
    return
  }
}

</mosaic_0001>

<llo_original>
// kernel: tpu_custom_call.1
$region0: #{tpu_custom_call.1}
  #allocation0 [shape = 'u32[]', space=smem, size = 0x4, offset = 0x4, fixed_abs, tag = 'smem constant byte address 0x4 - core index']
  #allocation1 [shape = 'u32[72,128]{1,0:T(1,128)}', space=vmem, size = 0x9000, scoped, tag = 'internal scratch']
  %s0 = inlined_call_operand.hbm [shape: bf16[8,512], index: 0, kind: input, shape index: {}]
  %s1 = inlined_call_operand.hbm [shape: bf16[4,512,512], index: 1, kind: input, shape index: {}]
  %s2 = inlined_call_operand.hbm [shape: bf16[512,128], index: 2, kind: input, shape index: {}]
  %s3 = inlined_call_operand.hbm [shape: f32[4,8,512], index: 3, kind: input, shape index: {}]
  %s4 = inlined_call_operand.hbm [shape: f32[1,128], index: 4, kind: input, shape index: {}]
  %s5 = inlined_call_operand.hbm [shape: f32[8,128], index: 5, kind: output, shape index: {}]
  %s6 = sld [smem:[#allocation0]]
  $region50: #{tpu_custom_call.1} parent=0
    _
  %s8 = ssub.s32 1, %s6
  %s9 = scalar_select 0, %s8, %s6
  $region1: #{tpu_custom_call.1} parent=0
    #allocation2 [shape = 'u8[8192]{0}', space=vmem, size = 0x2000, scoped, tag = 'input window, operand 0, single buffered']
    #allocation3 [shape = 's32[1]{0}', space=sflag, size = 0x4, scoped, tag = 'scoped memory for tpu_custom_call.1']
    #allocation4 [shape = 's32[1]{0}', space=sflag, size = 0x4, scoped, tag = 'scoped memory for tpu_custom_call.1']
    #allocation5 [shape = 'u8[2097152]{0}', space=vmem, size = 0x200000, scoped, tag = 'input window, operand 1, single buffered']
    #allocation6 [shape = 's32[1]{0}', space=sflag, size = 0x4, scoped, tag = 'scoped memory for tpu_custom_call.1']
    #allocation7 [shape = 'u8[131072]{0}', space=vmem, size = 0x20000, scoped, tag = 'input window, operand 2, single buffered']
    #allocation8 [shape = 'u8[65536]{0}', space=vmem, size = 0x10000, scoped, tag = 'input window, operand 3, single buffered']
    #allocation9 [shape = 's32[1]{0}', space=sflag, size = 0x4, scoped, tag = 'scoped memory for tpu_custom_call.1']
    #allocation10 [shape = 'u8[512]{0}', space=vmem, size = 0x400, scoped, tag = 'input window, operand 4, single buffered']
    #allocation11 [shape = 'u8[4096]{0}', space=vmem, size = 0x1000, scoped, tag = 'output window, operand 0, single buffered']
    %10 = vsyncpa [#allocation3], 0
    %11 = vsyncpa [#allocation6], 0
    %12 = vsyncpa [#allocation9], 0
    %13 = vsyncpa [#allocation4], 0
    // Predicated region
    $region2: #{tpu_custom_call.1} parent=1 // pred_check
      _
    $region3: #{tpu_custom_call.1} parent=1 // pred_check_branch
      %15 = sbr.rel (0) target = $region5
    $region4: #{tpu_custom_call.1} parent=1 // pred_region
      %17 = vsyncadd [#allocation3], 0
      %s19 = sshll.u32 %s0, 4
      %s20 = int_to_ptr.hbm [resolvable:$true] %s19
      %s21 = sshll.u32 [#allocation2], 4
      %s22 = int_to_ptr.vmem [resolvable:$true] %s21
      %24 = dma.hbm_to_vmem [thread:$0]  %s20, 256, %s22, [#allocation3]
    $region5: #{tpu_custom_call.1} parent=1 // pred_fallthru
      _
    // Predicated region
    $region6: #{tpu_custom_call.1} parent=1 // pred_check
      _
    $region7: #{tpu_custom_call.1} parent=1 // pred_check_branch
      %26 = sbr.rel (0) target = $region9
    $region8: #{tpu_custom_call.1} parent=1 // pred_region
      %28 = vsyncadd [#allocation6], 0
      %s29 = sshll.u32 %s1, 4
      %s30 = int_to_ptr.hbm [resolvable:$true] %s29
      %s31 = sshll.u32 [#allocation5], 4
      %s32 = int_to_ptr.vmem [resolvable:$true] %s31
      %37 = dma.hbm_to_vmem [thread:$0]  %s30, 65536, %s32, [#allocation6], 256, 256, 16
    $region9: #{tpu_custom_call.1} parent=1 // pred_fallthru
      _
    // Predicated region
    $region10: #{tpu_custom_call.1} parent=1 // pred_check
      _
    $region11: #{tpu_custom_call.1} parent=1 // pred_check_branch
      %39 = sbr.rel (0) target = $region13
    $region12: #{tpu_custom_call.1} parent=1 // pred_region
      %41 = vsyncadd [#allocation6], 0
      %s42 = sshll.u32 %s2, 4
      %s43 = int_to_ptr.hbm [resolvable:$true] %s42
      %s44 = sshll.u32 [#allocation7], 4
      %s45 = int_to_ptr.vmem [resolvable:$true] %s44
      %50 = dma.hbm_to_vmem [thread:$0]  %s43, 4096, %s45, [#allocation6], 64, 64, 4
    $region13: #{tpu_custom_call.1} parent=1 // pred_fallthru
      _
    // Predicated region
    $region14: #{tpu_custom_call.1} parent=1 // pred_check
      _
    $region15: #{tpu_custom_call.1} parent=1 // pred_check_branch
      %52 = sbr.rel (0) target = $region17
    $region16: #{tpu_custom_call.1} parent=1 // pred_region
      %54 = vsyncadd [#allocation9], 0
      %s55 = sshll.u32 %s3, 4
      %s56 = int_to_ptr.hbm [resolvable:$true] %s55
      %s57 = sshll.u32 [#allocation8], 4
      %s58 = int_to_ptr.vmem [resolvable:$true] %s57
      %63 = dma.hbm_to_vmem [thread:$0]  %s56, 2048, %s58, [#allocation9], 512, 512, 32
    $region17: #{tpu_custom_call.1} parent=1 // pred_fallthru
      _
    // Predicated region
    $region18: #{tpu_custom_call.1} parent=1 // pred_check
      _
    $region19: #{tpu_custom_call.1} parent=1 // pred_check_branch
      %65 = sbr.rel (0) target = $region21
    $region20: #{tpu_custom_call.1} parent=1 // pred_region
      %67 = vsyncadd [#allocation9], 0
      %s69 = sshll.u32 %s4, 4
      %s70 = int_to_ptr.hbm [resolvable:$true] %s69
      %s71 = sshll.u32 [#allocation10], 4
      %s72 = int_to_ptr.vmem [resolvable:$true] %s71
      %74 = dma.hbm_to_vmem [thread:$0]  %s70, 16, %s72, [#allocation9]
    $region21: #{tpu_custom_call.1} parent=1 // pred_fallthru
      _
    // Predicated region
    $region22: #{tpu_custom_call.1} parent=1 // pred_check
      _
    $region23: #{tpu_custom_call.1} parent=1 // pred_check_branch
      %76 = sbr.rel (0) target = $region25
    $region24: #{tpu_custom_call.1} parent=1 // pred_region
      %78 = dma.done [#allocation3], 256
    $region25: #{tpu_custom_call.1} parent=1 // pred_fallthru
      _
    // Predicated region
    $region26: #{tpu_custom_call.1} parent=1 // pred_check
      _
    $region27: #{tpu_custom_call.1} parent=1 // pred_check_branch
      %80 = sbr.rel (0) target = $region29
    $region28: #{tpu_custom_call.1} parent=1 // pred_region
      %82 = dma.done [#allocation6], 65536
    $region29: #{tpu_custom_call.1} parent=1 // pred_fallthru
      _
    // Predicated region
    $region30: #{tpu_custom_call.1} parent=1 // pred_check
      _
    $region31: #{tpu_custom_call.1} parent=1 // pred_check_branch
      %84 = sbr.rel (0) target = $region33
    $region32: #{tpu_custom_call.1} parent=1 // pred_region
      %86 = dma.done [#allocation6], 4096
    $region33: #{tpu_custom_call.1} parent=1 // pred_fallthru
      _
    // Predicated region
    $region34: #{tpu_custom_call.1} parent=1 // pred_check
      _
    $region35: #{tpu_custom_call.1} parent=1 // pred_check_branch
      %88 = sbr.rel (0) target = $region37
    $region36: #{tpu_custom_call.1} parent=1 // pred_region
      %90 = dma.done [#allocation9], 2048
    $region37: #{tpu_custom_call.1} parent=1 // pred_fallthru
      _
    // Predicated region
    $region38: #{tpu_custom_call.1} parent=1 // pred_check
      _
    $region39: #{tpu_custom_call.1} parent=1 // pred_check_branch
      %92 = sbr.rel (0) target = $region41
    $region40: #{tpu_custom_call.1} parent=1 // pred_region
      %94 = dma.done [#allocation9], 16
    $region41: #{tpu_custom_call.1} parent=1 // pred_fallthru
      _
    %v95 = vld [vmem:[#allocation2] sm:$0xff]
    %v96 = vld [vmem:[#allocation2 + $0x8] sm:$0xff]
    %v97 = vld [vmem:[#allocation5] sm:$0xff]
    %v98 = vld [vmem:[#allocation5 + $0x8] sm:$0xff]
    %v99 = vld [vmem:[#allocation5 + $0x10] sm:$0xff]
    %v100 = vld [vmem:[#allocation5 + $0x18] sm:$0xff]
    %v101 = vld [vmem:[#allocation5 + $0x20] sm:$0xff]
    %v102 = vld [vmem:[#allocation5 + $0x28] sm:$0xff]
    %v103 = vld [vmem:[#allocation5 + $0x30] sm:$0xff]
    %v104 = vld [vmem:[#allocation5 + $0x38] sm:$0xff]
    %v105 = vld [vmem:[#allocation5 + $0x40] sm:$0xff]
    %v106 = vld [vmem:[#allocation5 + $0x48] sm:$0xff]
    %v107 = vld [vmem:[#allocation5 + $0x50] sm:$0xff]
    %v108 = vld [vmem:[#allocation5 + $0x58] sm:$0xff]
    %v109 = vld [vmem:[#allocation5 + $0x60] sm:$0xff]
    %v110 = vld [vmem:[#allocation5 + $0x68] sm:$0xff]
    %v111 = vld [vmem:[#allocation5 + $0x70] sm:$0xff]
    %v112 = vld [vmem:[#allocation5 + $0x78] sm:$0xff]
    %v113 = vld [vmem:[#allocation5 + $0x80] sm:$0xff]
    %v114 = vld [vmem:[#allocation5 + $0x88] sm:$0xff]
    %v115 = vld [vmem:[#allocation5 + $0x90] sm:$0xff]
    %v116 = vld [vmem:[#allocation5 + $0x98] sm:$0xff]
    %v117 = vld [vmem:[#allocation5 + $0xa0] sm:$0xff]
    %v118 = vld [vmem:[#allocation5 + $0xa8] sm:$0xff]
    %v119 = vld [vmem:[#allocation5 + $0xb0] sm:$0xff]
    %v120 = vld [vmem:[#allocation5 + $0xb8] sm:$0xff]
    %v121 = vld [vmem:[#allocation5 + $0xc0] sm:$0xff]
    %v122 = vld [vmem:[#allocation5 + $0xc8] sm:$0xff]
    %v123 = vld [vmem:[#allocation5 + $0xd0] sm:$0xff]
    %v124 = vld [vmem:[#allocation5 + $0xd8] sm:$0xff]
    %v125 = vld [vmem:[#allocation5 + $0xe0] sm:$0xff]
    %v126 = vld [vmem:[#allocation5 + $0xe8] sm:$0xff]
    %v127 = vld [vmem:[#allocation5 + $0xf0] sm:$0xff]
    %v128 = vld [vmem:[#allocation5 + $0xf8] sm:$0xff]
    %v129 = vld [vmem:[#allocation5 + $0x100] sm:$0xff]
    %v130 = vld [vmem:[#allocation5 + $0x108] sm:$0xff]
    %v131 = vld [vmem:[#allocation5 + $0x110] sm:$0xff]
    %v132 = vld [vmem:[#allocation5 + $0x118] sm:$0xff]
    %v133 = vld [vmem:[#allocation5 + $0x120] sm:$0xff]
    %v134 = vld [vmem:[#allocation5 + $0x128] sm:$0xff]
    %v135 = vld [vmem:[#allocation5 + $0x130] sm:$0xff]
    %v136 = vld [vmem:[#allocation5 + $0x138] sm:$0xff]
    %v137 = vld [vmem:[#allocation5 + $0x140] sm:$0xff]
    %v138 = vld [vmem:[#allocation5 + $0x148] sm:$0xff]
    %v139 = vld [vmem:[#allocation5 + $0x150] sm:$0xff]
    %v140 = vld [vmem:[#allocation5 + $0x158] sm:$0xff]
    %v141 = vld [vmem:[#allocation5 + $0x160] sm:$0xff]
    %v142 = vld [vmem:[#allocation5 + $0x168] sm:$0xff]
    %v143 = vld [vmem:[#allocation5 + $0x170] sm:$0xff]
    %v144 = vld [vmem:[#allocation5 + $0x178] sm:$0xff]
    %v145 = vld [vmem:[#allocation5 + $0x180] sm:$0xff]
    %v146 = vld [vmem:[#allocation5 + $0x188] sm:$0xff]
    %v147 = vld [vmem:[#allocation5 + $0x190] sm:$0xff]
    %v148 = vld [vmem:[#allocation5 + $0x198] sm:$0xff]
    %v149 = vld [vmem:[#allocation5 + $0x1a0] sm:$0xff]
    %v150 = vld [vmem:[#allocation5 + $0x1a8] sm:$0xff]
    %v151 = vld [vmem:[#allocation5 + $0x1b0] sm:$0xff]
    %v152 = vld [vmem:[#allocation5 + $0x1b8] sm:$0xff]
    %v153 = vld [vmem:[#allocation5 + $0x1c0] sm:$0xff]
    %v154 = vld [vmem:[#allocation5 + $0x1c8] sm:$0xff]
    %v155 = vld [vmem:[#allocation5 + $0x1d0] sm:$0xff]
    %v156 = vld [vmem:[#allocation5 + $0x1d8] sm:$0xff]
    %v157 = vld [vmem:[#allocation5 + $0x1e0] sm:$0xff]
    %v158 = vld [vmem:[#allocation5 + $0x1e8] sm:$0xff]
    %v159 = vld [vmem:[#allocation5 + $0x1f0] sm:$0xff]
    %v160 = vld [vmem:[#allocation5 + $0x1f8] sm:$0xff]
    %v161 = vld [vmem:[#allocation5 + $0x200] sm:$0xff]
    %v162 = vld [vmem:[#allocation5 + $0x208] sm:$0xff]
    %v163 = vld [vmem:[#allocation5 + $0x210] sm:$0xff]
    %v164 = vld [vmem:[#allocation5 + $0x218] sm:$0xff]
    %v165 = vld [vmem:[#allocation5 + $0x220] sm:$0xff]
    %v166 = vld [vmem:[#allocation5 + $0x228] sm:$0xff]
    %v167 = vld [vmem:[#allocation5 + $0x230] sm:$0xff]
    %v168 = vld [vmem:[#allocation5 + $0x238] sm:$0xff]
    %v169 = vld [vmem:[#allocation5 + $0x240] sm:$0xff]
    %v170 = vld [vmem:[#allocation5 + $0x248] sm:$0xff]
    %v171 = vld [vmem:[#allocation5 + $0x250] sm:$0xff]
    %v172 = vld [vmem:[#allocation5 + $0x258] sm:$0xff]
    %v173 = vld [vmem:[#allocation5 + $0x260] sm:$0xff]
    %v174 = vld [vmem:[#allocation5 + $0x268] sm:$0xff]
    %v175 = vld [vmem:[#allocation5 + $0x270] sm:$0xff]
    %v176 = vld [vmem:[#allocation5 + $0x278] sm:$0xff]
    %v177 = vld [vmem:[#allocation5 + $0x280] sm:$0xff]
    %v178 = vld [vmem:[#allocation5 + $0x288] sm:$0xff]
    %v179 = vld [vmem:[#allocation5 + $0x290] sm:$0xff]
    %v180 = vld [vmem:[#allocation5 + $0x298] sm:$0xff]
    %v181 = vld [vmem:[#allocation5 + $0x2a0] sm:$0xff]
    %v182 = vld [vmem:[#allocation5 + $0x2a8] sm:$0xff]
    %v183 = vld [vmem:[#allocation5 + $0x2b0] sm:$0xff]
    %v184 = vld [vmem:[#allocation5 + $0x2b8] sm:$0xff]
    %v185 = vld [vmem:[#allocation5 + $0x2c0] sm:$0xff]
    %v186 = vld [vmem:[#allocation5 + $0x2c8] sm:$0xff]
    %v187 = vld [vmem:[#allocation5 + $0x2d0] sm:$0xff]
    %v188 = vld [vmem:[#allocation5 + $0x2d8] sm:$0xff]
    %v189 = vld [vmem:[#allocation5 + $0x2e0] sm:$0xff]
    %v190 = vld [vmem:[#allocation5 + $0x2e8] sm:$0xff]
    %v191 = vld [vmem:[#allocation5 + $0x2f0] sm:$0xff]
    %v192 = vld [vmem:[#allocation5 + $0x2f8] sm:$0xff]
    %v193 = vld [vmem:[#allocation5 + $0x300] sm:$0xff]
    %v194 = vld [vmem:[#allocation5 + $0x308] sm:$0xff]
    %v195 = vld [vmem:[#allocation5 + $0x310] sm:$0xff]
    %v196 = vld [vmem:[#allocation5 + $0x318] sm:$0xff]
    %v197 = vld [vmem:[#allocation5 + $0x320] sm:$0xff]
    %v198 = vld [vmem:[#allocation5 + $0x328] sm:$0xff]
    %v199 = vld [vmem:[#allocation5 + $0x330] sm:$0xff]
    %v200 = vld [vmem:[#allocation5 + $0x338] sm:$0xff]
    %v201 = vld [vmem:[#allocation5 + $0x340] sm:$0xff]
    %v202 = vld [vmem:[#allocation5 + $0x348] sm:$0xff]
    %v203 = vld [vmem:[#allocation5 + $0x350] sm:$0xff]
    %v204 = vld [vmem:[#allocation5 + $0x358] sm:$0xff]
    %v205 = vld [vmem:[#allocation5 + $0x360] sm:$0xff]
    %v206 = vld [vmem:[#allocation5 + $0x368] sm:$0xff]
    %v207 = vld [vmem:[#allocation5 + $0x370] sm:$0xff]
    %v208 = vld [vmem:[#allocation5 + $0x378] sm:$0xff]
    %v209 = vld [vmem:[#allocation5 + $0x380] sm:$0xff]
    %v210 = vld [vmem:[#allocation5 + $0x388] sm:$0xff]
    %v211 = vld [vmem:[#allocation5 + $0x390] sm:$0xff]
    %v212 = vld [vmem:[#allocation5 + $0x398] sm:$0xff]
    %v213 = vld [vmem:[#allocation5 + $0x3a0] sm:$0xff]
    %v214 = vld [vmem:[#allocation5 + $0x3a8] sm:$0xff]
    %v215 = vld [vmem:[#allocation5 + $0x3b0] sm:$0xff]
    %v216 = vld [vmem:[#allocation5 + $0x3b8] sm:$0xff]
    %v217 = vld [vmem:[#allocation5 + $0x3c0] sm:$0xff]
    %v218 = vld [vmem:[#allocation5 + $0x3c8] sm:$0xff]
    %v219 = vld [vmem:[#allocation5 + $0x3d0] sm:$0xff]
    %v220 = vld [vmem:[#allocation5 + $0x3d8] sm:$0xff]
    %v221 = vld [vmem:[#allocation5 + $0x3e0] sm:$0xff]
    %v222 = vld [vmem:[#allocation5 + $0x3e8] sm:$0xff]
    %v223 = vld [vmem:[#allocation5 + $0x3f0] sm:$0xff]
    %v224 = vld [vmem:[#allocation5 + $0x3f8] sm:$0xff]
    %v227 = vunpack.c.l.b16 %v95
    %v228 = vunpack.c.h.b16 %v95
    %v229 = vunpack.c.l.b16 %v96
    %v230 = vunpack.c.h.b16 %v96
    %v231 = vpack.c.b16 %v227, %v227
    %v232 = vpack.c.b16 %v228, %v228
    %v233 = vpack.c.b16 %v229, %v229
    %v234 = vpack.c.b16 %v230, %v230
    %v367 = vunpack.c.l.b16 %v97
    %v368 = vunpack.c.h.b16 %v97
    %v369 = vunpack.c.l.b16 %v98
    %v370 = vunpack.c.h.b16 %v98
    %v371 = vunpack.c.l.b16 %v99
    %v372 = vunpack.c.h.b16 %v99
    %v373 = vunpack.c.l.b16 %v100
    %v374 = vunpack.c.h.b16 %v100
    %v375 = vunpack.c.l.b16 %v101
    %v376 = vunpack.c.h.b16 %v101
    %v377 = vunpack.c.l.b16 %v102
    %v378 = vunpack.c.h.b16 %v102
    %v379 = vunpack.c.l.b16 %v103
    %v380 = vunpack.c.h.b16 %v103
    %v381 = vunpack.c.l.b16 %v104
    %v382 = vunpack.c.h.b16 %v104
    %v383 = vunpack.c.l.b16 %v105
    %v384 = vunpack.c.h.b16 %v105
    %v385 = vunpack.c.l.b16 %v106
    %v386 = vunpack.c.h.b16 %v106
    %v387 = vunpack.c.l.b16 %v107
    %v388 = vunpack.c.h.b16 %v107
    %v389 = vunpack.c.l.b16 %v108
    %v390 = vunpack.c.h.b16 %v108
    %v391 = vunpack.c.l.b16 %v109
    %v392 = vunpack.c.h.b16 %v109
    %v393 = vunpack.c.l.b16 %v110
    %v394 = vunpack.c.h.b16 %v110
    %v395 = vunpack.c.l.b16 %v111
    %v396 = vunpack.c.h.b16 %v111
    %v397 = vunpack.c.l.b16 %v112
    %v398 = vunpack.c.h.b16 %v112
    %v399 = vunpack.c.l.b16 %v113
    %v400 = vunpack.c.h.b16 %v113
    %v401 = vunpack.c.l.b16 %v114
    %v402 = vunpack.c.h.b16 %v114
    %v403 = vunpack.c.l.b16 %v115
    %v404 = vunpack.c.h.b16 %v115
    %v405 = vunpack.c.l.b16 %v116
    %v406 = vunpack.c.h.b16 %v116
    %v407 = vunpack.c.l.b16 %v117
    %v408 = vunpack.c.h.b16 %v117
    %v409 = vunpack.c.l.b16 %v118
    %v410 = vunpack.c.h.b16 %v118
    %v411 = vunpack.c.l.b16 %v119
    %v412 = vunpack.c.h.b16 %v119
    %v413 = vunpack.c.l.b16 %v120
    %v414 = vunpack.c.h.b16 %v120
    %v415 = vunpack.c.l.b16 %v121
    %v416 = vunpack.c.h.b16 %v121
    %v417 = vunpack.c.l.b16 %v122
    %v418 = vunpack.c.h.b16 %v122
    %v419 = vunpack.c.l.b16 %v123
    %v420 = vunpack.c.h.b16 %v123
    %v421 = vunpack.c.l.b16 %v124
    %v422 = vunpack.c.h.b16 %v124
    %v423 = vunpack.c.l.b16 %v125
    %v424 = vunpack.c.h.b16 %v125
    %v425 = vunpack.c.l.b16 %v126
    %v426 = vunpack.c.h.b16 %v126
    %v427 = vunpack.c.l.b16 %v127
    %v428 = vunpack.c.h.b16 %v127
    %v429 = vunpack.c.l.b16 %v128
    %v430 = vunpack.c.h.b16 %v128
    %v431 = vunpack.c.l.b16 %v129
    %v432 = vunpack.c.h.b16 %v129
    %v433 = vunpack.c.l.b16 %v130
    %v434 = vunpack.c.h.b16 %v130
    %v435 = vunpack.c.l.b16 %v131
    %v436 = vunpack.c.h.b16 %v131
    %v437 = vunpack.c.l.b16 %v132
    %v438 = vunpack.c.h.b16 %v132
    %v439 = vunpack.c.l.b16 %v133
    %v440 = vunpack.c.h.b16 %v133
    %v441 = vunpack.c.l.b16 %v134
    %v442 = vunpack.c.h.b16 %v134
    %v443 = vunpack.c.l.b16 %v135
    %v444 = vunpack.c.h.b16 %v135
    %v445 = vunpack.c.l.b16 %v136
    %v446 = vunpack.c.h.b16 %v136
    %v447 = vunpack.c.l.b16 %v137
    %v448 = vunpack.c.h.b16 %v137
    %v449 = vunpack.c.l.b16 %v138
    %v450 = vunpack.c.h.b16 %v138
    %v451 = vunpack.c.l.b16 %v139
    %v452 = vunpack.c.h.b16 %v139
    %v453 = vunpack.c.l.b16 %v140
    %v454 = vunpack.c.h.b16 %v140
    %v455 = vunpack.c.l.b16 %v141
    %v456 = vunpack.c.h.b16 %v141
    %v457 = vunpack.c.l.b16 %v142
    %v458 = vunpack.c.h.b16 %v142
    %v459 = vunpack.c.l.b16 %v143
    %v460 = vunpack.c.h.b16 %v143
    %v461 = vunpack.c.l.b16 %v144
    %v462 = vunpack.c.h.b16 %v144
    %v463 = vunpack.c.l.b16 %v145
    %v464 = vunpack.c.h.b16 %v145
    %v465 = vunpack.c.l.b16 %v146
    %v466 = vunpack.c.h.b16 %v146
    %v467 = vunpack.c.l.b16 %v147
    %v468 = vunpack.c.h.b16 %v147
    %v469 = vunpack.c.l.b16 %v148
    %v470 = vunpack.c.h.b16 %v148
    %v471 = vunpack.c.l.b16 %v149
    %v472 = vunpack.c.h.b16 %v149
    %v473 = vunpack.c.l.b16 %v150
    %v474 = vunpack.c.h.b16 %v150
    %v475 = vunpack.c.l.b16 %v151
    %v476 = vunpack.c.h.b16 %v151
    %v477 = vunpack.c.l.b16 %v152
    %v478 = vunpack.c.h.b16 %v152
    %v479 = vunpack.c.l.b16 %v153
    %v480 = vunpack.c.h.b16 %v153
    %v481 = vunpack.c.l.b16 %v154
    %v482 = vunpack.c.h.b16 %v154
    %v483 = vunpack.c.l.b16 %v155
    %v484 = vunpack.c.h.b16 %v155
    %v485 = vunpack.c.l.b16 %v156
    %v486 = vunpack.c.h.b16 %v156
    %v487 = vunpack.c.l.b16 %v157
    %v488 = vunpack.c.h.b16 %v157
    %v489 = vunpack.c.l.b16 %v158
    %v490 = vunpack.c.h.b16 %v158
    %v491 = vunpack.c.l.b16 %v159
    %v492 = vunpack.c.h.b16 %v159
    %v493 = vunpack.c.l.b16 %v160
    %v494 = vunpack.c.h.b16 %v160
    %v495 = vunpack.c.l.b16 %v161
    %v496 = vunpack.c.h.b16 %v161
    %v497 = vunpack.c.l.b16 %v162
    %v498 = vunpack.c.h.b16 %v162
    %v499 = vunpack.c.l.b16 %v163
    %v500 = vunpack.c.h.b16 %v163
    %v501 = vunpack.c.l.b16 %v164
    %v502 = vunpack.c.h.b16 %v164
    %v503 = vunpack.c.l.b16 %v165
    %v504 = vunpack.c.h.b16 %v165
    %v505 = vunpack.c.l.b16 %v166
    %v506 = vunpack.c.h.b16 %v166
    %v507 = vunpack.c.l.b16 %v167
    %v508 = vunpack.c.h.b16 %v167
    %v509 = vunpack.c.l.b16 %v168
    %v510 = vunpack.c.h.b16 %v168
    %v511 = vunpack.c.l.b16 %v169
    %v512 = vunpack.c.h.b16 %v169
    %v513 = vunpack.c.l.b16 %v170
    %v514 = vunpack.c.h.b16 %v170
    %v515 = vunpack.c.l.b16 %v171
    %v516 = vunpack.c.h.b16 %v171
    %v517 = vunpack.c.l.b16 %v172
    %v518 = vunpack.c.h.b16 %v172
    %v519 = vunpack.c.l.b16 %v173
    %v520 = vunpack.c.h.b16 %v173
    %v521 = vunpack.c.l.b16 %v174
    %v522 = vunpack.c.h.b16 %v174
    %v523 = vunpack.c.l.b16 %v175
    %v524 = vunpack.c.h.b16 %v175
    %v525 = vunpack.c.l.b16 %v176
    %v526 = vunpack.c.h.b16 %v176
    %v527 = vunpack.c.l.b16 %v177
    %v528 = vunpack.c.h.b16 %v177
    %v529 = vunpack.c.l.b16 %v178
    %v530 = vunpack.c.h.b16 %v178
    %v531 = vunpack.c.l.b16 %v179
    %v532 = vunpack.c.h.b16 %v179
    %v533 = vunpack.c.l.b16 %v180
    %v534 = vunpack.c.h.b16 %v180
    %v535 = vunpack.c.l.b16 %v181
    %v536 = vunpack.c.h.b16 %v181
    %v537 = vunpack.c.l.b16 %v182
    %v538 = vunpack.c.h.b16 %v182
    %v539 = vunpack.c.l.b16 %v183
    %v540 = vunpack.c.h.b16 %v183
    %v541 = vunpack.c.l.b16 %v184
    %v542 = vunpack.c.h.b16 %v184
    %v543 = vunpack.c.l.b16 %v185
    %v544 = vunpack.c.h.b16 %v185
    %v545 = vunpack.c.l.b16 %v186
    %v546 = vunpack.c.h.b16 %v186
    %v547 = vunpack.c.l.b16 %v187
    %v548 = vunpack.c.h.b16 %v187
    %v549 = vunpack.c.l.b16 %v188
    %v550 = vunpack.c.h.b16 %v188
    %v551 = vunpack.c.l.b16 %v189
    %v552 = vunpack.c.h.b16 %v189
    %v553 = vunpack.c.l.b16 %v190
    %v554 = vunpack.c.h.b16 %v190
    %v555 = vunpack.c.l.b16 %v191
    %v556 = vunpack.c.h.b16 %v191
    %v557 = vunpack.c.l.b16 %v192
    %v558 = vunpack.c.h.b16 %v192
    %v559 = vunpack.c.l.b16 %v193
    %v560 = vunpack.c.h.b16 %v193
    %v561 = vunpack.c.l.b16 %v194
    %v562 = vunpack.c.h.b16 %v194
    %v563 = vunpack.c.l.b16 %v195
    %v564 = vunpack.c.h.b16 %v195
    %v565 = vunpack.c.l.b16 %v196
    %v566 = vunpack.c.h.b16 %v196
    %v567 = vunpack.c.l.b16 %v197
    %v568 = vunpack.c.h.b16 %v197
    %v569 = vunpack.c.l.b16 %v198
    %v570 = vunpack.c.h.b16 %v198
    %v571 = vunpack.c.l.b16 %v199
    %v572 = vunpack.c.h.b16 %v199
    %v573 = vunpack.c.l.b16 %v200
    %v574 = vunpack.c.h.b16 %v200
    %v575 = vunpack.c.l.b16 %v201
    %v576 = vunpack.c.h.b16 %v201
    %v577 = vunpack.c.l.b16 %v202
    %v578 = vunpack.c.h.b16 %v202
    %v579 = vunpack.c.l.b16 %v203
    %v580 = vunpack.c.h.b16 %v203
    %v581 = vunpack.c.l.b16 %v204
    %v582 = vunpack.c.h.b16 %v204
    %v583 = vunpack.c.l.b16 %v205
    %v584 = vunpack.c.h.b16 %v205
    %v585 = vunpack.c.l.b16 %v206
    %v586 = vunpack.c.h.b16 %v206
    %v587 = vunpack.c.l.b16 %v207
    %v588 = vunpack.c.h.b16 %v207
    %v589 = vunpack.c.l.b16 %v208
    %v590 = vunpack.c.h.b16 %v208
    %v591 = vunpack.c.l.b16 %v209
    %v592 = vunpack.c.h.b16 %v209
    %v593 = vunpack.c.l.b16 %v210
    %v594 = vunpack.c.h.b16 %v210
    %v595 = vunpack.c.l.b16 %v211
    %v596 = vunpack.c.h.b16 %v211
    %v597 = vunpack.c.l.b16 %v212
    %v598 = vunpack.c.h.b16 %v212
    %v599 = vunpack.c.l.b16 %v213
    %v600 = vunpack.c.h.b16 %v213
    %v601 = vunpack.c.l.b16 %v214
    %v602 = vunpack.c.h.b16 %v214
    %v603 = vunpack.c.l.b16 %v215
    %v604 = vunpack.c.h.b16 %v215
    %v605 = vunpack.c.l.b16 %v216
    %v606 = vunpack.c.h.b16 %v216
    %v607 = vunpack.c.l.b16 %v217
    %v608 = vunpack.c.h.b16 %v217
    %v609 = vunpack.c.l.b16 %v218
    %v610 = vunpack.c.h.b16 %v218
    %v611 = vunpack.c.l.b16 %v219
    %v612 = vunpack.c.h.b16 %v219
    %v613 = vunpack.c.l.b16 %v220
    %v614 = vunpack.c.h.b16 %v220
    %v615 = vunpack.c.l.b16 %v221
    %v616 = vunpack.c.h.b16 %v221
    %v617 = vunpack.c.l.b16 %v222
    %v618 = vunpack.c.h.b16 %v222
    %v619 = vunpack.c.l.b16 %v223
    %v620 = vunpack.c.h.b16 %v223
    %v621 = vunpack.c.l.b16 %v224
    %v622 = vunpack.c.h.b16 %v224
    %v623 = vpack.c.b16 %v371, %v367
    %v624 = vpack.c.b16 %v372, %v368
    %v625 = vpack.c.b16 %v373, %v369
    %v626 = vpack.c.b16 %v374, %v370
    %v627 = vpack.c.b16 %v379, %v375
    %v628 = vpack.c.b16 %v380, %v376
    %v629 = vpack.c.b16 %v381, %v377
    %v630 = vpack.c.b16 %v382, %v378
    %v631 = vpack.c.b16 %v387, %v383
    %v632 = vpack.c.b16 %v388, %v384
    %v633 = vpack.c.b16 %v389, %v385
    %v634 = vpack.c.b16 %v390, %v386
    %v635 = vpack.c.b16 %v395, %v391
    %v636 = vpack.c.b16 %v396, %v392
    %v637 = vpack.c.b16 %v397, %v393
    %v638 = vpack.c.b16 %v398, %v394
    %v639 = vpack.c.b16 %v403, %v399
    %v640 = vpack.c.b16 %v404, %v400
    %v641 = vpack.c.b16 %v405, %v401
    %v642 = vpack.c.b16 %v406, %v402
    %v643 = vpack.c.b16 %v411, %v407
    %v644 = vpack.c.b16 %v412, %v408
    %v645 = vpack.c.b16 %v413, %v409
    %v646 = vpack.c.b16 %v414, %v410
    %v647 = vpack.c.b16 %v419, %v415
    %v648 = vpack.c.b16 %v420, %v416
    %v649 = vpack.c.b16 %v421, %v417
    %v650 = vpack.c.b16 %v422, %v418
    %v651 = vpack.c.b16 %v427, %v423
    %v652 = vpack.c.b16 %v428, %v424
    %v653 = vpack.c.b16 %v429, %v425
    %v654 = vpack.c.b16 %v430, %v426
    %v655 = vpack.c.b16 %v435, %v431
    %v656 = vpack.c.b16 %v436, %v432
    %v657 = vpack.c.b16 %v437, %v433
    %v658 = vpack.c.b16 %v438, %v434
    %v659 = vpack.c.b16 %v443, %v439
    %v660 = vpack.c.b16 %v444, %v440
    %v661 = vpack.c.b16 %v445, %v441
    %v662 = vpack.c.b16 %v446, %v442
    %v663 = vpack.c.b16 %v451, %v447
    %v664 = vpack.c.b16 %v452, %v448
    %v665 = vpack.c.b16 %v453, %v449
    %v666 = vpack.c.b16 %v454, %v450
    %v667 = vpack.c.b16 %v459, %v455
    %v668 = vpack.c.b16 %v460, %v456
    %v669 = vpack.c.b16 %v461, %v457
    %v670 = vpack.c.b16 %v462, %v458
    %v671 = vpack.c.b16 %v467, %v463
    %v672 = vpack.c.b16 %v468, %v464
    %v673 = vpack.c.b16 %v469, %v465
    %v674 = vpack.c.b16 %v470, %v466
    %v675 = vpack.c.b16 %v475, %v471
    %v676 = vpack.c.b16 %v476, %v472
    %v677 = vpack.c.b16 %v477, %v473
    %v678 = vpack.c.b16 %v478, %v474
    %v679 = vpack.c.b16 %v483, %v479
    %v680 = vpack.c.b16 %v484, %v480
    %v681 = vpack.c.b16 %v485, %v481
    %v682 = vpack.c.b16 %v486, %v482
    %v683 = vpack.c.b16 %v491, %v487
    %v684 = vpack.c.b16 %v492, %v488
    %v685 = vpack.c.b16 %v493, %v489
    %v686 = vpack.c.b16 %v494, %v490
    %v687 = vpack.c.b16 %v499, %v495
    %v688 = vpack.c.b16 %v500, %v496
    %v689 = vpack.c.b16 %v501, %v497
    %v690 = vpack.c.b16 %v502, %v498
    %v691 = vpack.c.b16 %v507, %v503
    %v692 = vpack.c.b16 %v508, %v504
    %v693 = vpack.c.b16 %v509, %v505
    %v694 = vpack.c.b16 %v510, %v506
    %v695 = vpack.c.b16 %v515, %v511
    %v696 = vpack.c.b16 %v516, %v512
    %v697 = vpack.c.b16 %v517, %v513
    %v698 = vpack.c.b16 %v518, %v514
    %v699 = vpack.c.b16 %v523, %v519
    %v700 = vpack.c.b16 %v524, %v520
    %v701 = vpack.c.b16 %v525, %v521
    %v702 = vpack.c.b16 %v526, %v522
    %v703 = vpack.c.b16 %v531, %v527
    %v704 = vpack.c.b16 %v532, %v528
    %v705 = vpack.c.b16 %v533, %v529
    %v706 = vpack.c.b16 %v534, %v530
    %v707 = vpack.c.b16 %v539, %v535
    %v708 = vpack.c.b16 %v540, %v536
    %v709 = vpack.c.b16 %v541, %v537
    %v710 = vpack.c.b16 %v542, %v538
    %v711 = vpack.c.b16 %v547, %v543
    %v712 = vpack.c.b16 %v548, %v544
    %v713 = vpack.c.b16 %v549, %v545
    %v714 = vpack.c.b16 %v550, %v546
    %v715 = vpack.c.b16 %v555, %v551
    %v716 = vpack.c.b16 %v556, %v552
    %v717 = vpack.c.b16 %v557, %v553
    %v718 = vpack.c.b16 %v558, %v554
    %v719 = vpack.c.b16 %v563, %v559
    %v720 = vpack.c.b16 %v564, %v560
    %v721 = vpack.c.b16 %v565, %v561
    %v722 = vpack.c.b16 %v566, %v562
    %v723 = vpack.c.b16 %v571, %v567
    %v724 = vpack.c.b16 %v572, %v568
    %v725 = vpack.c.b16 %v573, %v569
    %v726 = vpack.c.b16 %v574, %v570
    %v727 = vpack.c.b16 %v579, %v575
    %v728 = vpack.c.b16 %v580, %v576
    %v729 = vpack.c.b16 %v581, %v577
    %v730 = vpack.c.b16 %v582, %v578
    %v731 = vpack.c.b16 %v587, %v583
    %v732 = vpack.c.b16 %v588, %v584
    %v733 = vpack.c.b16 %v589, %v585
    %v734 = vpack.c.b16 %v590, %v586
    %v735 = vpack.c.b16 %v595, %v591
    %v736 = vpack.c.b16 %v596, %v592
    %v737 = vpack.c.b16 %v597, %v593
    %v738 = vpack.c.b16 %v598, %v594
    %v739 = vpack.c.b16 %v603, %v599
    %v740 = vpack.c.b16 %v604, %v600
    %v741 = vpack.c.b16 %v605, %v601
    %v742 = vpack.c.b16 %v606, %v602
    %v743 = vpack.c.b16 %v611, %v607
    %v744 = vpack.c.b16 %v612, %v608
    %v745 = vpack.c.b16 %v613, %v609
    %v746 = vpack.c.b16 %v614, %v610
    %v747 = vpack.c.b16 %v619, %v615
    %v748 = vpack.c.b16 %v620, %v616
    %v749 = vpack.c.b16 %v621, %v617
    %v750 = vpack.c.b16 %v622, %v618
    %879 = vmatpush.bf16.msra.mxu0 %v651
    %880 = vmatpush.bf16.msra.mxu0 %v647
    %881 = vmatpush.bf16.msra.mxu0 %v643
    %882 = vmatpush.bf16.msra.mxu0 %v639
    %883 = vmatpush.bf16.msra.mxu0 %v635
    %884 = vmatpush.bf16.msra.mxu0 %v631
    %885 = vmatpush.bf16.msra.mxu0 %v627
    %886 = vmatpush.bf16.msra.mxu0 %v623
    %887 = vmatmul.bf16.gmra.mxu0 %v231
    %v888 = vpop.f32.mrf.mxu0
    %v889 = vadd.f32 0.0, %v888
    %v890 = vpop.f32.mrf.mxu0
    %891 = vdwg.mxu0
    %892 = vmatpush.bf16.msra.mxu0 %v683
    %893 = vmatpush.bf16.msra.mxu0 %v679
    %894 = vmatpush.bf16.msra.mxu0 %v675
    %895 = vmatpush.bf16.msra.mxu0 %v671
    %896 = vmatpush.bf16.msra.mxu0 %v667
    %897 = vmatpush.bf16.msra.mxu0 %v663
    %898 = vmatpush.bf16.msra.mxu0 %v659
    %899 = vmatpush.bf16.msra.mxu0 %v655
    %900 = vmatmul.bf16.gmra.mxu0 %v232
    %v901 = vpop.f32.mrf.mxu0
    %v902 = vadd.f32 %v889, %v901
    %v903 = vpop.f32.mrf.mxu0
    %904 = vdwg.mxu0
    %905 = vmatpush.bf16.msra.mxu0 %v715
    %906 = vmatpush.bf16.msra.mxu0 %v711
    %907 = vmatpush.bf16.msra.mxu0 %v707
    %908 = vmatpush.bf16.msra.mxu0 %v703
    %909 = vmatpush.bf16.msra.mxu0 %v699
    %910 = vmatpush.bf16.msra.mxu0 %v695
    %911 = vmatpush.bf16.msra.mxu0 %v691
    %912 = vmatpush.bf16.msra.mxu0 %v687
    %913 = vmatmul.bf16.gmra.mxu0 %v233
    %v914 = vpop.f32.mrf.mxu0
    %v915 = vadd.f32 %v902, %v914
    %v916 = vpop.f32.mrf.mxu0
    %917 = vdwg.mxu0
    %918 = vmatpush.bf16.msra.mxu0 %v747
    %919 = vmatpush.bf16.msra.mxu0 %v743
    %920 = vmatpush.bf16.msra.mxu0 %v739
    %921 = vmatpush.bf16.msra.mxu0 %v735
    %922 = vmatpush.bf16.msra.mxu0 %v731
    %923 = vmatpush.bf16.msra.mxu0 %v727
    %924 = vmatpush.bf16.msra.mxu0 %v723
    %925 = vmatpush.bf16.msra.mxu0 %v719
    %926 = vmatmul.bf16.gmra.mxu0 %v234
    %v927 = vpop.f32.mrf.mxu0
    %v928 = vadd.f32 %v915, %v927
    %v929 = vpop.f32.mrf.mxu0
    %930 = vdwg.mxu0
    %931 = vmatpush.bf16.msra.mxu0 %v652
    %932 = vmatpush.bf16.msra.mxu0 %v648
    %933 = vmatpush.bf16.msra.mxu0 %v644
    %934 = vmatpush.bf16.msra.mxu0 %v640
    %935 = vmatpush.bf16.msra.mxu0 %v636
    %936 = vmatpush.bf16.msra.mxu0 %v632
    %937 = vmatpush.bf16.msra.mxu0 %v628
    %938 = vmatpush.bf16.msra.mxu0 %v624
    %939 = vmatmul.bf16.gmra.mxu0 %v231
    %v940 = vpop.f32.mrf.mxu0
    %v941 = vadd.f32 0.0, %v940
    %v942 = vpop.f32.mrf.mxu0
    %943 = vdwg.mxu0
    %944 = vmatpush.bf16.msra.mxu0 %v684
    %945 = vmatpush.bf16.msra.mxu0 %v680
    %946 = vmatpush.bf16.msra.mxu0 %v676
    %947 = vmatpush.bf16.msra.mxu0 %v672
    %948 = vmatpush.bf16.msra.mxu0 %v668
    %949 = vmatpush.bf16.msra.mxu0 %v664
    %950 = vmatpush.bf16.msra.mxu0 %v660
    %951 = vmatpush.bf16.msra.mxu0 %v656
    %952 = vmatmul.bf16.gmra.mxu0 %v232
    %v953 = vpop.f32.mrf.mxu0
    %v954 = vadd.f32 %v941, %v953
    %v955 = vpop.f32.mrf.mxu0
    %956 = vdwg.mxu0
    %957 = vmatpush.bf16.msra.mxu0 %v716
    %958 = vmatpush.bf16.msra.mxu0 %v712
    %959 = vmatpush.bf16.msra.mxu0 %v708
    %960 = vmatpush.bf16.msra.mxu0 %v704
    %961 = vmatpush.bf16.msra.mxu0 %v700
    %962 = vmatpush.bf16.msra.mxu0 %v696
    %963 = vmatpush.bf16.msra.mxu0 %v692
    %964 = vmatpush.bf16.msra.mxu0 %v688
    %965 = vmatmul.bf16.gmra.mxu0 %v233
    %v966 = vpop.f32.mrf.mxu0
    %v967 = vadd.f32 %v954, %v966
    %v968 = vpop.f32.mrf.mxu0
    %969 = vdwg.mxu0
    %970 = vmatpush.bf16.msra.mxu0 %v748
    %971 = vmatpush.bf16.msra.mxu0 %v744
    %972 = vmatpush.bf16.msra.mxu0 %v740
    %973 = vmatpush.bf16.msra.mxu0 %v736
    %974 = vmatpush.bf16.msra.mxu0 %v732
    %975 = vmatpush.bf16.msra.mxu0 %v728
    %976 = vmatpush.bf16.msra.mxu0 %v724
    %977 = vmatpush.bf16.msra.mxu0 %v720
    %978 = vmatmul.bf16.gmra.mxu0 %v234
    %v979 = vpop.f32.mrf.mxu0
    %v980 = vadd.f32 %v967, %v979
    %v981 = vpop.f32.mrf.mxu0
    %982 = vdwg.mxu0
    %983 = vmatpush.bf16.msra.mxu0 %v653
    %984 = vmatpush.bf16.msra.mxu0 %v649
    %985 = vmatpush.bf16.msra.mxu0 %v645
    %986 = vmatpush.bf16.msra.mxu0 %v641
    %987 = vmatpush.bf16.msra.mxu0 %v637
    %988 = vmatpush.bf16.msra.mxu0 %v633
    %989 = vmatpush.bf16.msra.mxu0 %v629
    %990 = vmatpush.bf16.msra.mxu0 %v625
    %991 = vmatmul.bf16.gmra.mxu0 %v231
    %v992 = vpop.f32.mrf.mxu0
    %v993 = vadd.f32 0.0, %v992
    %v994 = vpop.f32.mrf.mxu0
    %995 = vdwg.mxu0
    %996 = vmatpush.bf16.msra.mxu0 %v685
    %997 = vmatpush.bf16.msra.mxu0 %v681
    %998 = vmatpush.bf16.msra.mxu0 %v677
    %999 = vmatpush.bf16.msra.mxu0 %v673
    %1000 = vmatpush.bf16.msra.mxu0 %v669
    %1001 = vmatpush.bf16.msra.mxu0 %v665
    %1002 = vmatpush.bf16.msra.mxu0 %v661
    %1003 = vmatpush.bf16.msra.mxu0 %v657
    %1004 = vmatmul.bf16.gmra.mxu0 %v232
    %v1005 = vpop.f32.mrf.mxu0
    %v1006 = vadd.f32 %v993, %v1005
    %v1007 = vpop.f32.mrf.mxu0
    %1008 = vdwg.mxu0
    %1009 = vmatpush.bf16.msra.mxu0 %v717
    %1010 = vmatpush.bf16.msra.mxu0 %v713
    %1011 = vmatpush.bf16.msra.mxu0 %v709
    %1012 = vmatpush.bf16.msra.mxu0 %v705
    %1013 = vmatpush.bf16.msra.mxu0 %v701
    %1014 = vmatpush.bf16.msra.mxu0 %v697
    %1015 = vmatpush.bf16.msra.mxu0 %v693
    %1016 = vmatpush.bf16.msra.mxu0 %v689
    %1017 = vmatmul.bf16.gmra.mxu0 %v233
    %v1018 = vpop.f32.mrf.mxu0
    %v1019 = vadd.f32 %v1006, %v1018
    %v1020 = vpop.f32.mrf.mxu0
    %1021 = vdwg.mxu0
    %1022 = vmatpush.bf16.msra.mxu0 %v749
    %1023 = vmatpush.bf16.msra.mxu0 %v745
    %1024 = vmatpush.bf16.msra.mxu0 %v741
    %1025 = vmatpush.bf16.msra.mxu0 %v737
    %1026 = vmatpush.bf16.msra.mxu0 %v733
    %1027 = vmatpush.bf16.msra.mxu0 %v729
    %1028 = vmatpush.bf16.msra.mxu0 %v725
    %1029 = vmatpush.bf16.msra.mxu0 %v721
    %1030 = vmatmul.bf16.gmra.mxu0 %v234
    %v1031 = vpop.f32.mrf.mxu0
    %v1032 = vadd.f32 %v1019, %v1031
    %v1033 = vpop.f32.mrf.mxu0
    %1034 = vdwg.mxu0
    %1035 = vmatpush.bf16.msra.mxu0 %v654
    %1036 = vmatpush.bf16.msra.mxu0 %v650
    %1037 = vmatpush.bf16.msra.mxu0 %v646
    %1038 = vmatpush.bf16.msra.mxu0 %v642
    %1039 = vmatpush.bf16.msra.mxu0 %v638
    %1040 = vmatpush.bf16.msra.mxu0 %v634
    %1041 = vmatpush.bf16.msra.mxu0 %v630
    %1042 = vmatpush.bf16.msra.mxu0 %v626
    %1043 = vmatmul.bf16.gmra.mxu0 %v231
    %v1044 = vpop.f32.mrf.mxu0
    %v1045 = vadd.f32 0.0, %v1044
    %v1046 = vpop.f32.mrf.mxu0
    %1047 = vdwg.mxu0
    %1048 = vmatpush.bf16.msra.mxu0 %v686
    %1049 = vmatpush.bf16.msra.mxu0 %v682
    %1050 = vmatpush.bf16.msra.mxu0 %v678
    %1051 = vmatpush.bf16.msra.mxu0 %v674
    %1052 = vmatpush.bf16.msra.mxu0 %v670
    %1053 = vmatpush.bf16.msra.mxu0 %v666
    %1054 = vmatpush.bf16.msra.mxu0 %v662
    %1055 = vmatpush.bf16.msra.mxu0 %v658
    %1056 = vmatmul.bf16.gmra.mxu0 %v232
    %v1057 = vpop.f32.mrf.mxu0
    %v1058 = vadd.f32 %v1045, %v1057
    %v1059 = vpop.f32.mrf.mxu0
    %1060 = vdwg.mxu0
    %1061 = vmatpush.bf16.msra.mxu0 %v718
    %1062 = vmatpush.bf16.msra.mxu0 %v714
    %1063 = vmatpush.bf16.msra.mxu0 %v710
    %1064 = vmatpush.bf16.msra.mxu0 %v706
    %1065 = vmatpush.bf16.msra.mxu0 %v702
    %1066 = vmatpush.bf16.msra.mxu0 %v698
    %1067 = vmatpush.bf16.msra.mxu0 %v694
    %1068 = vmatpush.bf16.msra.mxu0 %v690
    %1069 = vmatmul.bf16.gmra.mxu0 %v233
    %v1070 = vpop.f32.mrf.mxu0
    %v1071 = vadd.f32 %v1058, %v1070
    %v1072 = vpop.f32.mrf.mxu0
    %1073 = vdwg.mxu0
    %1074 = vmatpush.bf16.msra.mxu0 %v750
    %1075 = vmatpush.bf16.msra.mxu0 %v746
    %1076 = vmatpush.bf16.msra.mxu0 %v742
    %1077 = vmatpush.bf16.msra.mxu0 %v738
    %1078 = vmatpush.bf16.msra.mxu0 %v734
    %1079 = vmatpush.bf16.msra.mxu0 %v730
    %1080 = vmatpush.bf16.msra.mxu0 %v726
    %1081 = vmatpush.bf16.msra.mxu0 %v722
    %1082 = vmatmul.bf16.gmra.mxu0 %v234
    %v1083 = vpop.f32.mrf.mxu0
    %v1084 = vadd.f32 %v1071, %v1083
    %v1085 = vpop.f32.mrf.mxu0
    %1086 = vdwg.mxu0
    %v1087 = vrot.slane %v928, 4
    %v1088 = vadd.f32 %v928, %v1087
    %v1089 = vrot.slane %v1088, 2
    %v1090 = vadd.f32 %v1088, %v1089
    %v1091 = vrot.slane %v1090, 1
    %v1092 = vadd.f32 %v1090, %v1091
    %v1093 = vrot.slane %v980, 4
    %v1094 = vadd.f32 %v980, %v1093
    %v1095 = vrot.slane %v1094, 2
    %v1096 = vadd.f32 %v1094, %v1095
    %v1097 = vrot.slane %v1096, 1
    %v1098 = vadd.f32 %v1096, %v1097
    %v1099 = vrot.slane %v1032, 4
    %v1100 = vadd.f32 %v1032, %v1099
    %v1101 = vrot.slane %v1100, 2
    %v1102 = vadd.f32 %v1100, %v1101
    %v1103 = vrot.slane %v1102, 1
    %v1104 = vadd.f32 %v1102, %v1103
    %v1105 = vrot.slane %v1084, 4
    %v1106 = vadd.f32 %v1084, %v1105
    %v1107 = vrot.slane %v1106, 2
    %v1108 = vadd.f32 %v1106, %v1107
    %v1109 = vrot.slane %v1108, 1
    %v1110 = vadd.f32 %v1108, %v1109
    %v1111 = vmul.f32 %v928, %v928
    %v1112 = vmul.f32 %v980, %v980
    %v1113 = vmul.f32 %v1032, %v1032
    %v1114 = vmul.f32 %v1084, %v1084
    %v1115 = vrot.slane %v1111, 4
    %v1116 = vadd.f32 %v1111, %v1115
    %v1117 = vrot.slane %v1116, 2
    %v1118 = vadd.f32 %v1116, %v1117
    %v1119 = vrot.slane %v1118, 1
    %v1120 = vadd.f32 %v1118, %v1119
    %v1121 = vrot.slane %v1112, 4
    %v1122 = vadd.f32 %v1112, %v1121
    %v1123 = vrot.slane %v1122, 2
    %v1124 = vadd.f32 %v1122, %v1123
    %v1125 = vrot.slane %v1124, 1
    %v1126 = vadd.f32 %v1124, %v1125
    %v1127 = vrot.slane %v1113, 4
    %v1128 = vadd.f32 %v1113, %v1127
    %v1129 = vrot.slane %v1128, 2
    %v1130 = vadd.f32 %v1128, %v1129
    %v1131 = vrot.slane %v1130, 1
    %v1132 = vadd.f32 %v1130, %v1131
    %v1133 = vrot.slane %v1114, 4
    %v1134 = vadd.f32 %v1114, %v1133
    %v1135 = vrot.slane %v1134, 2
    %v1136 = vadd.f32 %v1134, %v1135
    %v1137 = vrot.slane %v1136, 1
    %v1138 = vadd.f32 %v1136, %v1137
    %v1139 = vmul.f32 %v1092, 0.125
    %v1140 = vmul.f32 %v1098, 0.125
    %v1141 = vmul.f32 %v1104, 0.125
    %v1142 = vmul.f32 %v1110, 0.125
    %v1143 = vmul.f32 %v1120, 0.125
    %v1144 = vmul.f32 %v1126, 0.125
    %v1145 = vmul.f32 %v1132, 0.125
    %v1146 = vmul.f32 %v1138, 0.125
    %v1147 = vmul.f32 %v1139, %v1139
    %v1148 = vmul.f32 %v1140, %v1140
    %v1149 = vmul.f32 %v1141, %v1141
    %v1150 = vmul.f32 %v1142, %v1142
    %v1151 = vsub.f32 %v1143, %v1147
    %v1152 = vsub.f32 %v1144, %v1148
    %v1153 = vsub.f32 %v1145, %v1149
    %v1154 = vsub.f32 %v1146, %v1150
    %v1155 = vmax.f32 %v1151, 0.0
    %v1156 = vmax.f32 %v1152, 0.0
    %v1157 = vmax.f32 %v1153, 0.0
    %v1158 = vmax.f32 %v1154, 0.0
    %v1159 = vld [vmem:[#allocation8] ss:$8 sm:$0xf]
    %v1160 = vadd.f32 %v1155, 1e-05
    %v1161 = vadd.f32 %v1156, 1e-05
    %v1162 = vadd.f32 %v1157, 1e-05
    %v1163 = vadd.f32 %v1158, 1e-05
    %v1164 = vrsqrt.pop %v1160
    %v1165 = vmul.f32 %v1164, %v1160
    %v1166 = vmul.f32 %v1165, %v1164
    %v1167 = vmul.f32 0.5, %v1166
    %v1168 = vsub.f32 1.5, %v1167
    %v1169 = vmul.f32 %v1164, %v1168
    %vm1170 = vweird.f32 %v1160
    %vm1171 = vweird.f32 %v1164
    %vm1172 = vmor %vm1170, %vm1171
    %v1173 = vsel %vm1172, %v1164, %v1169
    %v1174 = vrsqrt.pop %v1161
    %v1175 = vmul.f32 %v1174, %v1161
    %v1176 = vmul.f32 %v1175, %v1174
    %v1177 = vmul.f32 0.5, %v1176
    %v1178 = vsub.f32 1.5, %v1177
    %v1179 = vmul.f32 %v1174, %v1178
    %vm1180 = vweird.f32 %v1161
    %vm1181 = vweird.f32 %v1174
    %vm1182 = vmor %vm1180, %vm1181
    %v1183 = vsel %vm1182, %v1174, %v1179
    %v1184 = vrsqrt.pop %v1162
    %v1185 = vmul.f32 %v1184, %v1162
    %v1186 = vmul.f32 %v1185, %v1184
    %v1187 = vmul.f32 0.5, %v1186
    %v1188 = vsub.f32 1.5, %v1187
    %v1189 = vmul.f32 %v1184, %v1188
    %vm1190 = vweird.f32 %v1162
    %vm1191 = vweird.f32 %v1184
    %vm1192 = vmor %vm1190, %vm1191
    %v1193 = vsel %vm1192, %v1184, %v1189
    %v1194 = vrsqrt.pop %v1163
    %v1195 = vmul.f32 %v1194, %v1163
    %v1196 = vmul.f32 %v1195, %v1194
    %v1197 = vmul.f32 0.5, %v1196
    %v1198 = vsub.f32 1.5, %v1197
    %v1199 = vmul.f32 %v1194, %v1198
    %vm1200 = vweird.f32 %v1163
    %vm1201 = vweird.f32 %v1194
    %vm1202 = vmor %vm1200, %vm1201
    %v1203 = vsel %vm1202, %v1194, %v1199
    %v1208 = vrot.slane %v1183, 7
    %v1209 = vrot.slane %v1193, 6
    %v1210 = vrot.slane %v1203, 5
    %vm1211 = vcmask 1040384
    %v1212 = vsel %vm1211, %v1173, %v1208
    %vm1213 = vcmask 1042434
    %v1214 = vsel %vm1213, %v1209, %v1210
    %vm1215 = vcmask 1041408
    %v1216 = vsel %vm1215, %v1212, %v1214
    %v1218 = vmul.f32 %v1159, %v1216
    %s1219 = scalar_lea.vmem [#allocation8], 1
    %v1220 = vld [vmem:[%s1219] ss:$8 sm:$0xf]
    %v1222 = vperm.slane %v1218, 0
    %v1223 = vperm.slane %v1218, 1
    %v1224 = vperm.slane %v1218, 2
    %v1225 = vperm.slane %v1218, 3
    %v1230 = vmul.f32 %v1139, %v1222
    %v1231 = vmul.f32 %v1140, %v1223
    %v1232 = vmul.f32 %v1141, %v1224
    %v1233 = vmul.f32 %v1142, %v1225
    %v1238 = vrot.slane %v1231, 7
    %v1239 = vrot.slane %v1232, 6
    %v1240 = vrot.slane %v1233, 5
    %v1241 = vsel %vm1211, %v1230, %v1238
    %v1242 = vsel %vm1213, %v1239, %v1240
    %v1243 = vsel %vm1215, %v1241, %v1242
    %v1245 = vsub.f32 %v1220, %v1243
    %v1246 = vmul.f32 %v928, %v1222
    %v1247 = vmul.f32 %v980, %v1223
    %v1248 = vmul.f32 %v1032, %v1224
    %v1249 = vmul.f32 %v1084, %v1225
    %v1251 = vperm.slane %v1245, 0
    %v1252 = vperm.slane %v1245, 1
    %v1253 = vperm.slane %v1245, 2
    %v1254 = vperm.slane %v1245, 3
    %v1259 = vadd.f32 %v1246, %v1251
    %v1260 = vadd.f32 %v1247, %v1252
    %v1261 = vadd.f32 %v1248, %v1253
    %v1262 = vadd.f32 %v1249, %v1254
    %v1263 = vmax.f32 %v1259, 0.0
    %v1264 = vmax.f32 %v1260, 0.0
    %v1265 = vmax.f32 %v1261, 0.0
    %v1266 = vmax.f32 %v1262, 0.0
    %v1267 = vpack.c.bf16 %v1263, %v1263
    %v1268 = vpack.c.bf16 %v1264, %v1264
    %v1269 = vpack.c.bf16 %v1265, %v1265
    %v1270 = vpack.c.bf16 %v1266, %v1266
    %s1271 = scalar_lea.vmem [#allocation5], 1024
    %v1272 = vld [vmem:[%s1271] sm:$0xff]
    %v1273 = vld [vmem:[%s1271 + $0x8] sm:$0xff]
    %v1274 = vld [vmem:[%s1271 + $0x10] sm:$0xff]
    %v1275 = vld [vmem:[%s1271 + $0x18] sm:$0xff]
    %v1276 = vld [vmem:[%s1271 + $0x20] sm:$0xff]
    %v1277 = vld [vmem:[%s1271 + $0x28] sm:$0xff]
    %v1278 = vld [vmem:[%s1271 + $0x30] sm:$0xff]
    %v1279 = vld [vmem:[%s1271 + $0x38] sm:$0xff]
    %v1280 = vld [vmem:[%s1271 + $0x40] sm:$0xff]
    %v1281 = vld [vmem:[%s1271 + $0x48] sm:$0xff]
    %v1282 = vld [vmem:[%s1271 + $0x50] sm:$0xff]
    %v1283 = vld [vmem:[%s1271 + $0x58] sm:$0xff]
    %v1284 = vld [vmem:[%s1271 + $0x60] sm:$0xff]
    %v1285 = vld [vmem:[%s1271 + $0x68] sm:$0xff]
    %v1286 = vld [vmem:[%s1271 + $0x70] sm:$0xff]
    %v1287 = vld [vmem:[%s1271 + $0x78] sm:$0xff]
    %v1288 = vld [vmem:[%s1271 + $0x80] sm:$0xff]
    %v1289 = vld [vmem:[%s1271 + $0x88] sm:$0xff]
    %v1290 = vld [vmem:[%s1271 + $0x90] sm:$0xff]
    %v1291 = vld [vmem:[%s1271 + $0x98] sm:$0xff]
    %v1292 = vld [vmem:[%s1271 + $0xa0] sm:$0xff]
    %v1293 = vld [vmem:[%s1271 + $0xa8] sm:$0xff]
    %v1294 = vld [vmem:[%s1271 + $0xb0] sm:$0xff]
    %v1295 = vld [vmem:[%s1271 + $0xb8] sm:$0xff]
    %v1296 = vld [vmem:[%s1271 + $0xc0] sm:$0xff]
    %v1297 = vld [vmem:[%s1271 + $0xc8] sm:$0xff]
    %v1298 = vld [vmem:[%s1271 + $0xd0] sm:$0xff]
    %v1299 = vld [vmem:[%s1271 + $0xd8] sm:$0xff]
    %v1300 = vld [vmem:[%s1271 + $0xe0] sm:$0xff]
    %v1301 = vld [vmem:[%s1271 + $0xe8] sm:$0xff]
    %v1302 = vld [vmem:[%s1271 + $0xf0] sm:$0xff]
    %v1303 = vld [vmem:[%s1271 + $0xf8] sm:$0xff]
    %v1304 = vld [vmem:[%s1271 + $0x100] sm:$0xff]
    %v1305 = vld [vmem:[%s1271 + $0x108] sm:$0xff]
    %v1306 = vld [vmem:[%s1271 + $0x110] sm:$0xff]
    %v1307 = vld [vmem:[%s1271 + $0x118] sm:$0xff]
    %v1308 = vld [vmem:[%s1271 + $0x120] sm:$0xff]
    %v1309 = vld [vmem:[%s1271 + $0x128] sm:$0xff]
    %v1310 = vld [vmem:[%s1271 + $0x130] sm:$0xff]
    %v1311 = vld [vmem:[%s1271 + $0x138] sm:$0xff]
    %v1312 = vld [vmem:[%s1271 + $0x140] sm:$0xff]
    %v1313 = vld [vmem:[%s1271 + $0x148] sm:$0xff]
    %v1314 = vld [vmem:[%s1271 + $0x150] sm:$0xff]
    %v1315 = vld [vmem:[%s1271 + $0x158] sm:$0xff]
    %v1316 = vld [vmem:[%s1271 + $0x160] sm:$0xff]
    %v1317 = vld [vmem:[%s1271 + $0x168] sm:$0xff]
    %v1318 = vld [vmem:[%s1271 + $0x170] sm:$0xff]
    %v1319 = vld [vmem:[%s1271 + $0x178] sm:$0xff]
    %v1320 = vld [vmem:[%s1271 + $0x180] sm:$0xff]
    %v1321 = vld [vmem:[%s1271 + $0x188] sm:$0xff]
    %v1322 = vld [vmem:[%s1271 + $0x190] sm:$0xff]
    %v1323 = vld [vmem:[%s1271 + $0x198] sm:$0xff]
    %v1324 = vld [vmem:[%s1271 + $0x1a0] sm:$0xff]
    %v1325 = vld [vmem:[%s1271 + $0x1a8] sm:$0xff]
    %v1326 = vld [vmem:[%s1271 + $0x1b0] sm:$0xff]
    %v1327 = vld [vmem:[%s1271 + $0x1b8] sm:$0xff]
    %v1328 = vld [vmem:[%s1271 + $0x1c0] sm:$0xff]
    %v1329 = vld [vmem:[%s1271 + $0x1c8] sm:$0xff]
    %v1330 = vld [vmem:[%s1271 + $0x1d0] sm:$0xff]
    %v1331 = vld [vmem:[%s1271 + $0x1d8] sm:$0xff]
    %v1332 = vld [vmem:[%s1271 + $0x1e0] sm:$0xff]
    %v1333 = vld [vmem:[%s1271 + $0x1e8] sm:$0xff]
    %v1334 = vld [vmem:[%s1271 + $0x1f0] sm:$0xff]
    %v1335 = vld [vmem:[%s1271 + $0x1f8] sm:$0xff]
    %v1336 = vld [vmem:[%s1271 + $0x200] sm:$0xff]
    %v1337 = vld [vmem:[%s1271 + $0x208] sm:$0xff]
    %v1338 = vld [vmem:[%s1271 + $0x210] sm:$0xff]
    %v1339 = vld [vmem:[%s1271 + $0x218] sm:$0xff]
    %v1340 = vld [vmem:[%s1271 + $0x220] sm:$0xff]
    %v1341 = vld [vmem:[%s1271 + $0x228] sm:$0xff]
    %v1342 = vld [vmem:[%s1271 + $0x230] sm:$0xff]
    %v1343 = vld [vmem:[%s1271 + $0x238] sm:$0xff]
    %v1344 = vld [vmem:[%s1271 + $0x240] sm:$0xff]
    %v1345 = vld [vmem:[%s1271 + $0x248] sm:$0xff]
    %v1346 = vld [vmem:[%s1271 + $0x250] sm:$0xff]
    %v1347 = vld [vmem:[%s1271 + $0x258] sm:$0xff]
    %v1348 = vld [vmem:[%s1271 + $0x260] sm:$0xff]
    %v1349 = vld [vmem:[%s1271 + $0x268] sm:$0xff]
    %v1350 = vld [vmem:[%s1271 + $0x270] sm:$0xff]
    %v1351 = vld [vmem:[%s1271 + $0x278] sm:$0xff]
    %v1352 = vld [vmem:[%s1271 + $0x280] sm:$0xff]
    %v1353 = vld [vmem:[%s1271 + $0x288] sm:$0xff]
    %v1354 = vld [vmem:[%s1271 + $0x290] sm:$0xff]
    %v1355 = vld [vmem:[%s1271 + $0x298] sm:$0xff]
    %v1356 = vld [vmem:[%s1271 + $0x2a0] sm:$0xff]
    %v1357 = vld [vmem:[%s1271 + $0x2a8] sm:$0xff]
    %v1358 = vld [vmem:[%s1271 + $0x2b0] sm:$0xff]
    %v1359 = vld [vmem:[%s1271 + $0x2b8] sm:$0xff]
    %v1360 = vld [vmem:[%s1271 + $0x2c0] sm:$0xff]
    %v1361 = vld [vmem:[%s1271 + $0x2c8] sm:$0xff]
    %v1362 = vld [vmem:[%s1271 + $0x2d0] sm:$0xff]
    %v1363 = vld [vmem:[%s1271 + $0x2d8] sm:$0xff]
    %v1364 = vld [vmem:[%s1271 + $0x2e0] sm:$0xff]
    %v1365 = vld [vmem:[%s1271 + $0x2e8] sm:$0xff]
    %v1366 = vld [vmem:[%s1271 + $0x2f0] sm:$0xff]
    %v1367 = vld [vmem:[%s1271 + $0x2f8] sm:$0xff]
    %v1368 = vld [vmem:[%s1271 + $0x300] sm:$0xff]
    %v1369 = vld [vmem:[%s1271 + $0x308] sm:$0xff]
    %v1370 = vld [vmem:[%s1271 + $0x310] sm:$0xff]
    %v1371 = vld [vmem:[%s1271 + $0x318] sm:$0xff]
    %v1372 = vld [vmem:[%s1271 + $0x320] sm:$0xff]
    %v1373 = vld [vmem:[%s1271 + $0x328] sm:$0xff]
    %v1374 = vld [vmem:[%s1271 + $0x330] sm:$0xff]
    %v1375 = vld [vmem:[%s1271 + $0x338] sm:$0xff]
    %v1376 = vld [vmem:[%s1271 + $0x340] sm:$0xff]
    %v1377 = vld [vmem:[%s1271 + $0x348] sm:$0xff]
    %v1378 = vld [vmem:[%s1271 + $0x350] sm:$0xff]
    %v1379 = vld [vmem:[%s1271 + $0x358] sm:$0xff]
    %v1380 = vld [vmem:[%s1271 + $0x360] sm:$0xff]
    %v1381 = vld [vmem:[%s1271 + $0x368] sm:$0xff]
    %v1382 = vld [vmem:[%s1271 + $0x370] sm:$0xff]
    %v1383 = vld [vmem:[%s1271 + $0x378] sm:$0xff]
    %v1384 = vld [vmem:[%s1271 + $0x380] sm:$0xff]
    %v1385 = vld [vmem:[%s1271 + $0x388] sm:$0xff]
    %v1386 = vld [vmem:[%s1271 + $0x390] sm:$0xff]
    %v1387 = vld [vmem:[%s1271 + $0x398] sm:$0xff]
    %v1388 = vld [vmem:[%s1271 + $0x3a0] sm:$0xff]
    %v1389 = vld [vmem:[%s1271 + $0x3a8] sm:$0xff]
    %v1390 = vld [vmem:[%s1271 + $0x3b0] sm:$0xff]
    %v1391 = vld [vmem:[%s1271 + $0x3b8] sm:$0xff]
    %v1392 = vld [vmem:[%s1271 + $0x3c0] sm:$0xff]
    %v1393 = vld [vmem:[%s1271 + $0x3c8] sm:$0xff]
    %v1394 = vld [vmem:[%s1271 + $0x3d0] sm:$0xff]
    %v1395 = vld [vmem:[%s1271 + $0x3d8] sm:$0xff]
    %v1396 = vld [vmem:[%s1271 + $0x3e0] sm:$0xff]
    %v1397 = vld [vmem:[%s1271 + $0x3e8] sm:$0xff]
    %v1398 = vld [vmem:[%s1271 + $0x3f0] sm:$0xff]
    %v1399 = vld [vmem:[%s1271 + $0x3f8] sm:$0xff]
    %v1528 = vunpack.c.l.b16 %v1272
    %v1529 = vunpack.c.h.b16 %v1272
    %v1530 = vunpack.c.l.b16 %v1273
    %v1531 = vunpack.c.h.b16 %v1273
    %v1532 = vunpack.c.l.b16 %v1274
    %v1533 = vunpack.c.h.b16 %v1274
    %v1534 = vunpack.c.l.b16 %v1275
    %v1535 = vunpack.c.h.b16 %v1275
    %v1536 = vunpack.c.l.b16 %v1276
    %v1537 = vunpack.c.h.b16 %v1276
    %v1538 = vunpack.c.l.b16 %v1277
    %v1539 = vunpack.c.h.b16 %v1277
    %v1540 = vunpack.c.l.b16 %v1278
    %v1541 = vunpack.c.h.b16 %v1278
    %v1542 = vunpack.c.l.b16 %v1279
    %v1543 = vunpack.c.h.b16 %v1279
    %v1544 = vunpack.c.l.b16 %v1280
    %v1545 = vunpack.c.h.b16 %v1280
    %v1546 = vunpack.c.l.b16 %v1281
    %v1547 = vunpack.c.h.b16 %v1281
    %v1548 = vunpack.c.l.b16 %v1282
    %v1549 = vunpack.c.h.b16 %v1282
    %v1550 = vunpack.c.l.b16 %v1283
    %v1551 = vunpack.c.h.b16 %v1283
    %v1552 = vunpack.c.l.b16 %v1284
    %v1553 = vunpack.c.h.b16 %v1284
    %v1554 = vunpack.c.l.b16 %v1285
    %v1555 = vunpack.c.h.b16 %v1285
    %v1556 = vunpack.c.l.b16 %v1286
    %v1557 = vunpack.c.h.b16 %v1286
    %v1558 = vunpack.c.l.b16 %v1287
    %v1559 = vunpack.c.h.b16 %v1287
    %v1560 = vunpack.c.l.b16 %v1288
    %v1561 = vunpack.c.h.b16 %v1288
    %v1562 = vunpack.c.l.b16 %v1289
    %v1563 = vunpack.c.h.b16 %v1289
    %v1564 = vunpack.c.l.b16 %v1290
    %v1565 = vunpack.c.h.b16 %v1290
    %v1566 = vunpack.c.l.b16 %v1291
    %v1567 = vunpack.c.h.b16 %v1291
    %v1568 = vunpack.c.l.b16 %v1292
    %v1569 = vunpack.c.h.b16 %v1292
    %v1570 = vunpack.c.l.b16 %v1293
    %v1571 = vunpack.c.h.b16 %v1293
    %v1572 = vunpack.c.l.b16 %v1294
    %v1573 = vunpack.c.h.b16 %v1294
    %v1574 = vunpack.c.l.b16 %v1295
    %v1575 = vunpack.c.h.b16 %v1295
    %v1576 = vunpack.c.l.b16 %v1296
    %v1577 = vunpack.c.h.b16 %v1296
    %v1578 = vunpack.c.l.b16 %v1297
    %v1579 = vunpack.c.h.b16 %v1297
    %v1580 = vunpack.c.l.b16 %v1298
    %v1581 = vunpack.c.h.b16 %v1298
    %v1582 = vunpack.c.l.b16 %v1299
    %v1583 = vunpack.c.h.b16 %v1299
    %v1584 = vunpack.c.l.b16 %v1300
    %v1585 = vunpack.c.h.b16 %v1300
    %v1586 = vunpack.c.l.b16 %v1301
    %v1587 = vunpack.c.h.b16 %v1301
    %v1588 = vunpack.c.l.b16 %v1302
    %v1589 = vunpack.c.h.b16 %v1302
    %v1590 = vunpack.c.l.b16 %v1303
    %v1591 = vunpack.c.h.b16 %v1303
    %v1592 = vunpack.c.l.b16 %v1304
    %v1593 = vunpack.c.h.b16 %v1304
    %v1594 = vunpack.c.l.b16 %v1305
    %v1595 = vunpack.c.h.b16 %v1305
    %v1596 = vunpack.c.l.b16 %v1306
    %v1597 = vunpack.c.h.b16 %v1306
    %v1598 = vunpack.c.l.b16 %v1307
    %v1599 = vunpack.c.h.b16 %v1307
    %v1600 = vunpack.c.l.b16 %v1308
    %v1601 = vunpack.c.h.b16 %v1308
    %v1602 = vunpack.c.l.b16 %v1309
    %v1603 = vunpack.c.h.b16 %v1309
    %v1604 = vunpack.c.l.b16 %v1310
    %v1605 = vunpack.c.h.b16 %v1310
    %v1606 = vunpack.c.l.b16 %v1311
    %v1607 = vunpack.c.h.b16 %v1311
    %v1608 = vunpack.c.l.b16 %v1312
    %v1609 = vunpack.c.h.b16 %v1312
    %v1610 = vunpack.c.l.b16 %v1313
    %v1611 = vunpack.c.h.b16 %v1313
    %v1612 = vunpack.c.l.b16 %v1314
    %v1613 = vunpack.c.h.b16 %v1314
    %v1614 = vunpack.c.l.b16 %v1315
    %v1615 = vunpack.c.h.b16 %v1315
    %v1616 = vunpack.c.l.b16 %v1316
    %v1617 = vunpack.c.h.b16 %v1316
    %v1618 = vunpack.c.l.b16 %v1317
    %v1619 = vunpack.c.h.b16 %v1317
    %v1620 = vunpack.c.l.b16 %v1318
    %v1621 = vunpack.c.h.b16 %v1318
    %v1622 = vunpack.c.l.b16 %v1319
    %v1623 = vunpack.c.h.b16 %v1319
    %v1624 = vunpack.c.l.b16 %v1320
    %v1625 = vunpack.c.h.b16 %v1320
    %v1626 = vunpack.c.l.b16 %v1321
    %v1627 = vunpack.c.h.b16 %v1321
    %v1628 = vunpack.c.l.b16 %v1322
    %v1629 = vunpack.c.h.b16 %v1322
    %v1630 = vunpack.c.l.b16 %v1323
    %v1631 = vunpack.c.h.b16 %v1323
    %v1632 = vunpack.c.l.b16 %v1324
    %v1633 = vunpack.c.h.b16 %v1324
    %v1634 = vunpack.c.l.b16 %v1325
    %v1635 = vunpack.c.h.b16 %v1325
    %v1636 = vunpack.c.l.b16 %v1326
    %v1637 = vunpack.c.h.b16 %v1326
    %v1638 = vunpack.c.l.b16 %v1327
    %v1639 = vunpack.c.h.b16 %v1327
    %v1640 = vunpack.c.l.b16 %v1328
    %v1641 = vunpack.c.h.b16 %v1328
    %v1642 = vunpack.c.l.b16 %v1329
    %v1643 = vunpack.c.h.b16 %v1329
    %v1644 = vunpack.c.l.b16 %v1330
    %v1645 = vunpack.c.h.b16 %v1330
    %v1646 = vunpack.c.l.b16 %v1331
    %v1647 = vunpack.c.h.b16 %v1331
    %v1648 = vunpack.c.l.b16 %v1332
    %v1649 = vunpack.c.h.b16 %v1332
    %v1650 = vunpack.c.l.b16 %v1333
    %v1651 = vunpack.c.h.b16 %v1333
    %v1652 = vunpack.c.l.b16 %v1334
    %v1653 = vunpack.c.h.b16 %v1334
    %v1654 = vunpack.c.l.b16 %v1335
    %v1655 = vunpack.c.h.b16 %v1335
    %v1656 = vunpack.c.l.b16 %v1336
    %v1657 = vunpack.c.h.b16 %v1336
    %v1658 = vunpack.c.l.b16 %v1337
    %v1659 = vunpack.c.h.b16 %v1337
    %v1660 = vunpack.c.l.b16 %v1338
    %v1661 = vunpack.c.h.b16 %v1338
    %v1662 = vunpack.c.l.b16 %v1339
    %v1663 = vunpack.c.h.b16 %v1339
    %v1664 = vunpack.c.l.b16 %v1340
    %v1665 = vunpack.c.h.b16 %v1340
    %v1666 = vunpack.c.l.b16 %v1341
    %v1667 = vunpack.c.h.b16 %v1341
    %v1668 = vunpack.c.l.b16 %v1342
    %v1669 = vunpack.c.h.b16 %v1342
    %v1670 = vunpack.c.l.b16 %v1343
    %v1671 = vunpack.c.h.b16 %v1343
    %v1672 = vunpack.c.l.b16 %v1344
    %v1673 = vunpack.c.h.b16 %v1344
    %v1674 = vunpack.c.l.b16 %v1345
    %v1675 = vunpack.c.h.b16 %v1345
    %v1676 = vunpack.c.l.b16 %v1346
    %v1677 = vunpack.c.h.b16 %v1346
    %v1678 = vunpack.c.l.b16 %v1347
    %v1679 = vunpack.c.h.b16 %v1347
    %v1680 = vunpack.c.l.b16 %v1348
    %v1681 = vunpack.c.h.b16 %v1348
    %v1682 = vunpack.c.l.b16 %v1349
    %v1683 = vunpack.c.h.b16 %v1349
    %v1684 = vunpack.c.l.b16 %v1350
    %v1685 = vunpack.c.h.b16 %v1350
    %v1686 = vunpack.c.l.b16 %v1351
    %v1687 = vunpack.c.h.b16 %v1351
    %v1688 = vunpack.c.l.b16 %v1352
    %v1689 = vunpack.c.h.b16 %v1352
    %v1690 = vunpack.c.l.b16 %v1353
    %v1691 = vunpack.c.h.b16 %v1353
    %v1692 = vunpack.c.l.b16 %v1354
    %v1693 = vunpack.c.h.b16 %v1354
    %v1694 = vunpack.c.l.b16 %v1355
    %v1695 = vunpack.c.h.b16 %v1355
    %v1696 = vunpack.c.l.b16 %v1356
    %v1697 = vunpack.c.h.b16 %v1356
    %v1698 = vunpack.c.l.b16 %v1357
    %v1699 = vunpack.c.h.b16 %v1357
    %v1700 = vunpack.c.l.b16 %v1358
    %v1701 = vunpack.c.h.b16 %v1358
    %v1702 = vunpack.c.l.b16 %v1359
    %v1703 = vunpack.c.h.b16 %v1359
    %v1704 = vunpack.c.l.b16 %v1360
    %v1705 = vunpack.c.h.b16 %v1360
    %v1706 = vunpack.c.l.b16 %v1361
    %v1707 = vunpack.c.h.b16 %v1361
    %v1708 = vunpack.c.l.b16 %v1362
    %v1709 = vunpack.c.h.b16 %v1362
    %v1710 = vunpack.c.l.b16 %v1363
    %v1711 = vunpack.c.h.b16 %v1363
    %v1712 = vunpack.c.l.b16 %v1364
    %v1713 = vunpack.c.h.b16 %v1364
    %v1714 = vunpack.c.l.b16 %v1365
    %v1715 = vunpack.c.h.b16 %v1365
    %v1716 = vunpack.c.l.b16 %v1366
    %v1717 = vunpack.c.h.b16 %v1366
    %v1718 = vunpack.c.l.b16 %v1367
    %v1719 = vunpack.c.h.b16 %v1367
    %v1720 = vunpack.c.l.b16 %v1368
    %v1721 = vunpack.c.h.b16 %v1368
    %v1722 = vunpack.c.l.b16 %v1369
    %v1723 = vunpack.c.h.b16 %v1369
    %v1724 = vunpack.c.l.b16 %v1370
    %v1725 = vunpack.c.h.b16 %v1370
    %v1726 = vunpack.c.l.b16 %v1371
    %v1727 = vunpack.c.h.b16 %v1371
    %v1728 = vunpack.c.l.b16 %v1372
    %v1729 = vunpack.c.h.b16 %v1372
    %v1730 = vunpack.c.l.b16 %v1373
    %v1731 = vunpack.c.h.b16 %v1373
    %v1732 = vunpack.c.l.b16 %v1374
    %v1733 = vunpack.c.h.b16 %v1374
    %v1734 = vunpack.c.l.b16 %v1375
    %v1735 = vunpack.c.h.b16 %v1375
    %v1736 = vunpack.c.l.b16 %v1376
    %v1737 = vunpack.c.h.b16 %v1376
    %v1738 = vunpack.c.l.b16 %v1377
    %v1739 = vunpack.c.h.b16 %v1377
    %v1740 = vunpack.c.l.b16 %v1378
    %v1741 = vunpack.c.h.b16 %v1378
    %v1742 = vunpack.c.l.b16 %v1379
    %v1743 = vunpack.c.h.b16 %v1379
    %v1744 = vunpack.c.l.b16 %v1380
    %v1745 = vunpack.c.h.b16 %v1380
    %v1746 = vunpack.c.l.b16 %v1381
    %v1747 = vunpack.c.h.b16 %v1381
    %v1748 = vunpack.c.l.b16 %v1382
    %v1749 = vunpack.c.h.b16 %v1382
    %v1750 = vunpack.c.l.b16 %v1383
    %v1751 = vunpack.c.h.b16 %v1383
    %v1752 = vunpack.c.l.b16 %v1384
    %v1753 = vunpack.c.h.b16 %v1384
    %v1754 = vunpack.c.l.b16 %v1385
    %v1755 = vunpack.c.h.b16 %v1385
    %v1756 = vunpack.c.l.b16 %v1386
    %v1757 = vunpack.c.h.b16 %v1386
    %v1758 = vunpack.c.l.b16 %v1387
    %v1759 = vunpack.c.h.b16 %v1387
    %v1760 = vunpack.c.l.b16 %v1388
    %v1761 = vunpack.c.h.b16 %v1388
    %v1762 = vunpack.c.l.b16 %v1389
    %v1763 = vunpack.c.h.b16 %v1389
    %v1764 = vunpack.c.l.b16 %v1390
    %v1765 = vunpack.c.h.b16 %v1390
    %v1766 = vunpack.c.l.b16 %v1391
    %v1767 = vunpack.c.h.b16 %v1391
    %v1768 = vunpack.c.l.b16 %v1392
    %v1769 = vunpack.c.h.b16 %v1392
    %v1770 = vunpack.c.l.b16 %v1393
    %v1771 = vunpack.c.h.b16 %v1393
    %v1772 = vunpack.c.l.b16 %v1394
    %v1773 = vunpack.c.h.b16 %v1394
    %v1774 = vunpack.c.l.b16 %v1395
    %v1775 = vunpack.c.h.b16 %v1395
    %v1776 = vunpack.c.l.b16 %v1396
    %v1777 = vunpack.c.h.b16 %v1396
    %v1778 = vunpack.c.l.b16 %v1397
    %v1779 = vunpack.c.h.b16 %v1397
    %v1780 = vunpack.c.l.b16 %v1398
    %v1781 = vunpack.c.h.b16 %v1398
    %v1782 = vunpack.c.l.b16 %v1399
    %v1783 = vunpack.c.h.b16 %v1399
    %v1784 = vpack.c.b16 %v1532, %v1528
    %v1785 = vpack.c.b16 %v1533, %v1529
    %v1786 = vpack.c.b16 %v1534, %v1530
    %v1787 = vpack.c.b16 %v1535, %v1531
    %v1788 = vpack.c.b16 %v1540, %v1536
    %v1789 = vpack.c.b16 %v1541, %v1537
    %v1790 = vpack.c.b16 %v1542, %v1538
    %v1791 = vpack.c.b16 %v1543, %v1539
    %v1792 = vpack.c.b16 %v1548, %v1544
    %v1793 = vpack.c.b16 %v1549, %v1545
    %v1794 = vpack.c.b16 %v1550, %v1546
    %v1795 = vpack.c.b16 %v1551, %v1547
    %v1796 = vpack.c.b16 %v1556, %v1552
    %v1797 = vpack.c.b16 %v1557, %v1553
    %v1798 = vpack.c.b16 %v1558, %v1554
    %v1799 = vpack.c.b16 %v1559, %v1555
    %v1800 = vpack.c.b16 %v1564, %v1560
    %v1801 = vpack.c.b16 %v1565, %v1561
    %v1802 = vpack.c.b16 %v1566, %v1562
    %v1803 = vpack.c.b16 %v1567, %v1563
    %v1804 = vpack.c.b16 %v1572, %v1568
    %v1805 = vpack.c.b16 %v1573, %v1569
    %v1806 = vpack.c.b16 %v1574, %v1570
    %v1807 = vpack.c.b16 %v1575, %v1571
    %v1808 = vpack.c.b16 %v1580, %v1576
    %v1809 = vpack.c.b16 %v1581, %v1577
    %v1810 = vpack.c.b16 %v1582, %v1578
    %v1811 = vpack.c.b16 %v1583, %v1579
    %v1812 = vpack.c.b16 %v1588, %v1584
    %v1813 = vpack.c.b16 %v1589, %v1585
    %v1814 = vpack.c.b16 %v1590, %v1586
    %v1815 = vpack.c.b16 %v1591, %v1587
    %v1816 = vpack.c.b16 %v1596, %v1592
    %v1817 = vpack.c.b16 %v1597, %v1593
    %v1818 = vpack.c.b16 %v1598, %v1594
    %v1819 = vpack.c.b16 %v1599, %v1595
    %v1820 = vpack.c.b16 %v1604, %v1600
    %v1821 = vpack.c.b16 %v1605, %v1601
    %v1822 = vpack.c.b16 %v1606, %v1602
    %v1823 = vpack.c.b16 %v1607, %v1603
    %v1824 = vpack.c.b16 %v1612, %v1608
    %v1825 = vpack.c.b16 %v1613, %v1609
    %v1826 = vpack.c.b16 %v1614, %v1610
    %v1827 = vpack.c.b16 %v1615, %v1611
    %v1828 = vpack.c.b16 %v1620, %v1616
    %v1829 = vpack.c.b16 %v1621, %v1617
    %v1830 = vpack.c.b16 %v1622, %v1618
    %v1831 = vpack.c.b16 %v1623, %v1619
    %v1832 = vpack.c.b16 %v1628, %v1624
    %v1833 = vpack.c.b16 %v1629, %v1625
    %v1834 = vpack.c.b16 %v1630, %v1626
    %v1835 = vpack.c.b16 %v1631, %v1627
    %v1836 = vpack.c.b16 %v1636, %v1632
    %v1837 = vpack.c.b16 %v1637, %v1633
    %v1838 = vpack.c.b16 %v1638, %v1634
    %v1839 = vpack.c.b16 %v1639, %v1635
    %v1840 = vpack.c.b16 %v1644, %v1640
    %v1841 = vpack.c.b16 %v1645, %v1641
    %v1842 = vpack.c.b16 %v1646, %v1642
    %v1843 = vpack.c.b16 %v1647, %v1643
    %v1844 = vpack.c.b16 %v1652, %v1648
    %v1845 = vpack.c.b16 %v1653, %v1649
    %v1846 = vpack.c.b16 %v1654, %v1650
    %v1847 = vpack.c.b16 %v1655, %v1651
    %v1848 = vpack.c.b16 %v1660, %v1656
    %v1849 = vpack.c.b16 %v1661, %v1657
    %v1850 = vpack.c.b16 %v1662, %v1658
    %v1851 = vpack.c.b16 %v1663, %v1659
    %v1852 = vpack.c.b16 %v1668, %v1664
    %v1853 = vpack.c.b16 %v1669, %v1665
    %v1854 = vpack.c.b16 %v1670, %v1666
    %v1855 = vpack.c.b16 %v1671, %v1667
    %v1856 = vpack.c.b16 %v1676, %v1672
    %v1857 = vpack.c.b16 %v1677, %v1673
    %v1858 = vpack.c.b16 %v1678, %v1674
    %v1859 = vpack.c.b16 %v1679, %v1675
    %v1860 = vpack.c.b16 %v1684, %v1680
    %v1861 = vpack.c.b16 %v1685, %v1681
    %v1862 = vpack.c.b16 %v1686, %v1682
    %v1863 = vpack.c.b16 %v1687, %v1683
    %v1864 = vpack.c.b16 %v1692, %v1688
    %v1865 = vpack.c.b16 %v1693, %v1689
    %v1866 = vpack.c.b16 %v1694, %v1690
    %v1867 = vpack.c.b16 %v1695, %v1691
    %v1868 = vpack.c.b16 %v1700, %v1696
    %v1869 = vpack.c.b16 %v1701, %v1697
    %v1870 = vpack.c.b16 %v1702, %v1698
    %v1871 = vpack.c.b16 %v1703, %v1699
    %v1872 = vpack.c.b16 %v1708, %v1704
    %v1873 = vpack.c.b16 %v1709, %v1705
    %v1874 = vpack.c.b16 %v1710, %v1706
    %v1875 = vpack.c.b16 %v1711, %v1707
    %v1876 = vpack.c.b16 %v1716, %v1712
    %v1877 = vpack.c.b16 %v1717, %v1713
    %v1878 = vpack.c.b16 %v1718, %v1714
    %v1879 = vpack.c.b16 %v1719, %v1715
    %v1880 = vpack.c.b16 %v1724, %v1720
    %v1881 = vpack.c.b16 %v1725, %v1721
    %v1882 = vpack.c.b16 %v1726, %v1722
    %v1883 = vpack.c.b16 %v1727, %v1723
    %v1884 = vpack.c.b16 %v1732, %v1728
    %v1885 = vpack.c.b16 %v1733, %v1729
    %v1886 = vpack.c.b16 %v1734, %v1730
    %v1887 = vpack.c.b16 %v1735, %v1731
    %v1888 = vpack.c.b16 %v1740, %v1736
    %v1889 = vpack.c.b16 %v1741, %v1737
    %v1890 = vpack.c.b16 %v1742, %v1738
    %v1891 = vpack.c.b16 %v1743, %v1739
    %v1892 = vpack.c.b16 %v1748, %v1744
    %v1893 = vpack.c.b16 %v1749, %v1745
    %v1894 = vpack.c.b16 %v1750, %v1746
    %v1895 = vpack.c.b16 %v1751, %v1747
    %v1896 = vpack.c.b16 %v1756, %v1752
    %v1897 = vpack.c.b16 %v1757, %v1753
    %v1898 = vpack.c.b16 %v1758, %v1754
    %v1899 = vpack.c.b16 %v1759, %v1755
    %v1900 = vpack.c.b16 %v1764, %v1760
    %v1901 = vpack.c.b16 %v1765, %v1761
    %v1902 = vpack.c.b16 %v1766, %v1762
    %v1903 = vpack.c.b16 %v1767, %v1763
    %v1904 = vpack.c.b16 %v1772, %v1768
    %v1905 = vpack.c.b16 %v1773, %v1769
    %v1906 = vpack.c.b16 %v1774, %v1770
    %v1907 = vpack.c.b16 %v1775, %v1771
    %v1908 = vpack.c.b16 %v1780, %v1776
    %v1909 = vpack.c.b16 %v1781, %v1777
    %v1910 = vpack.c.b16 %v1782, %v1778
    %v1911 = vpack.c.b16 %v1783, %v1779
    %2040 = vmatpush.bf16.msra.mxu0 %v1812
    %2041 = vmatpush.bf16.msra.mxu0 %v1808
    %2042 = vmatpush.bf16.msra.mxu0 %v1804
    %2043 = vmatpush.bf16.msra.mxu0 %v1800
    %2044 = vmatpush.bf16.msra.mxu0 %v1796
    %2045 = vmatpush.bf16.msra.mxu0 %v1792
    %2046 = vmatpush.bf16.msra.mxu0 %v1788
    %2047 = vmatpush.bf16.msra.mxu0 %v1784
    %2048 = vmatmul.bf16.gmra.mxu0 %v1267
    %v2049 = vpop.f32.mrf.mxu0
    %v2050 = vadd.f32 0.0, %v2049
    %v2051 = vpop.f32.mrf.mxu0
    %2052 = vdwg.mxu0
    %2053 = vmatpush.bf16.msra.mxu0 %v1844
    %2054 = vmatpush.bf16.msra.mxu0 %v1840
    %2055 = vmatpush.bf16.msra.mxu0 %v1836
    %2056 = vmatpush.bf16.msra.mxu0 %v1832
    %2057 = vmatpush.bf16.msra.mxu0 %v1828
    %2058 = vmatpush.bf16.msra.mxu0 %v1824
    %2059 = vmatpush.bf16.msra.mxu0 %v1820
    %2060 = vmatpush.bf16.msra.mxu0 %v1816
    %2061 = vmatmul.bf16.gmra.mxu0 %v1268
    %v2062 = vpop.f32.mrf.mxu0
    %v2063 = vadd.f32 %v2050, %v2062
    %v2064 = vpop.f32.mrf.mxu0
    %2065 = vdwg.mxu0
    %2066 = vmatpush.bf16.msra.mxu0 %v1876
    %2067 = vmatpush.bf16.msra.mxu0 %v1872
    %2068 = vmatpush.bf16.msra.mxu0 %v1868
    %2069 = vmatpush.bf16.msra.mxu0 %v1864
    %2070 = vmatpush.bf16.msra.mxu0 %v1860
    %2071 = vmatpush.bf16.msra.mxu0 %v1856
    %2072 = vmatpush.bf16.msra.mxu0 %v1852
    %2073 = vmatpush.bf16.msra.mxu0 %v1848
    %2074 = vmatmul.bf16.gmra.mxu0 %v1269
    %v2075 = vpop.f32.mrf.mxu0
    %v2076 = vadd.f32 %v2063, %v2075
    %v2077 = vpop.f32.mrf.mxu0
    %2078 = vdwg.mxu0
    %2079 = vmatpush.bf16.msra.mxu0 %v1908
    %2080 = vmatpush.bf16.msra.mxu0 %v1904
    %2081 = vmatpush.bf16.msra.mxu0 %v1900
    %2082 = vmatpush.bf16.msra.mxu0 %v1896
    %2083 = vmatpush.bf16.msra.mxu0 %v1892
    %2084 = vmatpush.bf16.msra.mxu0 %v1888
    %2085 = vmatpush.bf16.msra.mxu0 %v1884
    %2086 = vmatpush.bf16.msra.mxu0 %v1880
    %2087 = vmatmul.bf16.gmra.mxu0 %v1270
    %v2088 = vpop.f32.mrf.mxu0
    %v2089 = vadd.f32 %v2076, %v2088
    %v2090 = vpop.f32.mrf.mxu0
    %2091 = vdwg.mxu0
    %2092 = vmatpush.bf16.msra.mxu0 %v1813
    %2093 = vmatpush.bf16.msra.mxu0 %v1809
    %2094 = vmatpush.bf16.msra.mxu0 %v1805
    %2095 = vmatpush.bf16.msra.mxu0 %v1801
    %2096 = vmatpush.bf16.msra.mxu0 %v1797
    %2097 = vmatpush.bf16.msra.mxu0 %v1793
    %2098 = vmatpush.bf16.msra.mxu0 %v1789
    %2099 = vmatpush.bf16.msra.mxu0 %v1785
    %2100 = vmatmul.bf16.gmra.mxu0 %v1267
    %v2101 = vpop.f32.mrf.mxu0
    %v2102 = vadd.f32 0.0, %v2101
    %v2103 = vpop.f32.mrf.mxu0
    %2104 = vdwg.mxu0
    %2105 = vmatpush.bf16.msra.mxu0 %v1845
    %2106 = vmatpush.bf16.msra.mxu0 %v1841
    %2107 = vmatpush.bf16.msra.mxu0 %v1837
    %2108 = vmatpush.bf16.msra.mxu0 %v1833
    %2109 = vmatpush.bf16.msra.mxu0 %v1829
    %2110 = vmatpush.bf16.msra.mxu0 %v1825
    %2111 = vmatpush.bf16.msra.mxu0 %v1821
    %2112 = vmatpush.bf16.msra.mxu0 %v1817
    %2113 = vmatmul.bf16.gmra.mxu0 %v1268
    %v2114 = vpop.f32.mrf.mxu0
    %v2115 = vadd.f32 %v2102, %v2114
    %v2116 = vpop.f32.mrf.mxu0
    %2117 = vdwg.mxu0
    %2118 = vmatpush.bf16.msra.mxu0 %v1877
    %2119 = vmatpush.bf16.msra.mxu0 %v1873
    %2120 = vmatpush.bf16.msra.mxu0 %v1869
    %2121 = vmatpush.bf16.msra.mxu0 %v1865
    %2122 = vmatpush.bf16.msra.mxu0 %v1861
    %2123 = vmatpush.bf16.msra.mxu0 %v1857
    %2124 = vmatpush.bf16.msra.mxu0 %v1853
    %2125 = vmatpush.bf16.msra.mxu0 %v1849
    %2126 = vmatmul.bf16.gmra.mxu0 %v1269
    %v2127 = vpop.f32.mrf.mxu0
    %v2128 = vadd.f32 %v2115, %v2127
    %v2129 = vpop.f32.mrf.mxu0
    %2130 = vdwg.mxu0
    %2131 = vmatpush.bf16.msra.mxu0 %v1909
    %2132 = vmatpush.bf16.msra.mxu0 %v1905
    %2133 = vmatpush.bf16.msra.mxu0 %v1901
    %2134 = vmatpush.bf16.msra.mxu0 %v1897
    %2135 = vmatpush.bf16.msra.mxu0 %v1893
    %2136 = vmatpush.bf16.msra.mxu0 %v1889
    %2137 = vmatpush.bf16.msra.mxu0 %v1885
    %2138 = vmatpush.bf16.msra.mxu0 %v1881
    %2139 = vmatmul.bf16.gmra.mxu0 %v1270
    %v2140 = vpop.f32.mrf.mxu0
    %v2141 = vadd.f32 %v2128, %v2140
    %v2142 = vpop.f32.mrf.mxu0
    %2143 = vdwg.mxu0
    %2144 = vmatpush.bf16.msra.mxu0 %v1814
    %2145 = vmatpush.bf16.msra.mxu0 %v1810
    %2146 = vmatpush.bf16.msra.mxu0 %v1806
    %2147 = vmatpush.bf16.msra.mxu0 %v1802
    %2148 = vmatpush.bf16.msra.mxu0 %v1798
    %2149 = vmatpush.bf16.msra.mxu0 %v1794
    %2150 = vmatpush.bf16.msra.mxu0 %v1790
    %2151 = vmatpush.bf16.msra.mxu0 %v1786
    %2152 = vmatmul.bf16.gmra.mxu0 %v1267
    %v2153 = vpop.f32.mrf.mxu0
    %v2154 = vadd.f32 0.0, %v2153
    %v2155 = vpop.f32.mrf.mxu0
    %2156 = vdwg.mxu0
    %2157 = vmatpush.bf16.msra.mxu0 %v1846
    %2158 = vmatpush.bf16.msra.mxu0 %v1842
    %2159 = vmatpush.bf16.msra.mxu0 %v1838
    %2160 = vmatpush.bf16.msra.mxu0 %v1834
    %2161 = vmatpush.bf16.msra.mxu0 %v1830
    %2162 = vmatpush.bf16.msra.mxu0 %v1826
    %2163 = vmatpush.bf16.msra.mxu0 %v1822
    %2164 = vmatpush.bf16.msra.mxu0 %v1818
    %2165 = vmatmul.bf16.gmra.mxu0 %v1268
    %v2166 = vpop.f32.mrf.mxu0
    %v2167 = vadd.f32 %v2154, %v2166
    %v2168 = vpop.f32.mrf.mxu0
    %2169 = vdwg.mxu0
    %2170 = vmatpush.bf16.msra.mxu0 %v1878
    %2171 = vmatpush.bf16.msra.mxu0 %v1874
    %2172 = vmatpush.bf16.msra.mxu0 %v1870
    %2173 = vmatpush.bf16.msra.mxu0 %v1866
    %2174 = vmatpush.bf16.msra.mxu0 %v1862
    %2175 = vmatpush.bf16.msra.mxu0 %v1858
    %2176 = vmatpush.bf16.msra.mxu0 %v1854
    %2177 = vmatpush.bf16.msra.mxu0 %v1850
    %2178 = vmatmul.bf16.gmra.mxu0 %v1269
    %v2179 = vpop.f32.mrf.mxu0
    %v2180 = vadd.f32 %v2167, %v2179
    %v2181 = vpop.f32.mrf.mxu0
    %2182 = vdwg.mxu0
    %2183 = vmatpush.bf16.msra.mxu0 %v1910
    %2184 = vmatpush.bf16.msra.mxu0 %v1906
    %2185 = vmatpush.bf16.msra.mxu0 %v1902
    %2186 = vmatpush.bf16.msra.mxu0 %v1898
    %2187 = vmatpush.bf16.msra.mxu0 %v1894
    %2188 = vmatpush.bf16.msra.mxu0 %v1890
    %2189 = vmatpush.bf16.msra.mxu0 %v1886
    %2190 = vmatpush.bf16.msra.mxu0 %v1882
    %2191 = vmatmul.bf16.gmra.mxu0 %v1270
    %v2192 = vpop.f32.mrf.mxu0
    %v2193 = vadd.f32 %v2180, %v2192
    %v2194 = vpop.f32.mrf.mxu0
    %2195 = vdwg.mxu0
    %2196 = vmatpush.bf16.msra.mxu0 %v1815
    %2197 = vmatpush.bf16.msra.mxu0 %v1811
    %2198 = vmatpush.bf16.msra.mxu0 %v1807
    %2199 = vmatpush.bf16.msra.mxu0 %v1803
    %2200 = vmatpush.bf16.msra.mxu0 %v1799
    %2201 = vmatpush.bf16.msra.mxu0 %v1795
    %2202 = vmatpush.bf16.msra.mxu0 %v1791
    %2203 = vmatpush.bf16.msra.mxu0 %v1787
    %2204 = vmatmul.bf16.gmra.mxu0 %v1267
    %v2205 = vpop.f32.mrf.mxu0
    %v2206 = vadd.f32 0.0, %v2205
    %v2207 = vpop.f32.mrf.mxu0
    %2208 = vdwg.mxu0
    %2209 = vmatpush.bf16.msra.mxu0 %v1847
    %2210 = vmatpush.bf16.msra.mxu0 %v1843
    %2211 = vmatpush.bf16.msra.mxu0 %v1839
    %2212 = vmatpush.bf16.msra.mxu0 %v1835
    %2213 = vmatpush.bf16.msra.mxu0 %v1831
    %2214 = vmatpush.bf16.msra.mxu0 %v1827
    %2215 = vmatpush.bf16.msra.mxu0 %v1823
    %2216 = vmatpush.bf16.msra.mxu0 %v1819
    %2217 = vmatmul.bf16.gmra.mxu0 %v1268
    %v2218 = vpop.f32.mrf.mxu0
    %v2219 = vadd.f32 %v2206, %v2218
    %v2220 = vpop.f32.mrf.mxu0
    %2221 = vdwg.mxu0
    %2222 = vmatpush.bf16.msra.mxu0 %v1879
    %2223 = vmatpush.bf16.msra.mxu0 %v1875
    %2224 = vmatpush.bf16.msra.mxu0 %v1871
    %2225 = vmatpush.bf16.msra.mxu0 %v1867
    %2226 = vmatpush.bf16.msra.mxu0 %v1863
    %2227 = vmatpush.bf16.msra.mxu0 %v1859
    %2228 = vmatpush.bf16.msra.mxu0 %v1855
    %2229 = vmatpush.bf16.msra.mxu0 %v1851
    %2230 = vmatmul.bf16.gmra.mxu0 %v1269
    %v2231 = vpop.f32.mrf.mxu0
    %v2232 = vadd.f32 %v2219, %v2231
    %v2233 = vpop.f32.mrf.mxu0
    %2234 = vdwg.mxu0
    %2235 = vmatpush.bf16.msra.mxu0 %v1911
    %2236 = vmatpush.bf16.msra.mxu0 %v1907
    %2237 = vmatpush.bf16.msra.mxu0 %v1903
    %2238 = vmatpush.bf16.msra.mxu0 %v1899
    %2239 = vmatpush.bf16.msra.mxu0 %v1895
    %2240 = vmatpush.bf16.msra.mxu0 %v1891
    %2241 = vmatpush.bf16.msra.mxu0 %v1887
    %2242 = vmatpush.bf16.msra.mxu0 %v1883
    %2243 = vmatmul.bf16.gmra.mxu0 %v1270
    %v2244 = vpop.f32.mrf.mxu0
    %v2245 = vadd.f32 %v2232, %v2244
    %v2246 = vpop.f32.mrf.mxu0
    %2247 = vdwg.mxu0
    %v2248 = vrot.slane %v2089, 4
    %v2249 = vadd.f32 %v2089, %v2248
    %v2250 = vrot.slane %v2249, 2
    %v2251 = vadd.f32 %v2249, %v2250
    %v2252 = vrot.slane %v2251, 1
    %v2253 = vadd.f32 %v2251, %v2252
    %v2254 = vrot.slane %v2141, 4
    %v2255 = vadd.f32 %v2141, %v2254
    %v2256 = vrot.slane %v2255, 2
    %v2257 = vadd.f32 %v2255, %v2256
    %v2258 = vrot.slane %v2257, 1
    %v2259 = vadd.f32 %v2257, %v2258
    %v2260 = vrot.slane %v2193, 4
    %v2261 = vadd.f32 %v2193, %v2260
    %v2262 = vrot.slane %v2261, 2
    %v2263 = vadd.f32 %v2261, %v2262
    %v2264 = vrot.slane %v2263, 1
    %v2265 = vadd.f32 %v2263, %v2264
    %v2266 = vrot.slane %v2245, 4
    %v2267 = vadd.f32 %v2245, %v2266
    %v2268 = vrot.slane %v2267, 2
    %v2269 = vadd.f32 %v2267, %v2268
    %v2270 = vrot.slane %v2269, 1
    %v2271 = vadd.f32 %v2269, %v2270
    %v2272 = vmul.f32 %v2089, %v2089
    %v2273 = vmul.f32 %v2141, %v2141
    %v2274 = vmul.f32 %v2193, %v2193
    %v2275 = vmul.f32 %v2245, %v2245
    %v2276 = vrot.slane %v2272, 4
    %v2277 = vadd.f32 %v2272, %v2276
    %v2278 = vrot.slane %v2277, 2
    %v2279 = vadd.f32 %v2277, %v2278
    %v2280 = vrot.slane %v2279, 1
    %v2281 = vadd.f32 %v2279, %v2280
    %v2282 = vrot.slane %v2273, 4
    %v2283 = vadd.f32 %v2273, %v2282
    %v2284 = vrot.slane %v2283, 2
    %v2285 = vadd.f32 %v2283, %v2284
    %v2286 = vrot.slane %v2285, 1
    %v2287 = vadd.f32 %v2285, %v2286
    %v2288 = vrot.slane %v2274, 4
    %v2289 = vadd.f32 %v2274, %v2288
    %v2290 = vrot.slane %v2289, 2
    %v2291 = vadd.f32 %v2289, %v2290
    %v2292 = vrot.slane %v2291, 1
    %v2293 = vadd.f32 %v2291, %v2292
    %v2294 = vrot.slane %v2275, 4
    %v2295 = vadd.f32 %v2275, %v2294
    %v2296 = vrot.slane %v2295, 2
    %v2297 = vadd.f32 %v2295, %v2296
    %v2298 = vrot.slane %v2297, 1
    %v2299 = vadd.f32 %v2297, %v2298
    %v2300 = vmul.f32 %v2253, 0.125
    %v2301 = vmul.f32 %v2259, 0.125
    %v2302 = vmul.f32 %v2265, 0.125
    %v2303 = vmul.f32 %v2271, 0.125
    %v2304 = vmul.f32 %v2281, 0.125
    %v2305 = vmul.f32 %v2287, 0.125
    %v2306 = vmul.f32 %v2293, 0.125
    %v2307 = vmul.f32 %v2299, 0.125
    %v2308 = vmul.f32 %v2300, %v2300
    %v2309 = vmul.f32 %v2301, %v2301
    %v2310 = vmul.f32 %v2302, %v2302
    %v2311 = vmul.f32 %v2303, %v2303
    %v2312 = vsub.f32 %v2304, %v2308
    %v2313 = vsub.f32 %v2305, %v2309
    %v2314 = vsub.f32 %v2306, %v2310
    %v2315 = vsub.f32 %v2307, %v2311
    %v2316 = vmax.f32 %v2312, 0.0
    %v2317 = vmax.f32 %v2313, 0.0
    %v2318 = vmax.f32 %v2314, 0.0
    %v2319 = vmax.f32 %v2315, 0.0
    %s2320 = scalar_lea.vmem [#allocation8], 32
    %v2321 = vld [vmem:[%s2320] ss:$8 sm:$0xf]
    %v2322 = vadd.f32 %v2316, 1e-05
    %v2323 = vadd.f32 %v2317, 1e-05
    %v2324 = vadd.f32 %v2318, 1e-05
    %v2325 = vadd.f32 %v2319, 1e-05
    %v2326 = vrsqrt.pop %v2322
    %v2327 = vmul.f32 %v2326, %v2322
    %v2328 = vmul.f32 %v2327, %v2326
    %v2329 = vmul.f32 0.5, %v2328
    %v2330 = vsub.f32 1.5, %v2329
    %v2331 = vmul.f32 %v2326, %v2330
    %vm2332 = vweird.f32 %v2322
    %vm2333 = vweird.f32 %v2326
    %vm2334 = vmor %vm2332, %vm2333
    %v2335 = vsel %vm2334, %v2326, %v2331
    %v2336 = vrsqrt.pop %v2323
    %v2337 = vmul.f32 %v2336, %v2323
    %v2338 = vmul.f32 %v2337, %v2336
    %v2339 = vmul.f32 0.5, %v2338
    %v2340 = vsub.f32 1.5, %v2339
    %v2341 = vmul.f32 %v2336, %v2340
    %vm2342 = vweird.f32 %v2323
    %vm2343 = vweird.f32 %v2336
    %vm2344 = vmor %vm2342, %vm2343
    %v2345 = vsel %vm2344, %v2336, %v2341
    %v2346 = vrsqrt.pop %v2324
    %v2347 = vmul.f32 %v2346, %v2324
    %v2348 = vmul.f32 %v2347, %v2346
    %v2349 = vmul.f32 0.5, %v2348
    %v2350 = vsub.f32 1.5, %v2349
    %v2351 = vmul.f32 %v2346, %v2350
    %vm2352 = vweird.f32 %v2324
    %vm2353 = vweird.f32 %v2346
    %vm2354 = vmor %vm2352, %vm2353
    %v2355 = vsel %vm2354, %v2346, %v2351
    %v2356 = vrsqrt.pop %v2325
    %v2357 = vmul.f32 %v2356, %v2325
    %v2358 = vmul.f32 %v2357, %v2356
    %v2359 = vmul.f32 0.5, %v2358
    %v2360 = vsub.f32 1.5, %v2359
    %v2361 = vmul.f32 %v2356, %v2360
    %vm2362 = vweird.f32 %v2325
    %vm2363 = vweird.f32 %v2356
    %vm2364 = vmor %vm2362, %vm2363
    %v2365 = vsel %vm2364, %v2356, %v2361
    %v2370 = vrot.slane %v2345, 7
    %v2371 = vrot.slane %v2355, 6
    %v2372 = vrot.slane %v2365, 5
    %v2373 = vsel %vm1211, %v2335, %v2370
    %v2374 = vsel %vm1213, %v2371, %v2372
    %v2375 = vsel %vm1215, %v2373, %v2374
    %v2377 = vmul.f32 %v2321, %v2375
    %s2378 = scalar_lea.vmem %s2320, 1 [#allocation8]
    %v2379 = vld [vmem:[%s2378] ss:$8 sm:$0xf]
    %v2381 = vperm.slane %v2377, 0
    %v2382 = vperm.slane %v2377, 1
    %v2383 = vperm.slane %v2377, 2
    %v2384 = vperm.slane %v2377, 3
    %v2389 = vmul.f32 %v2300, %v2381
    %v2390 = vmul.f32 %v2301, %v2382
    %v2391 = vmul.f32 %v2302, %v2383
    %v2392 = vmul.f32 %v2303, %v2384
    %v2397 = vrot.slane %v2390, 7
    %v2398 = vrot.slane %v2391, 6
    %v2399 = vrot.slane %v2392, 5
    %v2400 = vsel %vm1211, %v2389, %v2397
    %v2401 = vsel %vm1213, %v2398, %v2399
    %v2402 = vsel %vm1215, %v2400, %v2401
    %v2404 = vsub.f32 %v2379, %v2402
    %v2405 = vmul.f32 %v2089, %v2381
    %v2406 = vmul.f32 %v2141, %v2382
    %v2407 = vmul.f32 %v2193, %v2383
    %v2408 = vmul.f32 %v2245, %v2384
    %v2410 = vperm.slane %v2404, 0
    %v2411 = vperm.slane %v2404, 1
    %v2412 = vperm.slane %v2404, 2
    %v2413 = vperm.slane %v2404, 3
    %v2418 = vadd.f32 %v2405, %v2410
    %v2419 = vadd.f32 %v2406, %v2411
    %v2420 = vadd.f32 %v2407, %v2412
    %v2421 = vadd.f32 %v2408, %v2413
    %v2422 = vmax.f32 %v2418, 0.0
    %v2423 = vmax.f32 %v2419, 0.0
    %v2424 = vmax.f32 %v2420, 0.0
    %v2425 = vmax.f32 %v2421, 0.0
    %v2426 = vpack.c.bf16 %v2422, %v2422
    %v2427 = vpack.c.bf16 %v2423, %v2423
    %v2428 = vpack.c.bf16 %v2424, %v2424
    %v2429 = vpack.c.bf16 %v2425, %v2425
    %s2430 = scalar_lea.vmem [#allocation5], 2048
    %v2431 = vld [vmem:[%s2430] sm:$0xff]
    %v2432 = vld [vmem:[%s2430 + $0x8] sm:$0xff]
    %v2433 = vld [vmem:[%s2430 + $0x10] sm:$0xff]
    %v2434 = vld [vmem:[%s2430 + $0x18] sm:$0xff]
    %v2435 = vld [vmem:[%s2430 + $0x20] sm:$0xff]
    %v2436 = vld [vmem:[%s2430 + $0x28] sm:$0xff]
    %v2437 = vld [vmem:[%s2430 + $0x30] sm:$0xff]
    %v2438 = vld [vmem:[%s2430 + $0x38] sm:$0xff]
    %v2439 = vld [vmem:[%s2430 + $0x40] sm:$0xff]
    %v2440 = vld [vmem:[%s2430 + $0x48] sm:$0xff]
    %v2441 = vld [vmem:[%s2430 + $0x50] sm:$0xff]
    %v2442 = vld [vmem:[%s2430 + $0x58] sm:$0xff]
    %v2443 = vld [vmem:[%s2430 + $0x60] sm:$0xff]
    %v2444 = vld [vmem:[%s2430 + $0x68] sm:$0xff]
    %v2445 = vld [vmem:[%s2430 + $0x70] sm:$0xff]
    %v2446 = vld [vmem:[%s2430 + $0x78] sm:$0xff]
    %v2447 = vld [vmem:[%s2430 + $0x80] sm:$0xff]
    %v2448 = vld [vmem:[%s2430 + $0x88] sm:$0xff]
    %v2449 = vld [vmem:[%s2430 + $0x90] sm:$0xff]
    %v2450 = vld [vmem:[%s2430 + $0x98] sm:$0xff]
    %v2451 = vld [vmem:[%s2430 + $0xa0] sm:$0xff]
    %v2452 = vld [vmem:[%s2430 + $0xa8] sm:$0xff]
    %v2453 = vld [vmem:[%s2430 + $0xb0] sm:$0xff]
    %v2454 = vld [vmem:[%s2430 + $0xb8] sm:$0xff]
    %v2455 = vld [vmem:[%s2430 + $0xc0] sm:$0xff]
    %v2456 = vld [vmem:[%s2430 + $0xc8] sm:$0xff]
    %v2457 = vld [vmem:[%s2430 + $0xd0] sm:$0xff]
    %v2458 = vld [vmem:[%s2430 + $0xd8] sm:$0xff]
    %v2459 = vld [vmem:[%s2430 + $0xe0] sm:$0xff]
    %v2460 = vld [vmem:[%s2430 + $0xe8] sm:$0xff]
    %v2461 = vld [vmem:[%s2430 + $0xf0] sm:$0xff]
    %v2462 = vld [vmem:[%s2430 + $0xf8] sm:$0xff]
    %v2463 = vld [vmem:[%s2430 + $0x100] sm:$0xff]
    %v2464 = vld [vmem:[%s2430 + $0x108] sm:$0xff]
    %v2465 = vld [vmem:[%s2430 + $0x110] sm:$0xff]
    %v2466 = vld [vmem:[%s2430 + $0x118] sm:$0xff]
    %v2467 = vld [vmem:[%s2430 + $0x120] sm:$0xff]
    %v2468 = vld [vmem:[%s2430 + $0x128] sm:$0xff]
    %v2469 = vld [vmem:[%s2430 + $0x130] sm:$0xff]
    %v2470 = vld [vmem:[%s2430 + $0x138] sm:$0xff]
    %v2471 = vld [vmem:[%s2430 + $0x140] sm:$0xff]
    %v2472 = vld [vmem:[%s2430 + $0x148] sm:$0xff]
    %v2473 = vld [vmem:[%s2430 + $0x150] sm:$0xff]
    %v2474 = vld [vmem:[%s2430 + $0x158] sm:$0xff]
    %v2475 = vld [vmem:[%s2430 + $0x160] sm:$0xff]
    %v2476 = vld [vmem:[%s2430 + $0x168] sm:$0xff]
    %v2477 = vld [vmem:[%s2430 + $0x170] sm:$0xff]
    %v2478 = vld [vmem:[%s2430 + $0x178] sm:$0xff]
    %v2479 = vld [vmem:[%s2430 + $0x180] sm:$0xff]
    %v2480 = vld [vmem:[%s2430 + $0x188] sm:$0xff]
    %v2481 = vld [vmem:[%s2430 + $0x190] sm:$0xff]
    %v2482 = vld [vmem:[%s2430 + $0x198] sm:$0xff]
    %v2483 = vld [vmem:[%s2430 + $0x1a0] sm:$0xff]
    %v2484 = vld [vmem:[%s2430 + $0x1a8] sm:$0xff]
    %v2485 = vld [vmem:[%s2430 + $0x1b0] sm:$0xff]
    %v2486 = vld [vmem:[%s2430 + $0x1b8] sm:$0xff]
    %v2487 = vld [vmem:[%s2430 + $0x1c0] sm:$0xff]
    %v2488 = vld [vmem:[%s2430 + $0x1c8] sm:$0xff]
    %v2489 = vld [vmem:[%s2430 + $0x1d0] sm:$0xff]
    %v2490 = vld [vmem:[%s2430 + $0x1d8] sm:$0xff]
    %v2491 = vld [vmem:[%s2430 + $0x1e0] sm:$0xff]
    %v2492 = vld [vmem:[%s2430 + $0x1e8] sm:$0xff]
    %v2493 = vld [vmem:[%s2430 + $0x1f0] sm:$0xff]
    %v2494 = vld [vmem:[%s2430 + $0x1f8] sm:$0xff]
    %v2495 = vld [vmem:[%s2430 + $0x200] sm:$0xff]
    %v2496 = vld [vmem:[%s2430 + $0x208] sm:$0xff]
    %v2497 = vld [vmem:[%s2430 + $0x210] sm:$0xff]
    %v2498 = vld [vmem:[%s2430 + $0x218] sm:$0xff]
    %v2499 = vld [vmem:[%s2430 + $0x220] sm:$0xff]
    %v2500 = vld [vmem:[%s2430 + $0x228] sm:$0xff]
    %v2501 = vld [vmem:[%s2430 + $0x230] sm:$0xff]
    %v2502 = vld [vmem:[%s2430 + $0x238] sm:$0xff]
    %v2503 = vld [vmem:[%s2430 + $0x240] sm:$0xff]
    %v2504 = vld [vmem:[%s2430 + $0x248] sm:$0xff]
    %v2505 = vld [vmem:[%s2430 + $0x250] sm:$0xff]
    %v2506 = vld [vmem:[%s2430 + $0x258] sm:$0xff]
    %v2507 = vld [vmem:[%s2430 + $0x260] sm:$0xff]
    %v2508 = vld [vmem:[%s2430 + $0x268] sm:$0xff]
    %v2509 = vld [vmem:[%s2430 + $0x270] sm:$0xff]
    %v2510 = vld [vmem:[%s2430 + $0x278] sm:$0xff]
    %v2511 = vld [vmem:[%s2430 + $0x280] sm:$0xff]
    %v2512 = vld [vmem:[%s2430 + $0x288] sm:$0xff]
    %v2513 = vld [vmem:[%s2430 + $0x290] sm:$0xff]
    %v2514 = vld [vmem:[%s2430 + $0x298] sm:$0xff]
    %v2515 = vld [vmem:[%s2430 + $0x2a0] sm:$0xff]
    %v2516 = vld [vmem:[%s2430 + $0x2a8] sm:$0xff]
    %v2517 = vld [vmem:[%s2430 + $0x2b0] sm:$0xff]
    %v2518 = vld [vmem:[%s2430 + $0x2b8] sm:$0xff]
    %v2519 = vld [vmem:[%s2430 + $0x2c0] sm:$0xff]
    %v2520 = vld [vmem:[%s2430 + $0x2c8] sm:$0xff]
    %v2521 = vld [vmem:[%s2430 + $0x2d0] sm:$0xff]
    %v2522 = vld [vmem:[%s2430 + $0x2d8] sm:$0xff]
    %v2523 = vld [vmem:[%s2430 + $0x2e0] sm:$0xff]
    %v2524 = vld [vmem:[%s2430 + $0x2e8] sm:$0xff]
    %v2525 = vld [vmem:[%s2430 + $0x2f0] sm:$0xff]
    %v2526 = vld [vmem:[%s2430 + $0x2f8] sm:$0xff]
    %v2527 = vld [vmem:[%s2430 + $0x300] sm:$0xff]
    %v2528 = vld [vmem:[%s2430 + $0x308] sm:$0xff]
    %v2529 = vld [vmem:[%s2430 + $0x310] sm:$0xff]
    %v2530 = vld [vmem:[%s2430 + $0x318] sm:$0xff]
    %v2531 = vld [vmem:[%s2430 + $0x320] sm:$0xff]
    %v2532 = vld [vmem:[%s2430 + $0x328] sm:$0xff]
    %v2533 = vld [vmem:[%s2430 + $0x330] sm:$0xff]
    %v2534 = vld [vmem:[%s2430 + $0x338] sm:$0xff]
    %v2535 = vld [vmem:[%s2430 + $0x340] sm:$0xff]
    %v2536 = vld [vmem:[%s2430 + $0x348] sm:$0xff]
    %v2537 = vld [vmem:[%s2430 + $0x350] sm:$0xff]
    %v2538 = vld [vmem:[%s2430 + $0x358] sm:$0xff]
    %v2539 = vld [vmem:[%s2430 + $0x360] sm:$0xff]
    %v2540 = vld [vmem:[%s2430 + $0x368] sm:$0xff]
    %v2541 = vld [vmem:[%s2430 + $0x370] sm:$0xff]
    %v2542 = vld [vmem:[%s2430 + $0x378] sm:$0xff]
    %v2543 = vld [vmem:[%s2430 + $0x380] sm:$0xff]
    %v2544 = vld [vmem:[%s2430 + $0x388] sm:$0xff]
    %v2545 = vld [vmem:[%s2430 + $0x390] sm:$0xff]
    %v2546 = vld [vmem:[%s2430 + $0x398] sm:$0xff]
    %v2547 = vld [vmem:[%s2430 + $0x3a0] sm:$0xff]
    %v2548 = vld [vmem:[%s2430 + $0x3a8] sm:$0xff]
    %v2549 = vld [vmem:[%s2430 + $0x3b0] sm:$0xff]
    %v2550 = vld [vmem:[%s2430 + $0x3b8] sm:$0xff]
    %v2551 = vld [vmem:[%s2430 + $0x3c0] sm:$0xff]
    %v2552 = vld [vmem:[%s2430 + $0x3c8] sm:$0xff]
    %v2553 = vld [vmem:[%s2430 + $0x3d0] sm:$0xff]
    %v2554 = vld [vmem:[%s2430 + $0x3d8] sm:$0xff]
    %v2555 = vld [vmem:[%s2430 + $0x3e0] sm:$0xff]
    %v2556 = vld [vmem:[%s2430 + $0x3e8] sm:$0xff]
    %v2557 = vld [vmem:[%s2430 + $0x3f0] sm:$0xff]
    %v2558 = vld [vmem:[%s2430 + $0x3f8] sm:$0xff]
    %v2687 = vunpack.c.l.b16 %v2431
    %v2688 = vunpack.c.h.b16 %v2431
    %v2689 = vunpack.c.l.b16 %v2432
    %v2690 = vunpack.c.h.b16 %v2432
    %v2691 = vunpack.c.l.b16 %v2433
    %v2692 = vunpack.c.h.b16 %v2433
    %v2693 = vunpack.c.l.b16 %v2434
    %v2694 = vunpack.c.h.b16 %v2434
    %v2695 = vunpack.c.l.b16 %v2435
    %v2696 = vunpack.c.h.b16 %v2435
    %v2697 = vunpack.c.l.b16 %v2436
    %v2698 = vunpack.c.h.b16 %v2436
    %v2699 = vunpack.c.l.b16 %v2437
    %v2700 = vunpack.c.h.b16 %v2437
    %v2701 = vunpack.c.l.b16 %v2438
    %v2702 = vunpack.c.h.b16 %v2438
    %v2703 = vunpack.c.l.b16 %v2439
    %v2704 = vunpack.c.h.b16 %v2439
    %v2705 = vunpack.c.l.b16 %v2440
    %v2706 = vunpack.c.h.b16 %v2440
    %v2707 = vunpack.c.l.b16 %v2441
    %v2708 = vunpack.c.h.b16 %v2441
    %v2709 = vunpack.c.l.b16 %v2442
    %v2710 = vunpack.c.h.b16 %v2442
    %v2711 = vunpack.c.l.b16 %v2443
    %v2712 = vunpack.c.h.b16 %v2443
    %v2713 = vunpack.c.l.b16 %v2444
    %v2714 = vunpack.c.h.b16 %v2444
    %v2715 = vunpack.c.l.b16 %v2445
    %v2716 = vunpack.c.h.b16 %v2445
    %v2717 = vunpack.c.l.b16 %v2446
    %v2718 = vunpack.c.h.b16 %v2446
    %v2719 = vunpack.c.l.b16 %v2447
    %v2720 = vunpack.c.h.b16 %v2447
    %v2721 = vunpack.c.l.b16 %v2448
    %v2722 = vunpack.c.h.b16 %v2448
    %v2723 = vunpack.c.l.b16 %v2449
    %v2724 = vunpack.c.h.b16 %v2449
    %v2725 = vunpack.c.l.b16 %v2450
    %v2726 = vunpack.c.h.b16 %v2450
    %v2727 = vunpack.c.l.b16 %v2451
    %v2728 = vunpack.c.h.b16 %v2451
    %v2729 = vunpack.c.l.b16 %v2452
    %v2730 = vunpack.c.h.b16 %v2452
    %v2731 = vunpack.c.l.b16 %v2453
    %v2732 = vunpack.c.h.b16 %v2453
    %v2733 = vunpack.c.l.b16 %v2454
    %v2734 = vunpack.c.h.b16 %v2454
    %v2735 = vunpack.c.l.b16 %v2455
    %v2736 = vunpack.c.h.b16 %v2455
    %v2737 = vunpack.c.l.b16 %v2456
    %v2738 = vunpack.c.h.b16 %v2456
    %v2739 = vunpack.c.l.b16 %v2457
    %v2740 = vunpack.c.h.b16 %v2457
    %v2741 = vunpack.c.l.b16 %v2458
    %v2742 = vunpack.c.h.b16 %v2458
    %v2743 = vunpack.c.l.b16 %v2459
    %v2744 = vunpack.c.h.b16 %v2459
    %v2745 = vunpack.c.l.b16 %v2460
    %v2746 = vunpack.c.h.b16 %v2460
    %v2747 = vunpack.c.l.b16 %v2461
    %v2748 = vunpack.c.h.b16 %v2461
    %v2749 = vunpack.c.l.b16 %v2462
    %v2750 = vunpack.c.h.b16 %v2462
    %v2751 = vunpack.c.l.b16 %v2463
    %v2752 = vunpack.c.h.b16 %v2463
    %v2753 = vunpack.c.l.b16 %v2464
    %v2754 = vunpack.c.h.b16 %v2464
    %v2755 = vunpack.c.l.b16 %v2465
    %v2756 = vunpack.c.h.b16 %v2465
    %v2757 = vunpack.c.l.b16 %v2466
    %v2758 = vunpack.c.h.b16 %v2466
    %v2759 = vunpack.c.l.b16 %v2467
    %v2760 = vunpack.c.h.b16 %v2467
    %v2761 = vunpack.c.l.b16 %v2468
    %v2762 = vunpack.c.h.b16 %v2468
    %v2763 = vunpack.c.l.b16 %v2469
    %v2764 = vunpack.c.h.b16 %v2469
    %v2765 = vunpack.c.l.b16 %v2470
    %v2766 = vunpack.c.h.b16 %v2470
    %v2767 = vunpack.c.l.b16 %v2471
    %v2768 = vunpack.c.h.b16 %v2471
    %v2769 = vunpack.c.l.b16 %v2472
    %v2770 = vunpack.c.h.b16 %v2472
    %v2771 = vunpack.c.l.b16 %v2473
    %v2772 = vunpack.c.h.b16 %v2473
    %v2773 = vunpack.c.l.b16 %v2474
    %v2774 = vunpack.c.h.b16 %v2474
    %v2775 = vunpack.c.l.b16 %v2475
    %v2776 = vunpack.c.h.b16 %v2475
    %v2777 = vunpack.c.l.b16 %v2476
    %v2778 = vunpack.c.h.b16 %v2476
    %v2779 = vunpack.c.l.b16 %v2477
    %v2780 = vunpack.c.h.b16 %v2477
    %v2781 = vunpack.c.l.b16 %v2478
    %v2782 = vunpack.c.h.b16 %v2478
    %v2783 = vunpack.c.l.b16 %v2479
    %v2784 = vunpack.c.h.b16 %v2479
    %v2785 = vunpack.c.l.b16 %v2480
    %v2786 = vunpack.c.h.b16 %v2480
    %v2787 = vunpack.c.l.b16 %v2481
    %v2788 = vunpack.c.h.b16 %v2481
    %v2789 = vunpack.c.l.b16 %v2482
    %v2790 = vunpack.c.h.b16 %v2482
    %v2791 = vunpack.c.l.b16 %v2483
    %v2792 = vunpack.c.h.b16 %v2483
    %v2793 = vunpack.c.l.b16 %v2484
    %v2794 = vunpack.c.h.b16 %v2484
    %v2795 = vunpack.c.l.b16 %v2485
    %v2796 = vunpack.c.h.b16 %v2485
    %v2797 = vunpack.c.l.b16 %v2486
    %v2798 = vunpack.c.h.b16 %v2486
    %v2799 = vunpack.c.l.b16 %v2487
    %v2800 = vunpack.c.h.b16 %v2487
    %v2801 = vunpack.c.l.b16 %v2488
    %v2802 = vunpack.c.h.b16 %v2488
    %v2803 = vunpack.c.l.b16 %v2489
    %v2804 = vunpack.c.h.b16 %v2489
    %v2805 = vunpack.c.l.b16 %v2490
    %v2806 = vunpack.c.h.b16 %v2490
    %v2807 = vunpack.c.l.b16 %v2491
    %v2808 = vunpack.c.h.b16 %v2491
    %v2809 = vunpack.c.l.b16 %v2492
    %v2810 = vunpack.c.h.b16 %v2492
    %v2811 = vunpack.c.l.b16 %v2493
    %v2812 = vunpack.c.h.b16 %v2493
    %v2813 = vunpack.c.l.b16 %v2494
    %v2814 = vunpack.c.h.b16 %v2494
    %v2815 = vunpack.c.l.b16 %v2495
    %v2816 = vunpack.c.h.b16 %v2495
    %v2817 = vunpack.c.l.b16 %v2496
    %v2818 = vunpack.c.h.b16 %v2496
    %v2819 = vunpack.c.l.b16 %v2497
    %v2820 = vunpack.c.h.b16 %v2497
    %v2821 = vunpack.c.l.b16 %v2498
    %v2822 = vunpack.c.h.b16 %v2498
    %v2823 = vunpack.c.l.b16 %v2499
    %v2824 = vunpack.c.h.b16 %v2499
    %v2825 = vunpack.c.l.b16 %v2500
    %v2826 = vunpack.c.h.b16 %v2500
    %v2827 = vunpack.c.l.b16 %v2501
    %v2828 = vunpack.c.h.b16 %v2501
    %v2829 = vunpack.c.l.b16 %v2502
    %v2830 = vunpack.c.h.b16 %v2502
    %v2831 = vunpack.c.l.b16 %v2503
    %v2832 = vunpack.c.h.b16 %v2503
    %v2833 = vunpack.c.l.b16 %v2504
    %v2834 = vunpack.c.h.b16 %v2504
    %v2835 = vunpack.c.l.b16 %v2505
    %v2836 = vunpack.c.h.b16 %v2505
    %v2837 = vunpack.c.l.b16 %v2506
    %v2838 = vunpack.c.h.b16 %v2506
    %v2839 = vunpack.c.l.b16 %v2507
    %v2840 = vunpack.c.h.b16 %v2507
    %v2841 = vunpack.c.l.b16 %v2508
    %v2842 = vunpack.c.h.b16 %v2508
    %v2843 = vunpack.c.l.b16 %v2509
    %v2844 = vunpack.c.h.b16 %v2509
    %v2845 = vunpack.c.l.b16 %v2510
    %v2846 = vunpack.c.h.b16 %v2510
    %v2847 = vunpack.c.l.b16 %v2511
    %v2848 = vunpack.c.h.b16 %v2511
    %v2849 = vunpack.c.l.b16 %v2512
    %v2850 = vunpack.c.h.b16 %v2512
    %v2851 = vunpack.c.l.b16 %v2513
    %v2852 = vunpack.c.h.b16 %v2513
    %v2853 = vunpack.c.l.b16 %v2514
    %v2854 = vunpack.c.h.b16 %v2514
    %v2855 = vunpack.c.l.b16 %v2515
    %v2856 = vunpack.c.h.b16 %v2515
    %v2857 = vunpack.c.l.b16 %v2516
    %v2858 = vunpack.c.h.b16 %v2516
    %v2859 = vunpack.c.l.b16 %v2517
    %v2860 = vunpack.c.h.b16 %v2517
    %v2861 = vunpack.c.l.b16 %v2518
    %v2862 = vunpack.c.h.b16 %v2518
    %v2863 = vunpack.c.l.b16 %v2519
    %v2864 = vunpack.c.h.b16 %v2519
    %v2865 = vunpack.c.l.b16 %v2520
    %v2866 = vunpack.c.h.b16 %v2520
    %v2867 = vunpack.c.l.b16 %v2521
    %v2868 = vunpack.c.h.b16 %v2521
    %v2869 = vunpack.c.l.b16 %v2522
    %v2870 = vunpack.c.h.b16 %v2522
    %v2871 = vunpack.c.l.b16 %v2523
    %v2872 = vunpack.c.h.b16 %v2523
    %v2873 = vunpack.c.l.b16 %v2524
    %v2874 = vunpack.c.h.b16 %v2524
    %v2875 = vunpack.c.l.b16 %v2525
    %v2876 = vunpack.c.h.b16 %v2525
    %v2877 = vunpack.c.l.b16 %v2526
    %v2878 = vunpack.c.h.b16 %v2526
    %v2879 = vunpack.c.l.b16 %v2527
    %v2880 = vunpack.c.h.b16 %v2527
    %v2881 = vunpack.c.l.b16 %v2528
    %v2882 = vunpack.c.h.b16 %v2528
    %v2883 = vunpack.c.l.b16 %v2529
    %v2884 = vunpack.c.h.b16 %v2529
    %v2885 = vunpack.c.l.b16 %v2530
    %v2886 = vunpack.c.h.b16 %v2530
    %v2887 = vunpack.c.l.b16 %v2531
    %v2888 = vunpack.c.h.b16 %v2531
    %v2889 = vunpack.c.l.b16 %v2532
    %v2890 = vunpack.c.h.b16 %v2532
    %v2891 = vunpack.c.l.b16 %v2533
    %v2892 = vunpack.c.h.b16 %v2533
    %v2893 = vunpack.c.l.b16 %v2534
    %v2894 = vunpack.c.h.b16 %v2534
    %v2895 = vunpack.c.l.b16 %v2535
    %v2896 = vunpack.c.h.b16 %v2535
    %v2897 = vunpack.c.l.b16 %v2536
    %v2898 = vunpack.c.h.b16 %v2536
    %v2899 = vunpack.c.l.b16 %v2537
    %v2900 = vunpack.c.h.b16 %v2537
    %v2901 = vunpack.c.l.b16 %v2538
    %v2902 = vunpack.c.h.b16 %v2538
    %v2903 = vunpack.c.l.b16 %v2539
    %v2904 = vunpack.c.h.b16 %v2539
    %v2905 = vunpack.c.l.b16 %v2540
    %v2906 = vunpack.c.h.b16 %v2540
    %v2907 = vunpack.c.l.b16 %v2541
    %v2908 = vunpack.c.h.b16 %v2541
    %v2909 = vunpack.c.l.b16 %v2542
    %v2910 = vunpack.c.h.b16 %v2542
    %v2911 = vunpack.c.l.b16 %v2543
    %v2912 = vunpack.c.h.b16 %v2543
    %v2913 = vunpack.c.l.b16 %v2544
    %v2914 = vunpack.c.h.b16 %v2544
    %v2915 = vunpack.c.l.b16 %v2545
    %v2916 = vunpack.c.h.b16 %v2545
    %v2917 = vunpack.c.l.b16 %v2546
    %v2918 = vunpack.c.h.b16 %v2546
    %v2919 = vunpack.c.l.b16 %v2547
    %v2920 = vunpack.c.h.b16 %v2547
    %v2921 = vunpack.c.l.b16 %v2548
    %v2922 = vunpack.c.h.b16 %v2548
    %v2923 = vunpack.c.l.b16 %v2549
    %v2924 = vunpack.c.h.b16 %v2549
    %v2925 = vunpack.c.l.b16 %v2550
    %v2926 = vunpack.c.h.b16 %v2550
    %v2927 = vunpack.c.l.b16 %v2551
    %v2928 = vunpack.c.h.b16 %v2551
    %v2929 = vunpack.c.l.b16 %v2552
    %v2930 = vunpack.c.h.b16 %v2552
    %v2931 = vunpack.c.l.b16 %v2553
    %v2932 = vunpack.c.h.b16 %v2553
    %v2933 = vunpack.c.l.b16 %v2554
    %v2934 = vunpack.c.h.b16 %v2554
    %v2935 = vunpack.c.l.b16 %v2555
    %v2936 = vunpack.c.h.b16 %v2555
    %v2937 = vunpack.c.l.b16 %v2556
    %v2938 = vunpack.c.h.b16 %v2556
    %v2939 = vunpack.c.l.b16 %v2557
    %v2940 = vunpack.c.h.b16 %v2557
    %v2941 = vunpack.c.l.b16 %v2558
    %v2942 = vunpack.c.h.b16 %v2558
    %v2943 = vpack.c.b16 %v2691, %v2687
    %v2944 = vpack.c.b16 %v2692, %v2688
    %v2945 = vpack.c.b16 %v2693, %v2689
    %v2946 = vpack.c.b16 %v2694, %v2690
    %v2947 = vpack.c.b16 %v2699, %v2695
    %v2948 = vpack.c.b16 %v2700, %v2696
    %v2949 = vpack.c.b16 %v2701, %v2697
    %v2950 = vpack.c.b16 %v2702, %v2698
    %v2951 = vpack.c.b16 %v2707, %v2703
    %v2952 = vpack.c.b16 %v2708, %v2704
    %v2953 = vpack.c.b16 %v2709, %v2705
    %v2954 = vpack.c.b16 %v2710, %v2706
    %v2955 = vpack.c.b16 %v2715, %v2711
    %v2956 = vpack.c.b16 %v2716, %v2712
    %v2957 = vpack.c.b16 %v2717, %v2713
    %v2958 = vpack.c.b16 %v2718, %v2714
    %v2959 = vpack.c.b16 %v2723, %v2719
    %v2960 = vpack.c.b16 %v2724, %v2720
    %v2961 = vpack.c.b16 %v2725, %v2721
    %v2962 = vpack.c.b16 %v2726, %v2722
    %v2963 = vpack.c.b16 %v2731, %v2727
    %v2964 = vpack.c.b16 %v2732, %v2728
    %v2965 = vpack.c.b16 %v2733, %v2729
    %v2966 = vpack.c.b16 %v2734, %v2730
    %v2967 = vpack.c.b16 %v2739, %v2735
    %v2968 = vpack.c.b16 %v2740, %v2736
    %v2969 = vpack.c.b16 %v2741, %v2737
    %v2970 = vpack.c.b16 %v2742, %v2738
    %v2971 = vpack.c.b16 %v2747, %v2743
    %v2972 = vpack.c.b16 %v2748, %v2744
    %v2973 = vpack.c.b16 %v2749, %v2745
    %v2974 = vpack.c.b16 %v2750, %v2746
    %v2975 = vpack.c.b16 %v2755, %v2751
    %v2976 = vpack.c.b16 %v2756, %v2752
    %v2977 = vpack.c.b16 %v2757, %v2753
    %v2978 = vpack.c.b16 %v2758, %v2754
    %v2979 = vpack.c.b16 %v2763, %v2759
    %v2980 = vpack.c.b16 %v2764, %v2760
    %v2981 = vpack.c.b16 %v2765, %v2761
    %v2982 = vpack.c.b16 %v2766, %v2762
    %v2983 = vpack.c.b16 %v2771, %v2767
    %v2984 = vpack.c.b16 %v2772, %v2768
    %v2985 = vpack.c.b16 %v2773, %v2769
    %v2986 = vpack.c.b16 %v2774, %v2770
    %v2987 = vpack.c.b16 %v2779, %v2775
    %v2988 = vpack.c.b16 %v2780, %v2776
    %v2989 = vpack.c.b16 %v2781, %v2777
    %v2990 = vpack.c.b16 %v2782, %v2778
    %v2991 = vpack.c.b16 %v2787, %v2783
    %v2992 = vpack.c.b16 %v2788, %v2784
    %v2993 = vpack.c.b16 %v2789, %v2785
    %v2994 = vpack.c.b16 %v2790, %v2786
    %v2995 = vpack.c.b16 %v2795, %v2791
    %v2996 = vpack.c.b16 %v2796, %v2792
    %v2997 = vpack.c.b16 %v2797, %v2793
    %v2998 = vpack.c.b16 %v2798, %v2794
    %v2999 = vpack.c.b16 %v2803, %v2799
    %v3000 = vpack.c.b16 %v2804, %v2800
    %v3001 = vpack.c.b16 %v2805, %v2801
    %v3002 = vpack.c.b16 %v2806, %v2802
    %v3003 = vpack.c.b16 %v2811, %v2807
    %v3004 = vpack.c.b16 %v2812, %v2808
    %v3005 = vpack.c.b16 %v2813, %v2809
    %v3006 = vpack.c.b16 %v2814, %v2810
    %v3007 = vpack.c.b16 %v2819, %v2815
    %v3008 = vpack.c.b16 %v2820, %v2816
    %v3009 = vpack.c.b16 %v2821, %v2817
    %v3010 = vpack.c.b16 %v2822, %v2818
    %v3011 = vpack.c.b16 %v2827, %v2823
    %v3012 = vpack.c.b16 %v2828, %v2824
    %v3013 = vpack.c.b16 %v2829, %v2825
    %v3014 = vpack.c.b16 %v2830, %v2826
    %v3015 = vpack.c.b16 %v2835, %v2831
    %v3016 = vpack.c.b16 %v2836, %v2832
    %v3017 = vpack.c.b16 %v2837, %v2833
    %v3018 = vpack.c.b16 %v2838, %v2834
    %v3019 = vpack.c.b16 %v2843, %v2839
    %v3020 = vpack.c.b16 %v2844, %v2840
    %v3021 = vpack.c.b16 %v2845, %v2841
    %v3022 = vpack.c.b16 %v2846, %v2842
    %v3023 = vpack.c.b16 %v2851, %v2847
    %v3024 = vpack.c.b16 %v2852, %v2848
    %v3025 = vpack.c.b16 %v2853, %v2849
    %v3026 = vpack.c.b16 %v2854, %v2850
    %v3027 = vpack.c.b16 %v2859, %v2855
    %v3028 = vpack.c.b16 %v2860, %v2856
    %v3029 = vpack.c.b16 %v2861, %v2857
    %v3030 = vpack.c.b16 %v2862, %v2858
    %v3031 = vpack.c.b16 %v2867, %v2863
    %v3032 = vpack.c.b16 %v2868, %v2864
    %v3033 = vpack.c.b16 %v2869, %v2865
    %v3034 = vpack.c.b16 %v2870, %v2866
    %v3035 = vpack.c.b16 %v2875, %v2871
    %v3036 = vpack.c.b16 %v2876, %v2872
    %v3037 = vpack.c.b16 %v2877, %v2873
    %v3038 = vpack.c.b16 %v2878, %v2874
    %v3039 = vpack.c.b16 %v2883, %v2879
    %v3040 = vpack.c.b16 %v2884, %v2880
    %v3041 = vpack.c.b16 %v2885, %v2881
    %v3042 = vpack.c.b16 %v2886, %v2882
    %v3043 = vpack.c.b16 %v2891, %v2887
    %v3044 = vpack.c.b16 %v2892, %v2888
    %v3045 = vpack.c.b16 %v2893, %v2889
    %v3046 = vpack.c.b16 %v2894, %v2890
    %v3047 = vpack.c.b16 %v2899, %v2895
    %v3048 = vpack.c.b16 %v2900, %v2896
    %v3049 = vpack.c.b16 %v2901, %v2897
    %v3050 = vpack.c.b16 %v2902, %v2898
    %v3051 = vpack.c.b16 %v2907, %v2903
    %v3052 = vpack.c.b16 %v2908, %v2904
    %v3053 = vpack.c.b16 %v2909, %v2905
    %v3054 = vpack.c.b16 %v2910, %v2906
    %v3055 = vpack.c.b16 %v2915, %v2911
    %v3056 = vpack.c.b16 %v2916, %v2912
    %v3057 = vpack.c.b16 %v2917, %v2913
    %v3058 = vpack.c.b16 %v2918, %v2914
    %v3059 = vpack.c.b16 %v2923, %v2919
    %v3060 = vpack.c.b16 %v2924, %v2920
    %v3061 = vpack.c.b16 %v2925, %v2921
    %v3062 = vpack.c.b16 %v2926, %v2922
    %v3063 = vpack.c.b16 %v2931, %v2927
    %v3064 = vpack.c.b16 %v2932, %v2928
    %v3065 = vpack.c.b16 %v2933, %v2929
    %v3066 = vpack.c.b16 %v2934, %v2930
    %v3067 = vpack.c.b16 %v2939, %v2935
    %v3068 = vpack.c.b16 %v2940, %v2936
    %v3069 = vpack.c.b16 %v2941, %v2937
    %v3070 = vpack.c.b16 %v2942, %v2938
    %3199 = vmatpush.bf16.msra.mxu0 %v2971
    %3200 = vmatpush.bf16.msra.mxu0 %v2967
    %3201 = vmatpush.bf16.msra.mxu0 %v2963
    %3202 = vmatpush.bf16.msra.mxu0 %v2959
    %3203 = vmatpush.bf16.msra.mxu0 %v2955
    %3204 = vmatpush.bf16.msra.mxu0 %v2951
    %3205 = vmatpush.bf16.msra.mxu0 %v2947
    %3206 = vmatpush.bf16.msra.mxu0 %v2943
    %3207 = vmatmul.bf16.gmra.mxu0 %v2426
    %v3208 = vpop.f32.mrf.mxu0
    %v3209 = vadd.f32 0.0, %v3208
    %v3210 = vpop.f32.mrf.mxu0
    %3211 = vdwg.mxu0
    %3212 = vmatpush.bf16.msra.mxu0 %v3003
    %3213 = vmatpush.bf16.msra.mxu0 %v2999
    %3214 = vmatpush.bf16.msra.mxu0 %v2995
    %3215 = vmatpush.bf16.msra.mxu0 %v2991
    %3216 = vmatpush.bf16.msra.mxu0 %v2987
    %3217 = vmatpush.bf16.msra.mxu0 %v2983
    %3218 = vmatpush.bf16.msra.mxu0 %v2979
    %3219 = vmatpush.bf16.msra.mxu0 %v2975
    %3220 = vmatmul.bf16.gmra.mxu0 %v2427
    %v3221 = vpop.f32.mrf.mxu0
    %v3222 = vadd.f32 %v3209, %v3221
    %v3223 = vpop.f32.mrf.mxu0
    %3224 = vdwg.mxu0
    %3225 = vmatpush.bf16.msra.mxu0 %v3035
    %3226 = vmatpush.bf16.msra.mxu0 %v3031
    %3227 = vmatpush.bf16.msra.mxu0 %v3027
    %3228 = vmatpush.bf16.msra.mxu0 %v3023
    %3229 = vmatpush.bf16.msra.mxu0 %v3019
    %3230 = vmatpush.bf16.msra.mxu0 %v3015
    %3231 = vmatpush.bf16.msra.mxu0 %v3011
    %3232 = vmatpush.bf16.msra.mxu0 %v3007
    %3233 = vmatmul.bf16.gmra.mxu0 %v2428
    %v3234 = vpop.f32.mrf.mxu0
    %v3235 = vadd.f32 %v3222, %v3234
    %v3236 = vpop.f32.mrf.mxu0
    %3237 = vdwg.mxu0
    %3238 = vmatpush.bf16.msra.mxu0 %v3067
    %3239 = vmatpush.bf16.msra.mxu0 %v3063
    %3240 = vmatpush.bf16.msra.mxu0 %v3059
    %3241 = vmatpush.bf16.msra.mxu0 %v3055
    %3242 = vmatpush.bf16.msra.mxu0 %v3051
    %3243 = vmatpush.bf16.msra.mxu0 %v3047
    %3244 = vmatpush.bf16.msra.mxu0 %v3043
    %3245 = vmatpush.bf16.msra.mxu0 %v3039
    %3246 = vmatmul.bf16.gmra.mxu0 %v2429
    %v3247 = vpop.f32.mrf.mxu0
    %v3248 = vadd.f32 %v3235, %v3247
    %v3249 = vpop.f32.mrf.mxu0
    %3250 = vdwg.mxu0
    %3251 = vmatpush.bf16.msra.mxu0 %v2972
    %3252 = vmatpush.bf16.msra.mxu0 %v2968
    %3253 = vmatpush.bf16.msra.mxu0 %v2964
    %3254 = vmatpush.bf16.msra.mxu0 %v2960
    %3255 = vmatpush.bf16.msra.mxu0 %v2956
    %3256 = vmatpush.bf16.msra.mxu0 %v2952
    %3257 = vmatpush.bf16.msra.mxu0 %v2948
    %3258 = vmatpush.bf16.msra.mxu0 %v2944
    %3259 = vmatmul.bf16.gmra.mxu0 %v2426
    %v3260 = vpop.f32.mrf.mxu0
    %v3261 = vadd.f32 0.0, %v3260
    %v3262 = vpop.f32.mrf.mxu0
    %3263 = vdwg.mxu0
    %3264 = vmatpush.bf16.msra.mxu0 %v3004
    %3265 = vmatpush.bf16.msra.mxu0 %v3000
    %3266 = vmatpush.bf16.msra.mxu0 %v2996
    %3267 = vmatpush.bf16.msra.mxu0 %v2992
    %3268 = vmatpush.bf16.msra.mxu0 %v2988
    %3269 = vmatpush.bf16.msra.mxu0 %v2984
    %3270 = vmatpush.bf16.msra.mxu0 %v2980
    %3271 = vmatpush.bf16.msra.mxu0 %v2976
    %3272 = vmatmul.bf16.gmra.mxu0 %v2427
    %v3273 = vpop.f32.mrf.mxu0
    %v3274 = vadd.f32 %v3261, %v3273
    %v3275 = vpop.f32.mrf.mxu0
    %3276 = vdwg.mxu0
    %3277 = vmatpush.bf16.msra.mxu0 %v3036
    %3278 = vmatpush.bf16.msra.mxu0 %v3032
    %3279 = vmatpush.bf16.msra.mxu0 %v3028
    %3280 = vmatpush.bf16.msra.mxu0 %v3024
    %3281 = vmatpush.bf16.msra.mxu0 %v3020
    %3282 = vmatpush.bf16.msra.mxu0 %v3016
    %3283 = vmatpush.bf16.msra.mxu0 %v3012
    %3284 = vmatpush.bf16.msra.mxu0 %v3008
    %3285 = vmatmul.bf16.gmra.mxu0 %v2428
    %v3286 = vpop.f32.mrf.mxu0
    %v3287 = vadd.f32 %v3274, %v3286
    %v3288 = vpop.f32.mrf.mxu0
    %3289 = vdwg.mxu0
    %3290 = vmatpush.bf16.msra.mxu0 %v3068
    %3291 = vmatpush.bf16.msra.mxu0 %v3064
    %3292 = vmatpush.bf16.msra.mxu0 %v3060
    %3293 = vmatpush.bf16.msra.mxu0 %v3056
    %3294 = vmatpush.bf16.msra.mxu0 %v3052
    %3295 = vmatpush.bf16.msra.mxu0 %v3048
    %3296 = vmatpush.bf16.msra.mxu0 %v3044
    %3297 = vmatpush.bf16.msra.mxu0 %v3040
    %3298 = vmatmul.bf16.gmra.mxu0 %v2429
    %v3299 = vpop.f32.mrf.mxu0
    %v3300 = vadd.f32 %v3287, %v3299
    %v3301 = vpop.f32.mrf.mxu0
    %3302 = vdwg.mxu0
    %3303 = vmatpush.bf16.msra.mxu0 %v2973
    %3304 = vmatpush.bf16.msra.mxu0 %v2969
    %3305 = vmatpush.bf16.msra.mxu0 %v2965
    %3306 = vmatpush.bf16.msra.mxu0 %v2961
    %3307 = vmatpush.bf16.msra.mxu0 %v2957
    %3308 = vmatpush.bf16.msra.mxu0 %v2953
    %3309 = vmatpush.bf16.msra.mxu0 %v2949
    %3310 = vmatpush.bf16.msra.mxu0 %v2945
    %3311 = vmatmul.bf16.gmra.mxu0 %v2426
    %v3312 = vpop.f32.mrf.mxu0
    %v3313 = vadd.f32 0.0, %v3312
    %v3314 = vpop.f32.mrf.mxu0
    %3315 = vdwg.mxu0
    %3316 = vmatpush.bf16.msra.mxu0 %v3005
    %3317 = vmatpush.bf16.msra.mxu0 %v3001
    %3318 = vmatpush.bf16.msra.mxu0 %v2997
    %3319 = vmatpush.bf16.msra.mxu0 %v2993
    %3320 = vmatpush.bf16.msra.mxu0 %v2989
    %3321 = vmatpush.bf16.msra.mxu0 %v2985
    %3322 = vmatpush.bf16.msra.mxu0 %v2981
    %3323 = vmatpush.bf16.msra.mxu0 %v2977
    %3324 = vmatmul.bf16.gmra.mxu0 %v2427
    %v3325 = vpop.f32.mrf.mxu0
    %v3326 = vadd.f32 %v3313, %v3325
    %v3327 = vpop.f32.mrf.mxu0
    %3328 = vdwg.mxu0
    %3329 = vmatpush.bf16.msra.mxu0 %v3037
    %3330 = vmatpush.bf16.msra.mxu0 %v3033
    %3331 = vmatpush.bf16.msra.mxu0 %v3029
    %3332 = vmatpush.bf16.msra.mxu0 %v3025
    %3333 = vmatpush.bf16.msra.mxu0 %v3021
    %3334 = vmatpush.bf16.msra.mxu0 %v3017
    %3335 = vmatpush.bf16.msra.mxu0 %v3013
    %3336 = vmatpush.bf16.msra.mxu0 %v3009
    %3337 = vmatmul.bf16.gmra.mxu0 %v2428
    %v3338 = vpop.f32.mrf.mxu0
    %v3339 = vadd.f32 %v3326, %v3338
    %v3340 = vpop.f32.mrf.mxu0
    %3341 = vdwg.mxu0
    %3342 = vmatpush.bf16.msra.mxu0 %v3069
    %3343 = vmatpush.bf16.msra.mxu0 %v3065
    %3344 = vmatpush.bf16.msra.mxu0 %v3061
    %3345 = vmatpush.bf16.msra.mxu0 %v3057
    %3346 = vmatpush.bf16.msra.mxu0 %v3053
    %3347 = vmatpush.bf16.msra.mxu0 %v3049
    %3348 = vmatpush.bf16.msra.mxu0 %v3045
    %3349 = vmatpush.bf16.msra.mxu0 %v3041
    %3350 = vmatmul.bf16.gmra.mxu0 %v2429
    %v3351 = vpop.f32.mrf.mxu0
    %v3352 = vadd.f32 %v3339, %v3351
    %v3353 = vpop.f32.mrf.mxu0
    %3354 = vdwg.mxu0
    %3355 = vmatpush.bf16.msra.mxu0 %v2974
    %3356 = vmatpush.bf16.msra.mxu0 %v2970
    %3357 = vmatpush.bf16.msra.mxu0 %v2966
    %3358 = vmatpush.bf16.msra.mxu0 %v2962
    %3359 = vmatpush.bf16.msra.mxu0 %v2958
    %3360 = vmatpush.bf16.msra.mxu0 %v2954
    %3361 = vmatpush.bf16.msra.mxu0 %v2950
    %3362 = vmatpush.bf16.msra.mxu0 %v2946
    %3363 = vmatmul.bf16.gmra.mxu0 %v2426
    %v3364 = vpop.f32.mrf.mxu0
    %v3365 = vadd.f32 0.0, %v3364
    %v3366 = vpop.f32.mrf.mxu0
    %3367 = vdwg.mxu0
    %3368 = vmatpush.bf16.msra.mxu0 %v3006
    %3369 = vmatpush.bf16.msra.mxu0 %v3002
    %3370 = vmatpush.bf16.msra.mxu0 %v2998
    %3371 = vmatpush.bf16.msra.mxu0 %v2994
    %3372 = vmatpush.bf16.msra.mxu0 %v2990
    %3373 = vmatpush.bf16.msra.mxu0 %v2986
    %3374 = vmatpush.bf16.msra.mxu0 %v2982
    %3375 = vmatpush.bf16.msra.mxu0 %v2978
    %3376 = vmatmul.bf16.gmra.mxu0 %v2427
    %v3377 = vpop.f32.mrf.mxu0
    %v3378 = vadd.f32 %v3365, %v3377
    %v3379 = vpop.f32.mrf.mxu0
    %3380 = vdwg.mxu0
    %3381 = vmatpush.bf16.msra.mxu0 %v3038
    %3382 = vmatpush.bf16.msra.mxu0 %v3034
    %3383 = vmatpush.bf16.msra.mxu0 %v3030
    %3384 = vmatpush.bf16.msra.mxu0 %v3026
    %3385 = vmatpush.bf16.msra.mxu0 %v3022
    %3386 = vmatpush.bf16.msra.mxu0 %v3018
    %3387 = vmatpush.bf16.msra.mxu0 %v3014
    %3388 = vmatpush.bf16.msra.mxu0 %v3010
    %3389 = vmatmul.bf16.gmra.mxu0 %v2428
    %v3390 = vpop.f32.mrf.mxu0
    %v3391 = vadd.f32 %v3378, %v3390
    %v3392 = vpop.f32.mrf.mxu0
    %3393 = vdwg.mxu0
    %3394 = vmatpush.bf16.msra.mxu0 %v3070
    %3395 = vmatpush.bf16.msra.mxu0 %v3066
    %3396 = vmatpush.bf16.msra.mxu0 %v3062
    %3397 = vmatpush.bf16.msra.mxu0 %v3058
    %3398 = vmatpush.bf16.msra.mxu0 %v3054
    %3399 = vmatpush.bf16.msra.mxu0 %v3050
    %3400 = vmatpush.bf16.msra.mxu0 %v3046
    %3401 = vmatpush.bf16.msra.mxu0 %v3042
    %3402 = vmatmul.bf16.gmra.mxu0 %v2429
    %v3403 = vpop.f32.mrf.mxu0
    %v3404 = vadd.f32 %v3391, %v3403
    %v3405 = vpop.f32.mrf.mxu0
    %3406 = vdwg.mxu0
    %v3407 = vrot.slane %v3248, 4
    %v3408 = vadd.f32 %v3248, %v3407
    %v3409 = vrot.slane %v3408, 2
    %v3410 = vadd.f32 %v3408, %v3409
    %v3411 = vrot.slane %v3410, 1
    %v3412 = vadd.f32 %v3410, %v3411
    %v3413 = vrot.slane %v3300, 4
    %v3414 = vadd.f32 %v3300, %v3413
    %v3415 = vrot.slane %v3414, 2
    %v3416 = vadd.f32 %v3414, %v3415
    %v3417 = vrot.slane %v3416, 1
    %v3418 = vadd.f32 %v3416, %v3417
    %v3419 = vrot.slane %v3352, 4
    %v3420 = vadd.f32 %v3352, %v3419
    %v3421 = vrot.slane %v3420, 2
    %v3422 = vadd.f32 %v3420, %v3421
    %v3423 = vrot.slane %v3422, 1
    %v3424 = vadd.f32 %v3422, %v3423
    %v3425 = vrot.slane %v3404, 4
    %v3426 = vadd.f32 %v3404, %v3425
    %v3427 = vrot.slane %v3426, 2
    %v3428 = vadd.f32 %v3426, %v3427
    %v3429 = vrot.slane %v3428, 1
    %v3430 = vadd.f32 %v3428, %v3429
    %v3431 = vmul.f32 %v3248, %v3248
    %v3432 = vmul.f32 %v3300, %v3300
    %v3433 = vmul.f32 %v3352, %v3352
    %v3434 = vmul.f32 %v3404, %v3404
    %v3435 = vrot.slane %v3431, 4
    %v3436 = vadd.f32 %v3431, %v3435
    %v3437 = vrot.slane %v3436, 2
    %v3438 = vadd.f32 %v3436, %v3437
    %v3439 = vrot.slane %v3438, 1
    %v3440 = vadd.f32 %v3438, %v3439
    %v3441 = vrot.slane %v3432, 4
    %v3442 = vadd.f32 %v3432, %v3441
    %v3443 = vrot.slane %v3442, 2
    %v3444 = vadd.f32 %v3442, %v3443
    %v3445 = vrot.slane %v3444, 1
    %v3446 = vadd.f32 %v3444, %v3445
    %v3447 = vrot.slane %v3433, 4
    %v3448 = vadd.f32 %v3433, %v3447
    %v3449 = vrot.slane %v3448, 2
    %v3450 = vadd.f32 %v3448, %v3449
    %v3451 = vrot.slane %v3450, 1
    %v3452 = vadd.f32 %v3450, %v3451
    %v3453 = vrot.slane %v3434, 4
    %v3454 = vadd.f32 %v3434, %v3453
    %v3455 = vrot.slane %v3454, 2
    %v3456 = vadd.f32 %v3454, %v3455
    %v3457 = vrot.slane %v3456, 1
    %v3458 = vadd.f32 %v3456, %v3457
    %v3459 = vmul.f32 %v3412, 0.125
    %v3460 = vmul.f32 %v3418, 0.125
    %v3461 = vmul.f32 %v3424, 0.125
    %v3462 = vmul.f32 %v3430, 0.125
    %v3463 = vmul.f32 %v3440, 0.125
    %v3464 = vmul.f32 %v3446, 0.125
    %v3465 = vmul.f32 %v3452, 0.125
    %v3466 = vmul.f32 %v3458, 0.125
    %v3467 = vmul.f32 %v3459, %v3459
    %v3468 = vmul.f32 %v3460, %v3460
    %v3469 = vmul.f32 %v3461, %v3461
    %v3470 = vmul.f32 %v3462, %v3462
    %v3471 = vsub.f32 %v3463, %v3467
    %v3472 = vsub.f32 %v3464, %v3468
    %v3473 = vsub.f32 %v3465, %v3469
    %v3474 = vsub.f32 %v3466, %v3470
    %v3475 = vmax.f32 %v3471, 0.0
    %v3476 = vmax.f32 %v3472, 0.0
    %v3477 = vmax.f32 %v3473, 0.0
    %v3478 = vmax.f32 %v3474, 0.0
    %s3479 = scalar_lea.vmem [#allocation8], 64
    %v3480 = vld [vmem:[%s3479] ss:$8 sm:$0xf]
    %v3481 = vadd.f32 %v3475, 1e-05
    %v3482 = vadd.f32 %v3476, 1e-05
    %v3483 = vadd.f32 %v3477, 1e-05
    %v3484 = vadd.f32 %v3478, 1e-05
    %v3485 = vrsqrt.pop %v3481
    %v3486 = vmul.f32 %v3485, %v3481
    %v3487 = vmul.f32 %v3486, %v3485
    %v3488 = vmul.f32 0.5, %v3487
    %v3489 = vsub.f32 1.5, %v3488
    %v3490 = vmul.f32 %v3485, %v3489
    %vm3491 = vweird.f32 %v3481
    %vm3492 = vweird.f32 %v3485
    %vm3493 = vmor %vm3491, %vm3492
    %v3494 = vsel %vm3493, %v3485, %v3490
    %v3495 = vrsqrt.pop %v3482
    %v3496 = vmul.f32 %v3495, %v3482
    %v3497 = vmul.f32 %v3496, %v3495
    %v3498 = vmul.f32 0.5, %v3497
    %v3499 = vsub.f32 1.5, %v3498
    %v3500 = vmul.f32 %v3495, %v3499
    %vm3501 = vweird.f32 %v3482
    %vm3502 = vweird.f32 %v3495
    %vm3503 = vmor %vm3501, %vm3502
    %v3504 = vsel %vm3503, %v3495, %v3500
    %v3505 = vrsqrt.pop %v3483
    %v3506 = vmul.f32 %v3505, %v3483
    %v3507 = vmul.f32 %v3506, %v3505
    %v3508 = vmul.f32 0.5, %v3507
    %v3509 = vsub.f32 1.5, %v3508
    %v3510 = vmul.f32 %v3505, %v3509
    %vm3511 = vweird.f32 %v3483
    %vm3512 = vweird.f32 %v3505
    %vm3513 = vmor %vm3511, %vm3512
    %v3514 = vsel %vm3513, %v3505, %v3510
    %v3515 = vrsqrt.pop %v3484
    %v3516 = vmul.f32 %v3515, %v3484
    %v3517 = vmul.f32 %v3516, %v3515
    %v3518 = vmul.f32 0.5, %v3517
    %v3519 = vsub.f32 1.5, %v3518
    %v3520 = vmul.f32 %v3515, %v3519
    %vm3521 = vweird.f32 %v3484
    %vm3522 = vweird.f32 %v3515
    %vm3523 = vmor %vm3521, %vm3522
    %v3524 = vsel %vm3523, %v3515, %v3520
    %v3529 = vrot.slane %v3504, 7
    %v3530 = vrot.slane %v3514, 6
    %v3531 = vrot.slane %v3524, 5
    %v3532 = vsel %vm1211, %v3494, %v3529
    %v3533 = vsel %vm1213, %v3530, %v3531
    %v3534 = vsel %vm1215, %v3532, %v3533
    %v3536 = vmul.f32 %v3480, %v3534
    %s3537 = scalar_lea.vmem %s3479, 1 [#allocation8]
    %v3538 = vld [vmem:[%s3537] ss:$8 sm:$0xf]
    %v3540 = vperm.slane %v3536, 0
    %v3541 = vperm.slane %v3536, 1
    %v3542 = vperm.slane %v3536, 2
    %v3543 = vperm.slane %v3536, 3
    %v3548 = vmul.f32 %v3459, %v3540
    %v3549 = vmul.f32 %v3460, %v3541
    %v3550 = vmul.f32 %v3461, %v3542
    %v3551 = vmul.f32 %v3462, %v3543
    %v3556 = vrot.slane %v3549, 7
    %v3557 = vrot.slane %v3550, 6
    %v3558 = vrot.slane %v3551, 5
    %v3559 = vsel %vm1211, %v3548, %v3556
    %v3560 = vsel %vm1213, %v3557, %v3558
    %v3561 = vsel %vm1215, %v3559, %v3560
    %v3563 = vsub.f32 %v3538, %v3561
    %v3564 = vmul.f32 %v3248, %v3540
    %v3565 = vmul.f32 %v3300, %v3541
    %v3566 = vmul.f32 %v3352, %v3542
    %v3567 = vmul.f32 %v3404, %v3543
    %v3569 = vperm.slane %v3563, 0
    %v3570 = vperm.slane %v3563, 1
    %v3571 = vperm.slane %v3563, 2
    %v3572 = vperm.slane %v3563, 3
    %v3577 = vadd.f32 %v3564, %v3569
    %v3578 = vadd.f32 %v3565, %v3570
    %v3579 = vadd.f32 %v3566, %v3571
    %v3580 = vadd.f32 %v3567, %v3572
    %v3581 = vmax.f32 %v3577, 0.0
    %v3582 = vmax.f32 %v3578, 0.0
    %v3583 = vmax.f32 %v3579, 0.0
    %v3584 = vmax.f32 %v3580, 0.0
    %v3585 = vpack.c.bf16 %v3581, %v3581
    %v3586 = vpack.c.bf16 %v3582, %v3582
    %v3587 = vpack.c.bf16 %v3583, %v3583
    %v3588 = vpack.c.bf16 %v3584, %v3584
    %s3589 = scalar_lea.vmem [#allocation5], 3072
    %v3590 = vld [vmem:[%s3589] sm:$0xff]
    %v3591 = vld [vmem:[%s3589 + $0x8] sm:$0xff]
    %v3592 = vld [vmem:[%s3589 + $0x10] sm:$0xff]
    %v3593 = vld [vmem:[%s3589 + $0x18] sm:$0xff]
    %v3594 = vld [vmem:[%s3589 + $0x20] sm:$0xff]
    %v3595 = vld [vmem:[%s3589 + $0x28] sm:$0xff]
    %v3596 = vld [vmem:[%s3589 + $0x30] sm:$0xff]
    %v3597 = vld [vmem:[%s3589 + $0x38] sm:$0xff]
    %v3598 = vld [vmem:[%s3589 + $0x40] sm:$0xff]
    %v3599 = vld [vmem:[%s3589 + $0x48] sm:$0xff]
    %v3600 = vld [vmem:[%s3589 + $0x50] sm:$0xff]
    %v3601 = vld [vmem:[%s3589 + $0x58] sm:$0xff]
    %v3602 = vld [vmem:[%s3589 + $0x60] sm:$0xff]
    %v3603 = vld [vmem:[%s3589 + $0x68] sm:$0xff]
    %v3604 = vld [vmem:[%s3589 + $0x70] sm:$0xff]
    %v3605 = vld [vmem:[%s3589 + $0x78] sm:$0xff]
    %v3606 = vld [vmem:[%s3589 + $0x80] sm:$0xff]
    %v3607 = vld [vmem:[%s3589 + $0x88] sm:$0xff]
    %v3608 = vld [vmem:[%s3589 + $0x90] sm:$0xff]
    %v3609 = vld [vmem:[%s3589 + $0x98] sm:$0xff]
    %v3610 = vld [vmem:[%s3589 + $0xa0] sm:$0xff]
    %v3611 = vld [vmem:[%s3589 + $0xa8] sm:$0xff]
    %v3612 = vld [vmem:[%s3589 + $0xb0] sm:$0xff]
    %v3613 = vld [vmem:[%s3589 + $0xb8] sm:$0xff]
    %v3614 = vld [vmem:[%s3589 + $0xc0] sm:$0xff]
    %v3615 = vld [vmem:[%s3589 + $0xc8] sm:$0xff]
    %v3616 = vld [vmem:[%s3589 + $0xd0] sm:$0xff]
    %v3617 = vld [vmem:[%s3589 + $0xd8] sm:$0xff]
    %v3618 = vld [vmem:[%s3589 + $0xe0] sm:$0xff]
    %v3619 = vld [vmem:[%s3589 + $0xe8] sm:$0xff]
    %v3620 = vld [vmem:[%s3589 + $0xf0] sm:$0xff]
    %v3621 = vld [vmem:[%s3589 + $0xf8] sm:$0xff]
    %v3622 = vld [vmem:[%s3589 + $0x100] sm:$0xff]
    %v3623 = vld [vmem:[%s3589 + $0x108] sm:$0xff]
    %v3624 = vld [vmem:[%s3589 + $0x110] sm:$0xff]
    %v3625 = vld [vmem:[%s3589 + $0x118] sm:$0xff]
    %v3626 = vld [vmem:[%s3589 + $0x120] sm:$0xff]
    %v3627 = vld [vmem:[%s3589 + $0x128] sm:$0xff]
    %v3628 = vld [vmem:[%s3589 + $0x130] sm:$0xff]
    %v3629 = vld [vmem:[%s3589 + $0x138] sm:$0xff]
    %v3630 = vld [vmem:[%s3589 + $0x140] sm:$0xff]
    %v3631 = vld [vmem:[%s3589 + $0x148] sm:$0xff]
    %v3632 = vld [vmem:[%s3589 + $0x150] sm:$0xff]
    %v3633 = vld [vmem:[%s3589 + $0x158] sm:$0xff]
    %v3634 = vld [vmem:[%s3589 + $0x160] sm:$0xff]
    %v3635 = vld [vmem:[%s3589 + $0x168] sm:$0xff]
    %v3636 = vld [vmem:[%s3589 + $0x170] sm:$0xff]
    %v3637 = vld [vmem:[%s3589 + $0x178] sm:$0xff]
    %v3638 = vld [vmem:[%s3589 + $0x180] sm:$0xff]
    %v3639 = vld [vmem:[%s3589 + $0x188] sm:$0xff]
    %v3640 = vld [vmem:[%s3589 + $0x190] sm:$0xff]
    %v3641 = vld [vmem:[%s3589 + $0x198] sm:$0xff]
    %v3642 = vld [vmem:[%s3589 + $0x1a0] sm:$0xff]
    %v3643 = vld [vmem:[%s3589 + $0x1a8] sm:$0xff]
    %v3644 = vld [vmem:[%s3589 + $0x1b0] sm:$0xff]
    %v3645 = vld [vmem:[%s3589 + $0x1b8] sm:$0xff]
    %v3646 = vld [vmem:[%s3589 + $0x1c0] sm:$0xff]
    %v3647 = vld [vmem:[%s3589 + $0x1c8] sm:$0xff]
    %v3648 = vld [vmem:[%s3589 + $0x1d0] sm:$0xff]
    %v3649 = vld [vmem:[%s3589 + $0x1d8] sm:$0xff]
    %v3650 = vld [vmem:[%s3589 + $0x1e0] sm:$0xff]
    %v3651 = vld [vmem:[%s3589 + $0x1e8] sm:$0xff]
    %v3652 = vld [vmem:[%s3589 + $0x1f0] sm:$0xff]
    %v3653 = vld [vmem:[%s3589 + $0x1f8] sm:$0xff]
    %v3654 = vld [vmem:[%s3589 + $0x200] sm:$0xff]
    %v3655 = vld [vmem:[%s3589 + $0x208] sm:$0xff]
    %v3656 = vld [vmem:[%s3589 + $0x210] sm:$0xff]
    %v3657 = vld [vmem:[%s3589 + $0x218] sm:$0xff]
    %v3658 = vld [vmem:[%s3589 + $0x220] sm:$0xff]
    %v3659 = vld [vmem:[%s3589 + $0x228] sm:$0xff]
    %v3660 = vld [vmem:[%s3589 + $0x230] sm:$0xff]
    %v3661 = vld [vmem:[%s3589 + $0x238] sm:$0xff]
    %v3662 = vld [vmem:[%s3589 + $0x240] sm:$0xff]
    %v3663 = vld [vmem:[%s3589 + $0x248] sm:$0xff]
    %v3664 = vld [vmem:[%s3589 + $0x250] sm:$0xff]
    %v3665 = vld [vmem:[%s3589 + $0x258] sm:$0xff]
    %v3666 = vld [vmem:[%s3589 + $0x260] sm:$0xff]
    %v3667 = vld [vmem:[%s3589 + $0x268] sm:$0xff]
    %v3668 = vld [vmem:[%s3589 + $0x270] sm:$0xff]
    %v3669 = vld [vmem:[%s3589 + $0x278] sm:$0xff]
    %v3670 = vld [vmem:[%s3589 + $0x280] sm:$0xff]
    %v3671 = vld [vmem:[%s3589 + $0x288] sm:$0xff]
    %v3672 = vld [vmem:[%s3589 + $0x290] sm:$0xff]
    %v3673 = vld [vmem:[%s3589 + $0x298] sm:$0xff]
    %v3674 = vld [vmem:[%s3589 + $0x2a0] sm:$0xff]
    %v3675 = vld [vmem:[%s3589 + $0x2a8] sm:$0xff]
    %v3676 = vld [vmem:[%s3589 + $0x2b0] sm:$0xff]
    %v3677 = vld [vmem:[%s3589 + $0x2b8] sm:$0xff]
    %v3678 = vld [vmem:[%s3589 + $0x2c0] sm:$0xff]
    %v3679 = vld [vmem:[%s3589 + $0x2c8] sm:$0xff]
    %v3680 = vld [vmem:[%s3589 + $0x2d0] sm:$0xff]
    %v3681 = vld [vmem:[%s3589 + $0x2d8] sm:$0xff]
    %v3682 = vld [vmem:[%s3589 + $0x2e0] sm:$0xff]
    %v3683 = vld [vmem:[%s3589 + $0x2e8] sm:$0xff]
    %v3684 = vld [vmem:[%s3589 + $0x2f0] sm:$0xff]
    %v3685 = vld [vmem:[%s3589 + $0x2f8] sm:$0xff]
    %v3686 = vld [vmem:[%s3589 + $0x300] sm:$0xff]
    %v3687 = vld [vmem:[%s3589 + $0x308] sm:$0xff]
    %v3688 = vld [vmem:[%s3589 + $0x310] sm:$0xff]
    %v3689 = vld [vmem:[%s3589 + $0x318] sm:$0xff]
    %v3690 = vld [vmem:[%s3589 + $0x320] sm:$0xff]
    %v3691 = vld [vmem:[%s3589 + $0x328] sm:$0xff]
    %v3692 = vld [vmem:[%s3589 + $0x330] sm:$0xff]
    %v3693 = vld [vmem:[%s3589 + $0x338] sm:$0xff]
    %v3694 = vld [vmem:[%s3589 + $0x340] sm:$0xff]
    %v3695 = vld [vmem:[%s3589 + $0x348] sm:$0xff]
    %v3696 = vld [vmem:[%s3589 + $0x350] sm:$0xff]
    %v3697 = vld [vmem:[%s3589 + $0x358] sm:$0xff]
    %v3698 = vld [vmem:[%s3589 + $0x360] sm:$0xff]
    %v3699 = vld [vmem:[%s3589 + $0x368] sm:$0xff]
    %v3700 = vld [vmem:[%s3589 + $0x370] sm:$0xff]
    %v3701 = vld [vmem:[%s3589 + $0x378] sm:$0xff]
    %v3702 = vld [vmem:[%s3589 + $0x380] sm:$0xff]
    %v3703 = vld [vmem:[%s3589 + $0x388] sm:$0xff]
    %v3704 = vld [vmem:[%s3589 + $0x390] sm:$0xff]
    %v3705 = vld [vmem:[%s3589 + $0x398] sm:$0xff]
    %v3706 = vld [vmem:[%s3589 + $0x3a0] sm:$0xff]
    %v3707 = vld [vmem:[%s3589 + $0x3a8] sm:$0xff]
    %v3708 = vld [vmem:[%s3589 + $0x3b0] sm:$0xff]
    %v3709 = vld [vmem:[%s3589 + $0x3b8] sm:$0xff]
    %v3710 = vld [vmem:[%s3589 + $0x3c0] sm:$0xff]
    %v3711 = vld [vmem:[%s3589 + $0x3c8] sm:$0xff]
    %v3712 = vld [vmem:[%s3589 + $0x3d0] sm:$0xff]
    %v3713 = vld [vmem:[%s3589 + $0x3d8] sm:$0xff]
    %v3714 = vld [vmem:[%s3589 + $0x3e0] sm:$0xff]
    %v3715 = vld [vmem:[%s3589 + $0x3e8] sm:$0xff]
    %v3716 = vld [vmem:[%s3589 + $0x3f0] sm:$0xff]
    %v3717 = vld [vmem:[%s3589 + $0x3f8] sm:$0xff]
    %v3846 = vunpack.c.l.b16 %v3590
    %v3847 = vunpack.c.h.b16 %v3590
    %v3848 = vunpack.c.l.b16 %v3591
    %v3849 = vunpack.c.h.b16 %v3591
    %v3850 = vunpack.c.l.b16 %v3592
    %v3851 = vunpack.c.h.b16 %v3592
    %v3852 = vunpack.c.l.b16 %v3593
    %v3853 = vunpack.c.h.b16 %v3593
    %v3854 = vunpack.c.l.b16 %v3594
    %v3855 = vunpack.c.h.b16 %v3594
    %v3856 = vunpack.c.l.b16 %v3595
    %v3857 = vunpack.c.h.b16 %v3595
    %v3858 = vunpack.c.l.b16 %v3596
    %v3859 = vunpack.c.h.b16 %v3596
    %v3860 = vunpack.c.l.b16 %v3597
    %v3861 = vunpack.c.h.b16 %v3597
    %v3862 = vunpack.c.l.b16 %v3598
    %v3863 = vunpack.c.h.b16 %v3598
    %v3864 = vunpack.c.l.b16 %v3599
    %v3865 = vunpack.c.h.b16 %v3599
    %v3866 = vunpack.c.l.b16 %v3600
    %v3867 = vunpack.c.h.b16 %v3600
    %v3868 = vunpack.c.l.b16 %v3601
    %v3869 = vunpack.c.h.b16 %v3601
    %v3870 = vunpack.c.l.b16 %v3602
    %v3871 = vunpack.c.h.b16 %v3602
    %v3872 = vunpack.c.l.b16 %v3603
    %v3873 = vunpack.c.h.b16 %v3603
    %v3874 = vunpack.c.l.b16 %v3604
    %v3875 = vunpack.c.h.b16 %v3604
    %v3876 = vunpack.c.l.b16 %v3605
    %v3877 = vunpack.c.h.b16 %v3605
    %v3878 = vunpack.c.l.b16 %v3606
    %v3879 = vunpack.c.h.b16 %v3606
    %v3880 = vunpack.c.l.b16 %v3607
    %v3881 = vunpack.c.h.b16 %v3607
    %v3882 = vunpack.c.l.b16 %v3608
    %v3883 = vunpack.c.h.b16 %v3608
    %v3884 = vunpack.c.l.b16 %v3609
    %v3885 = vunpack.c.h.b16 %v3609
    %v3886 = vunpack.c.l.b16 %v3610
    %v3887 = vunpack.c.h.b16 %v3610
    %v3888 = vunpack.c.l.b16 %v3611
    %v3889 = vunpack.c.h.b16 %v3611
    %v3890 = vunpack.c.l.b16 %v3612
    %v3891 = vunpack.c.h.b16 %v3612
    %v3892 = vunpack.c.l.b16 %v3613
    %v3893 = vunpack.c.h.b16 %v3613
    %v3894 = vunpack.c.l.b16 %v3614
    %v3895 = vunpack.c.h.b16 %v3614
    %v3896 = vunpack.c.l.b16 %v3615
    %v3897 = vunpack.c.h.b16 %v3615
    %v3898 = vunpack.c.l.b16 %v3616
    %v3899 = vunpack.c.h.b16 %v3616
    %v3900 = vunpack.c.l.b16 %v3617
    %v3901 = vunpack.c.h.b16 %v3617
    %v3902 = vunpack.c.l.b16 %v3618
    %v3903 = vunpack.c.h.b16 %v3618
    %v3904 = vunpack.c.l.b16 %v3619
    %v3905 = vunpack.c.h.b16 %v3619
    %v3906 = vunpack.c.l.b16 %v3620
    %v3907 = vunpack.c.h.b16 %v3620
    %v3908 = vunpack.c.l.b16 %v3621
    %v3909 = vunpack.c.h.b16 %v3621
    %v3910 = vunpack.c.l.b16 %v3622
    %v3911 = vunpack.c.h.b16 %v3622
    %v3912 = vunpack.c.l.b16 %v3623
    %v3913 = vunpack.c.h.b16 %v3623
    %v3914 = vunpack.c.l.b16 %v3624
    %v3915 = vunpack.c.h.b16 %v3624
    %v3916 = vunpack.c.l.b16 %v3625
    %v3917 = vunpack.c.h.b16 %v3625
    %v3918 = vunpack.c.l.b16 %v3626
    %v3919 = vunpack.c.h.b16 %v3626
    %v3920 = vunpack.c.l.b16 %v3627
    %v3921 = vunpack.c.h.b16 %v3627
    %v3922 = vunpack.c.l.b16 %v3628
    %v3923 = vunpack.c.h.b16 %v3628
    %v3924 = vunpack.c.l.b16 %v3629
    %v3925 = vunpack.c.h.b16 %v3629
    %v3926 = vunpack.c.l.b16 %v3630
    %v3927 = vunpack.c.h.b16 %v3630
    %v3928 = vunpack.c.l.b16 %v3631
    %v3929 = vunpack.c.h.b16 %v3631
    %v3930 = vunpack.c.l.b16 %v3632
    %v3931 = vunpack.c.h.b16 %v3632
    %v3932 = vunpack.c.l.b16 %v3633
    %v3933 = vunpack.c.h.b16 %v3633
    %v3934 = vunpack.c.l.b16 %v3634
    %v3935 = vunpack.c.h.b16 %v3634
    %v3936 = vunpack.c.l.b16 %v3635
    %v3937 = vunpack.c.h.b16 %v3635
    %v3938 = vunpack.c.l.b16 %v3636
    %v3939 = vunpack.c.h.b16 %v3636
    %v3940 = vunpack.c.l.b16 %v3637
    %v3941 = vunpack.c.h.b16 %v3637
    %v3942 = vunpack.c.l.b16 %v3638
    %v3943 = vunpack.c.h.b16 %v3638
    %v3944 = vunpack.c.l.b16 %v3639
    %v3945 = vunpack.c.h.b16 %v3639
    %v3946 = vunpack.c.l.b16 %v3640
    %v3947 = vunpack.c.h.b16 %v3640
    %v3948 = vunpack.c.l.b16 %v3641
    %v3949 = vunpack.c.h.b16 %v3641
    %v3950 = vunpack.c.l.b16 %v3642
    %v3951 = vunpack.c.h.b16 %v3642
    %v3952 = vunpack.c.l.b16 %v3643
    %v3953 = vunpack.c.h.b16 %v3643
    %v3954 = vunpack.c.l.b16 %v3644
    %v3955 = vunpack.c.h.b16 %v3644
    %v3956 = vunpack.c.l.b16 %v3645
    %v3957 = vunpack.c.h.b16 %v3645
    %v3958 = vunpack.c.l.b16 %v3646
    %v3959 = vunpack.c.h.b16 %v3646
    %v3960 = vunpack.c.l.b16 %v3647
    %v3961 = vunpack.c.h.b16 %v3647
    %v3962 = vunpack.c.l.b16 %v3648
    %v3963 = vunpack.c.h.b16 %v3648
    %v3964 = vunpack.c.l.b16 %v3649
    %v3965 = vunpack.c.h.b16 %v3649
    %v3966 = vunpack.c.l.b16 %v3650
    %v3967 = vunpack.c.h.b16 %v3650
    %v3968 = vunpack.c.l.b16 %v3651
    %v3969 = vunpack.c.h.b16 %v3651
    %v3970 = vunpack.c.l.b16 %v3652
    %v3971 = vunpack.c.h.b16 %v3652
    %v3972 = vunpack.c.l.b16 %v3653
    %v3973 = vunpack.c.h.b16 %v3653
    %v3974 = vunpack.c.l.b16 %v3654
    %v3975 = vunpack.c.h.b16 %v3654
    %v3976 = vunpack.c.l.b16 %v3655
    %v3977 = vunpack.c.h.b16 %v3655
    %v3978 = vunpack.c.l.b16 %v3656
    %v3979 = vunpack.c.h.b16 %v3656
    %v3980 = vunpack.c.l.b16 %v3657
    %v3981 = vunpack.c.h.b16 %v3657
    %v3982 = vunpack.c.l.b16 %v3658
    %v3983 = vunpack.c.h.b16 %v3658
    %v3984 = vunpack.c.l.b16 %v3659
    %v3985 = vunpack.c.h.b16 %v3659
    %v3986 = vunpack.c.l.b16 %v3660
    %v3987 = vunpack.c.h.b16 %v3660
    %v3988 = vunpack.c.l.b16 %v3661
    %v3989 = vunpack.c.h.b16 %v3661
    %v3990 = vunpack.c.l.b16 %v3662
    %v3991 = vunpack.c.h.b16 %v3662
    %v3992 = vunpack.c.l.b16 %v3663
    %v3993 = vunpack.c.h.b16 %v3663
    %v3994 = vunpack.c.l.b16 %v3664
    %v3995 = vunpack.c.h.b16 %v3664
    %v3996 = vunpack.c.l.b16 %v3665
    %v3997 = vunpack.c.h.b16 %v3665
    %v3998 = vunpack.c.l.b16 %v3666
    %v3999 = vunpack.c.h.b16 %v3666
    %v4000 = vunpack.c.l.b16 %v3667
    %v4001 = vunpack.c.h.b16 %v3667
    %v4002 = vunpack.c.l.b16 %v3668
    %v4003 = vunpack.c.h.b16 %v3668
    %v4004 = vunpack.c.l.b16 %v3669
    %v4005 = vunpack.c.h.b16 %v3669
    %v4006 = vunpack.c.l.b16 %v3670
    %v4007 = vunpack.c.h.b16 %v3670
    %v4008 = vunpack.c.l.b16 %v3671
    %v4009 = vunpack.c.h.b16 %v3671
    %v4010 = vunpack.c.l.b16 %v3672
    %v4011 = vunpack.c.h.b16 %v3672
    %v4012 = vunpack.c.l.b16 %v3673
    %v4013 = vunpack.c.h.b16 %v3673
    %v4014 = vunpack.c.l.b16 %v3674
    %v4015 = vunpack.c.h.b16 %v3674
    %v4016 = vunpack.c.l.b16 %v3675
    %v4017 = vunpack.c.h.b16 %v3675
    %v4018 = vunpack.c.l.b16 %v3676
    %v4019 = vunpack.c.h.b16 %v3676
    %v4020 = vunpack.c.l.b16 %v3677
    %v4021 = vunpack.c.h.b16 %v3677
    %v4022 = vunpack.c.l.b16 %v3678
    %v4023 = vunpack.c.h.b16 %v3678
    %v4024 = vunpack.c.l.b16 %v3679
    %v4025 = vunpack.c.h.b16 %v3679
    %v4026 = vunpack.c.l.b16 %v3680
    %v4027 = vunpack.c.h.b16 %v3680
    %v4028 = vunpack.c.l.b16 %v3681
    %v4029 = vunpack.c.h.b16 %v3681
    %v4030 = vunpack.c.l.b16 %v3682
    %v4031 = vunpack.c.h.b16 %v3682
    %v4032 = vunpack.c.l.b16 %v3683
    %v4033 = vunpack.c.h.b16 %v3683
    %v4034 = vunpack.c.l.b16 %v3684
    %v4035 = vunpack.c.h.b16 %v3684
    %v4036 = vunpack.c.l.b16 %v3685
    %v4037 = vunpack.c.h.b16 %v3685
    %v4038 = vunpack.c.l.b16 %v3686
    %v4039 = vunpack.c.h.b16 %v3686
    %v4040 = vunpack.c.l.b16 %v3687
    %v4041 = vunpack.c.h.b16 %v3687
    %v4042 = vunpack.c.l.b16 %v3688
    %v4043 = vunpack.c.h.b16 %v3688
    %v4044 = vunpack.c.l.b16 %v3689
    %v4045 = vunpack.c.h.b16 %v3689
    %v4046 = vunpack.c.l.b16 %v3690
    %v4047 = vunpack.c.h.b16 %v3690
    %v4048 = vunpack.c.l.b16 %v3691
    %v4049 = vunpack.c.h.b16 %v3691
    %v4050 = vunpack.c.l.b16 %v3692
    %v4051 = vunpack.c.h.b16 %v3692
    %v4052 = vunpack.c.l.b16 %v3693
    %v4053 = vunpack.c.h.b16 %v3693
    %v4054 = vunpack.c.l.b16 %v3694
    %v4055 = vunpack.c.h.b16 %v3694
    %v4056 = vunpack.c.l.b16 %v3695
    %v4057 = vunpack.c.h.b16 %v3695
    %v4058 = vunpack.c.l.b16 %v3696
    %v4059 = vunpack.c.h.b16 %v3696
    %v4060 = vunpack.c.l.b16 %v3697
    %v4061 = vunpack.c.h.b16 %v3697
    %v4062 = vunpack.c.l.b16 %v3698
    %v4063 = vunpack.c.h.b16 %v3698
    %v4064 = vunpack.c.l.b16 %v3699
    %v4065 = vunpack.c.h.b16 %v3699
    %v4066 = vunpack.c.l.b16 %v3700
    %v4067 = vunpack.c.h.b16 %v3700
    %v4068 = vunpack.c.l.b16 %v3701
    %v4069 = vunpack.c.h.b16 %v3701
    %v4070 = vunpack.c.l.b16 %v3702
    %v4071 = vunpack.c.h.b16 %v3702
    %v4072 = vunpack.c.l.b16 %v3703
    %v4073 = vunpack.c.h.b16 %v3703
    %v4074 = vunpack.c.l.b16 %v3704
    %v4075 = vunpack.c.h.b16 %v3704
    %v4076 = vunpack.c.l.b16 %v3705
    %v4077 = vunpack.c.h.b16 %v3705
    %v4078 = vunpack.c.l.b16 %v3706
    %v4079 = vunpack.c.h.b16 %v3706
    %v4080 = vunpack.c.l.b16 %v3707
    %v4081 = vunpack.c.h.b16 %v3707
    %v4082 = vunpack.c.l.b16 %v3708
    %v4083 = vunpack.c.h.b16 %v3708
    %v4084 = vunpack.c.l.b16 %v3709
    %v4085 = vunpack.c.h.b16 %v3709
    %v4086 = vunpack.c.l.b16 %v3710
    %v4087 = vunpack.c.h.b16 %v3710
    %v4088 = vunpack.c.l.b16 %v3711
    %v4089 = vunpack.c.h.b16 %v3711
    %v4090 = vunpack.c.l.b16 %v3712
    %v4091 = vunpack.c.h.b16 %v3712
    %v4092 = vunpack.c.l.b16 %v3713
    %v4093 = vunpack.c.h.b16 %v3713
    %v4094 = vunpack.c.l.b16 %v3714
    %v4095 = vunpack.c.h.b16 %v3714
    %v4096 = vunpack.c.l.b16 %v3715
    %v4097 = vunpack.c.h.b16 %v3715
    %v4098 = vunpack.c.l.b16 %v3716
    %v4099 = vunpack.c.h.b16 %v3716
    %v4100 = vunpack.c.l.b16 %v3717
    %v4101 = vunpack.c.h.b16 %v3717
    %v4102 = vpack.c.b16 %v3850, %v3846
    %v4103 = vpack.c.b16 %v3851, %v3847
    %v4104 = vpack.c.b16 %v3852, %v3848
    %v4105 = vpack.c.b16 %v3853, %v3849
    %v4106 = vpack.c.b16 %v3858, %v3854
    %v4107 = vpack.c.b16 %v3859, %v3855
    %v4108 = vpack.c.b16 %v3860, %v3856
    %v4109 = vpack.c.b16 %v3861, %v3857
    %v4110 = vpack.c.b16 %v3866, %v3862
    %v4111 = vpack.c.b16 %v3867, %v3863
    %v4112 = vpack.c.b16 %v3868, %v3864
    %v4113 = vpack.c.b16 %v3869, %v3865
    %v4114 = vpack.c.b16 %v3874, %v3870
    %v4115 = vpack.c.b16 %v3875, %v3871
    %v4116 = vpack.c.b16 %v3876, %v3872
    %v4117 = vpack.c.b16 %v3877, %v3873
    %v4118 = vpack.c.b16 %v3882, %v3878
    %v4119 = vpack.c.b16 %v3883, %v3879
    %v4120 = vpack.c.b16 %v3884, %v3880
    %v4121 = vpack.c.b16 %v3885, %v3881
    %v4122 = vpack.c.b16 %v3890, %v3886
    %v4123 = vpack.c.b16 %v3891, %v3887
    %v4124 = vpack.c.b16 %v3892, %v3888
    %v4125 = vpack.c.b16 %v3893, %v3889
    %v4126 = vpack.c.b16 %v3898, %v3894
    %v4127 = vpack.c.b16 %v3899, %v3895
    %v4128 = vpack.c.b16 %v3900, %v3896
    %v4129 = vpack.c.b16 %v3901, %v3897
    %v4130 = vpack.c.b16 %v3906, %v3902
    %v4131 = vpack.c.b16 %v3907, %v3903
    %v4132 = vpack.c.b16 %v3908, %v3904
    %v4133 = vpack.c.b16 %v3909, %v3905
    %v4134 = vpack.c.b16 %v3914, %v3910
    %v4135 = vpack.c.b16 %v3915, %v3911
    %v4136 = vpack.c.b16 %v3916, %v3912
    %v4137 = vpack.c.b16 %v3917, %v3913
    %v4138 = vpack.c.b16 %v3922, %v3918
    %v4139 = vpack.c.b16 %v3923, %v3919
    %v4140 = vpack.c.b16 %v3924, %v3920
    %v4141 = vpack.c.b16 %v3925, %v3921
    %v4142 = vpack.c.b16 %v3930, %v3926
    %v4143 = vpack.c.b16 %v3931, %v3927
    %v4144 = vpack.c.b16 %v3932, %v3928
    %v4145 = vpack.c.b16 %v3933, %v3929
    %v4146 = vpack.c.b16 %v3938, %v3934
    %v4147 = vpack.c.b16 %v3939, %v3935
    %v4148 = vpack.c.b16 %v3940, %v3936
    %v4149 = vpack.c.b16 %v3941, %v3937
    %v4150 = vpack.c.b16 %v3946, %v3942
    %v4151 = vpack.c.b16 %v3947, %v3943
    %v4152 = vpack.c.b16 %v3948, %v3944
    %v4153 = vpack.c.b16 %v3949, %v3945
    %v4154 = vpack.c.b16 %v3954, %v3950
    %v4155 = vpack.c.b16 %v3955, %v3951
    %v4156 = vpack.c.b16 %v3956, %v3952
    %v4157 = vpack.c.b16 %v3957, %v3953
    %v4158 = vpack.c.b16 %v3962, %v3958
    %v4159 = vpack.c.b16 %v3963, %v3959
    %v4160 = vpack.c.b16 %v3964, %v3960
    %v4161 = vpack.c.b16 %v3965, %v3961
    %v4162 = vpack.c.b16 %v3970, %v3966
    %v4163 = vpack.c.b16 %v3971, %v3967
    %v4164 = vpack.c.b16 %v3972, %v3968
    %v4165 = vpack.c.b16 %v3973, %v3969
    %v4166 = vpack.c.b16 %v3978, %v3974
    %v4167 = vpack.c.b16 %v3979, %v3975
    %v4168 = vpack.c.b16 %v3980, %v3976
    %v4169 = vpack.c.b16 %v3981, %v3977
    %v4170 = vpack.c.b16 %v3986, %v3982
    %v4171 = vpack.c.b16 %v3987, %v3983
    %v4172 = vpack.c.b16 %v3988, %v3984
    %v4173 = vpack.c.b16 %v3989, %v3985
    %v4174 = vpack.c.b16 %v3994, %v3990
    %v4175 = vpack.c.b16 %v3995, %v3991
    %v4176 = vpack.c.b16 %v3996, %v3992
    %v4177 = vpack.c.b16 %v3997, %v3993
    %v4178 = vpack.c.b16 %v4002, %v3998
    %v4179 = vpack.c.b16 %v4003, %v3999
    %v4180 = vpack.c.b16 %v4004, %v4000
    %v4181 = vpack.c.b16 %v4005, %v4001
    %v4182 = vpack.c.b16 %v4010, %v4006
    %v4183 = vpack.c.b16 %v4011, %v4007
    %v4184 = vpack.c.b16 %v4012, %v4008
    %v4185 = vpack.c.b16 %v4013, %v4009
    %v4186 = vpack.c.b16 %v4018, %v4014
    %v4187 = vpack.c.b16 %v4019, %v4015
    %v4188 = vpack.c.b16 %v4020, %v4016
    %v4189 = vpack.c.b16 %v4021, %v4017
    %v4190 = vpack.c.b16 %v4026, %v4022
    %v4191 = vpack.c.b16 %v4027, %v4023
    %v4192 = vpack.c.b16 %v4028, %v4024
    %v4193 = vpack.c.b16 %v4029, %v4025
    %v4194 = vpack.c.b16 %v4034, %v4030
    %v4195 = vpack.c.b16 %v4035, %v4031
    %v4196 = vpack.c.b16 %v4036, %v4032
    %v4197 = vpack.c.b16 %v4037, %v4033
    %v4198 = vpack.c.b16 %v4042, %v4038
    %v4199 = vpack.c.b16 %v4043, %v4039
    %v4200 = vpack.c.b16 %v4044, %v4040
    %v4201 = vpack.c.b16 %v4045, %v4041
    %v4202 = vpack.c.b16 %v4050, %v4046
    %v4203 = vpack.c.b16 %v4051, %v4047
    %v4204 = vpack.c.b16 %v4052, %v4048
    %v4205 = vpack.c.b16 %v4053, %v4049
    %v4206 = vpack.c.b16 %v4058, %v4054
    %v4207 = vpack.c.b16 %v4059, %v4055
    %v4208 = vpack.c.b16 %v4060, %v4056
    %v4209 = vpack.c.b16 %v4061, %v4057
    %v4210 = vpack.c.b16 %v4066, %v4062
    %v4211 = vpack.c.b16 %v4067, %v4063
    %v4212 = vpack.c.b16 %v4068, %v4064
    %v4213 = vpack.c.b16 %v4069, %v4065
    %v4214 = vpack.c.b16 %v4074, %v4070
    %v4215 = vpack.c.b16 %v4075, %v4071
    %v4216 = vpack.c.b16 %v4076, %v4072
    %v4217 = vpack.c.b16 %v4077, %v4073
    %v4218 = vpack.c.b16 %v4082, %v4078
    %v4219 = vpack.c.b16 %v4083, %v4079
    %v4220 = vpack.c.b16 %v4084, %v4080
    %v4221 = vpack.c.b16 %v4085, %v4081
    %v4222 = vpack.c.b16 %v4090, %v4086
    %v4223 = vpack.c.b16 %v4091, %v4087
    %v4224 = vpack.c.b16 %v4092, %v4088
    %v4225 = vpack.c.b16 %v4093, %v4089
    %v4226 = vpack.c.b16 %v4098, %v4094
    %v4227 = vpack.c.b16 %v4099, %v4095
    %v4228 = vpack.c.b16 %v4100, %v4096
    %v4229 = vpack.c.b16 %v4101, %v4097
    %4358 = vmatpush.bf16.msra.mxu0 %v4130
    %4359 = vmatpush.bf16.msra.mxu0 %v4126
    %4360 = vmatpush.bf16.msra.mxu0 %v4122
    %4361 = vmatpush.bf16.msra.mxu0 %v4118
    %4362 = vmatpush.bf16.msra.mxu0 %v4114
    %4363 = vmatpush.bf16.msra.mxu0 %v4110
    %4364 = vmatpush.bf16.msra.mxu0 %v4106
    %4365 = vmatpush.bf16.msra.mxu0 %v4102
    %4366 = vmatmul.bf16.gmra.mxu0 %v3585
    %v4367 = vpop.f32.mrf.mxu0
    %v4368 = vadd.f32 0.0, %v4367
    %v4369 = vpop.f32.mrf.mxu0
    %4370 = vdwg.mxu0
    %4371 = vmatpush.bf16.msra.mxu0 %v4162
    %4372 = vmatpush.bf16.msra.mxu0 %v4158
    %4373 = vmatpush.bf16.msra.mxu0 %v4154
    %4374 = vmatpush.bf16.msra.mxu0 %v4150
    %4375 = vmatpush.bf16.msra.mxu0 %v4146
    %4376 = vmatpush.bf16.msra.mxu0 %v4142
    %4377 = vmatpush.bf16.msra.mxu0 %v4138
    %4378 = vmatpush.bf16.msra.mxu0 %v4134
    %4379 = vmatmul.bf16.gmra.mxu0 %v3586
    %v4380 = vpop.f32.mrf.mxu0
    %v4381 = vadd.f32 %v4368, %v4380
    %v4382 = vpop.f32.mrf.mxu0
    %4383 = vdwg.mxu0
    %4384 = vmatpush.bf16.msra.mxu0 %v4194
    %4385 = vmatpush.bf16.msra.mxu0 %v4190
    %4386 = vmatpush.bf16.msra.mxu0 %v4186
    %4387 = vmatpush.bf16.msra.mxu0 %v4182
    %4388 = vmatpush.bf16.msra.mxu0 %v4178
    %4389 = vmatpush.bf16.msra.mxu0 %v4174
    %4390 = vmatpush.bf16.msra.mxu0 %v4170
    %4391 = vmatpush.bf16.msra.mxu0 %v4166
    %4392 = vmatmul.bf16.gmra.mxu0 %v3587
    %v4393 = vpop.f32.mrf.mxu0
    %v4394 = vadd.f32 %v4381, %v4393
    %v4395 = vpop.f32.mrf.mxu0
    %4396 = vdwg.mxu0
    %4397 = vmatpush.bf16.msra.mxu0 %v4226
    %4398 = vmatpush.bf16.msra.mxu0 %v4222
    %4399 = vmatpush.bf16.msra.mxu0 %v4218
    %4400 = vmatpush.bf16.msra.mxu0 %v4214
    %4401 = vmatpush.bf16.msra.mxu0 %v4210
    %4402 = vmatpush.bf16.msra.mxu0 %v4206
    %4403 = vmatpush.bf16.msra.mxu0 %v4202
    %4404 = vmatpush.bf16.msra.mxu0 %v4198
    %4405 = vmatmul.bf16.gmra.mxu0 %v3588
    %v4406 = vpop.f32.mrf.mxu0
    %v4407 = vadd.f32 %v4394, %v4406
    %v4408 = vpop.f32.mrf.mxu0
    %4409 = vdwg.mxu0
    %4410 = vmatpush.bf16.msra.mxu0 %v4131
    %4411 = vmatpush.bf16.msra.mxu0 %v4127
    %4412 = vmatpush.bf16.msra.mxu0 %v4123
    %4413 = vmatpush.bf16.msra.mxu0 %v4119
    %4414 = vmatpush.bf16.msra.mxu0 %v4115
    %4415 = vmatpush.bf16.msra.mxu0 %v4111
    %4416 = vmatpush.bf16.msra.mxu0 %v4107
    %4417 = vmatpush.bf16.msra.mxu0 %v4103
    %4418 = vmatmul.bf16.gmra.mxu0 %v3585
    %v4419 = vpop.f32.mrf.mxu0
    %v4420 = vadd.f32 0.0, %v4419
    %v4421 = vpop.f32.mrf.mxu0
    %4422 = vdwg.mxu0
    %4423 = vmatpush.bf16.msra.mxu0 %v4163
    %4424 = vmatpush.bf16.msra.mxu0 %v4159
    %4425 = vmatpush.bf16.msra.mxu0 %v4155
    %4426 = vmatpush.bf16.msra.mxu0 %v4151
    %4427 = vmatpush.bf16.msra.mxu0 %v4147
    %4428 = vmatpush.bf16.msra.mxu0 %v4143
    %4429 = vmatpush.bf16.msra.mxu0 %v4139
    %4430 = vmatpush.bf16.msra.mxu0 %v4135
    %4431 = vmatmul.bf16.gmra.mxu0 %v3586
    %v4432 = vpop.f32.mrf.mxu0
    %v4433 = vadd.f32 %v4420, %v4432
    %v4434 = vpop.f32.mrf.mxu0
    %4435 = vdwg.mxu0
    %4436 = vmatpush.bf16.msra.mxu0 %v4195
    %4437 = vmatpush.bf16.msra.mxu0 %v4191
    %4438 = vmatpush.bf16.msra.mxu0 %v4187
    %4439 = vmatpush.bf16.msra.mxu0 %v4183
    %4440 = vmatpush.bf16.msra.mxu0 %v4179
    %4441 = vmatpush.bf16.msra.mxu0 %v4175
    %4442 = vmatpush.bf16.msra.mxu0 %v4171
    %4443 = vmatpush.bf16.msra.mxu0 %v4167
    %4444 = vmatmul.bf16.gmra.mxu0 %v3587
    %v4445 = vpop.f32.mrf.mxu0
    %v4446 = vadd.f32 %v4433, %v4445
    %v4447 = vpop.f32.mrf.mxu0
    %4448 = vdwg.mxu0
    %4449 = vmatpush.bf16.msra.mxu0 %v4227
    %4450 = vmatpush.bf16.msra.mxu0 %v4223
    %4451 = vmatpush.bf16.msra.mxu0 %v4219
    %4452 = vmatpush.bf16.msra.mxu0 %v4215
    %4453 = vmatpush.bf16.msra.mxu0 %v4211
    %4454 = vmatpush.bf16.msra.mxu0 %v4207
    %4455 = vmatpush.bf16.msra.mxu0 %v4203
    %4456 = vmatpush.bf16.msra.mxu0 %v4199
    %4457 = vmatmul.bf16.gmra.mxu0 %v3588
    %v4458 = vpop.f32.mrf.mxu0
    %v4459 = vadd.f32 %v4446, %v4458
    %v4460 = vpop.f32.mrf.mxu0
    %4461 = vdwg.mxu0
    %4462 = vmatpush.bf16.msra.mxu0 %v4132
    %4463 = vmatpush.bf16.msra.mxu0 %v4128
    %4464 = vmatpush.bf16.msra.mxu0 %v4124
    %4465 = vmatpush.bf16.msra.mxu0 %v4120
    %4466 = vmatpush.bf16.msra.mxu0 %v4116
    %4467 = vmatpush.bf16.msra.mxu0 %v4112
    %4468 = vmatpush.bf16.msra.mxu0 %v4108
    %4469 = vmatpush.bf16.msra.mxu0 %v4104
    %4470 = vmatmul.bf16.gmra.mxu0 %v3585
    %v4471 = vpop.f32.mrf.mxu0
    %v4472 = vadd.f32 0.0, %v4471
    %v4473 = vpop.f32.mrf.mxu0
    %4474 = vdwg.mxu0
    %4475 = vmatpush.bf16.msra.mxu0 %v4164
    %4476 = vmatpush.bf16.msra.mxu0 %v4160
    %4477 = vmatpush.bf16.msra.mxu0 %v4156
    %4478 = vmatpush.bf16.msra.mxu0 %v4152
    %4479 = vmatpush.bf16.msra.mxu0 %v4148
    %4480 = vmatpush.bf16.msra.mxu0 %v4144
    %4481 = vmatpush.bf16.msra.mxu0 %v4140
    %4482 = vmatpush.bf16.msra.mxu0 %v4136
    %4483 = vmatmul.bf16.gmra.mxu0 %v3586
    %v4484 = vpop.f32.mrf.mxu0
    %v4485 = vadd.f32 %v4472, %v4484
    %v4486 = vpop.f32.mrf.mxu0
    %4487 = vdwg.mxu0
    %4488 = vmatpush.bf16.msra.mxu0 %v4196
    %4489 = vmatpush.bf16.msra.mxu0 %v4192
    %4490 = vmatpush.bf16.msra.mxu0 %v4188
    %4491 = vmatpush.bf16.msra.mxu0 %v4184
    %4492 = vmatpush.bf16.msra.mxu0 %v4180
    %4493 = vmatpush.bf16.msra.mxu0 %v4176
    %4494 = vmatpush.bf16.msra.mxu0 %v4172
    %4495 = vmatpush.bf16.msra.mxu0 %v4168
    %4496 = vmatmul.bf16.gmra.mxu0 %v3587
    %v4497 = vpop.f32.mrf.mxu0
    %v4498 = vadd.f32 %v4485, %v4497
    %v4499 = vpop.f32.mrf.mxu0
    %4500 = vdwg.mxu0
    %4501 = vmatpush.bf16.msra.mxu0 %v4228
    %4502 = vmatpush.bf16.msra.mxu0 %v4224
    %4503 = vmatpush.bf16.msra.mxu0 %v4220
    %4504 = vmatpush.bf16.msra.mxu0 %v4216
    %4505 = vmatpush.bf16.msra.mxu0 %v4212
    %4506 = vmatpush.bf16.msra.mxu0 %v4208
    %4507 = vmatpush.bf16.msra.mxu0 %v4204
    %4508 = vmatpush.bf16.msra.mxu0 %v4200
    %4509 = vmatmul.bf16.gmra.mxu0 %v3588
    %v4510 = vpop.f32.mrf.mxu0
    %v4511 = vadd.f32 %v4498, %v4510
    %v4512 = vpop.f32.mrf.mxu0
    %4513 = vdwg.mxu0
    %4514 = vmatpush.bf16.msra.mxu0 %v4133
    %4515 = vmatpush.bf16.msra.mxu0 %v4129
    %4516 = vmatpush.bf16.msra.mxu0 %v4125
    %4517 = vmatpush.bf16.msra.mxu0 %v4121
    %4518 = vmatpush.bf16.msra.mxu0 %v4117
    %4519 = vmatpush.bf16.msra.mxu0 %v4113
    %4520 = vmatpush.bf16.msra.mxu0 %v4109
    %4521 = vmatpush.bf16.msra.mxu0 %v4105
    %4522 = vmatmul.bf16.gmra.mxu0 %v3585
    %v4523 = vpop.f32.mrf.mxu0
    %v4524 = vadd.f32 0.0, %v4523
    %v4525 = vpop.f32.mrf.mxu0
    %4526 = vdwg.mxu0
    %4527 = vmatpush.bf16.msra.mxu0 %v4165
    %4528 = vmatpush.bf16.msra.mxu0 %v4161
    %4529 = vmatpush.bf16.msra.mxu0 %v4157
    %4530 = vmatpush.bf16.msra.mxu0 %v4153
    %4531 = vmatpush.bf16.msra.mxu0 %v4149
    %4532 = vmatpush.bf16.msra.mxu0 %v4145
    %4533 = vmatpush.bf16.msra.mxu0 %v4141
    %4534 = vmatpush.bf16.msra.mxu0 %v4137
    %4535 = vmatmul.bf16.gmra.mxu0 %v3586
    %v4536 = vpop.f32.mrf.mxu0
    %v4537 = vadd.f32 %v4524, %v4536
    %v4538 = vpop.f32.mrf.mxu0
    %4539 = vdwg.mxu0
    %4540 = vmatpush.bf16.msra.mxu0 %v4197
    %4541 = vmatpush.bf16.msra.mxu0 %v4193
    %4542 = vmatpush.bf16.msra.mxu0 %v4189
    %4543 = vmatpush.bf16.msra.mxu0 %v4185
    %4544 = vmatpush.bf16.msra.mxu0 %v4181
    %4545 = vmatpush.bf16.msra.mxu0 %v4177
    %4546 = vmatpush.bf16.msra.mxu0 %v4173
    %4547 = vmatpush.bf16.msra.mxu0 %v4169
    %4548 = vmatmul.bf16.gmra.mxu0 %v3587
    %v4549 = vpop.f32.mrf.mxu0
    %v4550 = vadd.f32 %v4537, %v4549
    %v4551 = vpop.f32.mrf.mxu0
    %4552 = vdwg.mxu0
    %4553 = vmatpush.bf16.msra.mxu0 %v4229
    %4554 = vmatpush.bf16.msra.mxu0 %v4225
    %4555 = vmatpush.bf16.msra.mxu0 %v4221
    %4556 = vmatpush.bf16.msra.mxu0 %v4217
    %4557 = vmatpush.bf16.msra.mxu0 %v4213
    %4558 = vmatpush.bf16.msra.mxu0 %v4209
    %4559 = vmatpush.bf16.msra.mxu0 %v4205
    %4560 = vmatpush.bf16.msra.mxu0 %v4201
    %4561 = vmatmul.bf16.gmra.mxu0 %v3588
    %v4562 = vpop.f32.mrf.mxu0
    %v4563 = vadd.f32 %v4550, %v4562
    %v4564 = vpop.f32.mrf.mxu0
    %4565 = vdwg.mxu0
    %v4566 = vrot.slane %v4407, 4
    %v4567 = vadd.f32 %v4407, %v4566
    %v4568 = vrot.slane %v4567, 2
    %v4569 = vadd.f32 %v4567, %v4568
    %v4570 = vrot.slane %v4569, 1
    %v4571 = vadd.f32 %v4569, %v4570
    %v4572 = vrot.slane %v4459, 4
    %v4573 = vadd.f32 %v4459, %v4572
    %v4574 = vrot.slane %v4573, 2
    %v4575 = vadd.f32 %v4573, %v4574
    %v4576 = vrot.slane %v4575, 1
    %v4577 = vadd.f32 %v4575, %v4576
    %v4578 = vrot.slane %v4511, 4
    %v4579 = vadd.f32 %v4511, %v4578
    %v4580 = vrot.slane %v4579, 2
    %v4581 = vadd.f32 %v4579, %v4580
    %v4582 = vrot.slane %v4581, 1
    %v4583 = vadd.f32 %v4581, %v4582
    %v4584 = vrot.slane %v4563, 4
    %v4585 = vadd.f32 %v4563, %v4584
    %v4586 = vrot.slane %v4585, 2
    %v4587 = vadd.f32 %v4585, %v4586
    %v4588 = vrot.slane %v4587, 1
    %v4589 = vadd.f32 %v4587, %v4588
    %v4590 = vmul.f32 %v4407, %v4407
    %v4591 = vmul.f32 %v4459, %v4459
    %v4592 = vmul.f32 %v4511, %v4511
    %v4593 = vmul.f32 %v4563, %v4563
    %v4594 = vrot.slane %v4590, 4
    %v4595 = vadd.f32 %v4590, %v4594
    %v4596 = vrot.slane %v4595, 2
    %v4597 = vadd.f32 %v4595, %v4596
    %v4598 = vrot.slane %v4597, 1
    %v4599 = vadd.f32 %v4597, %v4598
    %v4600 = vrot.slane %v4591, 4
    %v4601 = vadd.f32 %v4591, %v4600
    %v4602 = vrot.slane %v4601, 2
    %v4603 = vadd.f32 %v4601, %v4602
    %v4604 = vrot.slane %v4603, 1
    %v4605 = vadd.f32 %v4603, %v4604
    %v4606 = vrot.slane %v4592, 4
    %v4607 = vadd.f32 %v4592, %v4606
    %v4608 = vrot.slane %v4607, 2
    %v4609 = vadd.f32 %v4607, %v4608
    %v4610 = vrot.slane %v4609, 1
    %v4611 = vadd.f32 %v4609, %v4610
    %v4612 = vrot.slane %v4593, 4
    %v4613 = vadd.f32 %v4593, %v4612
    %v4614 = vrot.slane %v4613, 2
    %v4615 = vadd.f32 %v4613, %v4614
    %v4616 = vrot.slane %v4615, 1
    %v4617 = vadd.f32 %v4615, %v4616
    %v4618 = vmul.f32 %v4571, 0.125
    %v4619 = vmul.f32 %v4577, 0.125
    %v4620 = vmul.f32 %v4583, 0.125
    %v4621 = vmul.f32 %v4589, 0.125
    %v4622 = vmul.f32 %v4599, 0.125
    %v4623 = vmul.f32 %v4605, 0.125
    %v4624 = vmul.f32 %v4611, 0.125
    %v4625 = vmul.f32 %v4617, 0.125
    %v4626 = vmul.f32 %v4618, %v4618
    %v4627 = vmul.f32 %v4619, %v4619
    %v4628 = vmul.f32 %v4620, %v4620
    %v4629 = vmul.f32 %v4621, %v4621
    %v4630 = vsub.f32 %v4622, %v4626
    %v4631 = vsub.f32 %v4623, %v4627
    %v4632 = vsub.f32 %v4624, %v4628
    %v4633 = vsub.f32 %v4625, %v4629
    %v4634 = vmax.f32 %v4630, 0.0
    %v4635 = vmax.f32 %v4631, 0.0
    %v4636 = vmax.f32 %v4632, 0.0
    %v4637 = vmax.f32 %v4633, 0.0
    %s4638 = scalar_lea.vmem [#allocation8], 96
    %v4639 = vld [vmem:[%s4638] ss:$8 sm:$0xf]
    %v4640 = vadd.f32 %v4634, 1e-05
    %v4641 = vadd.f32 %v4635, 1e-05
    %v4642 = vadd.f32 %v4636, 1e-05
    %v4643 = vadd.f32 %v4637, 1e-05
    %v4644 = vrsqrt.pop %v4640
    %v4645 = vmul.f32 %v4644, %v4640
    %v4646 = vmul.f32 %v4645, %v4644
    %v4647 = vmul.f32 0.5, %v4646
    %v4648 = vsub.f32 1.5, %v4647
    %v4649 = vmul.f32 %v4644, %v4648
    %vm4650 = vweird.f32 %v4640
    %vm4651 = vweird.f32 %v4644
    %vm4652 = vmor %vm4650, %vm4651
    %v4653 = vsel %vm4652, %v4644, %v4649
    %v4654 = vrsqrt.pop %v4641
    %v4655 = vmul.f32 %v4654, %v4641
    %v4656 = vmul.f32 %v4655, %v4654
    %v4657 = vmul.f32 0.5, %v4656
    %v4658 = vsub.f32 1.5, %v4657
    %v4659 = vmul.f32 %v4654, %v4658
    %vm4660 = vweird.f32 %v4641
    %vm4661 = vweird.f32 %v4654
    %vm4662 = vmor %vm4660, %vm4661
    %v4663 = vsel %vm4662, %v4654, %v4659
    %v4664 = vrsqrt.pop %v4642
    %v4665 = vmul.f32 %v4664, %v4642
    %v4666 = vmul.f32 %v4665, %v4664
    %v4667 = vmul.f32 0.5, %v4666
    %v4668 = vsub.f32 1.5, %v4667
    %v4669 = vmul.f32 %v4664, %v4668
    %vm4670 = vweird.f32 %v4642
    %vm4671 = vweird.f32 %v4664
    %vm4672 = vmor %vm4670, %vm4671
    %v4673 = vsel %vm4672, %v4664, %v4669
    %v4674 = vrsqrt.pop %v4643
    %v4675 = vmul.f32 %v4674, %v4643
    %v4676 = vmul.f32 %v4675, %v4674
    %v4677 = vmul.f32 0.5, %v4676
    %v4678 = vsub.f32 1.5, %v4677
    %v4679 = vmul.f32 %v4674, %v4678
    %vm4680 = vweird.f32 %v4643
    %vm4681 = vweird.f32 %v4674
    %vm4682 = vmor %vm4680, %vm4681
    %v4683 = vsel %vm4682, %v4674, %v4679
    %v4688 = vrot.slane %v4663, 7
    %v4689 = vrot.slane %v4673, 6
    %v4690 = vrot.slane %v4683, 5
    %v4691 = vsel %vm1211, %v4653, %v4688
    %v4692 = vsel %vm1213, %v4689, %v4690
    %v4693 = vsel %vm1215, %v4691, %v4692
    %v4695 = vmul.f32 %v4639, %v4693
    %s4696 = scalar_lea.vmem %s4638, 1 [#allocation8]
    %v4697 = vld [vmem:[%s4696] ss:$8 sm:$0xf]
    %v4699 = vperm.slane %v4695, 0
    %v4700 = vperm.slane %v4695, 1
    %v4701 = vperm.slane %v4695, 2
    %v4702 = vperm.slane %v4695, 3
    %v4707 = vmul.f32 %v4618, %v4699
    %v4708 = vmul.f32 %v4619, %v4700
    %v4709 = vmul.f32 %v4620, %v4701
    %v4710 = vmul.f32 %v4621, %v4702
    %v4715 = vrot.slane %v4708, 7
    %v4716 = vrot.slane %v4709, 6
    %v4717 = vrot.slane %v4710, 5
    %v4718 = vsel %vm1211, %v4707, %v4715
    %v4719 = vsel %vm1213, %v4716, %v4717
    %v4720 = vsel %vm1215, %v4718, %v4719
    %v4722 = vsub.f32 %v4697, %v4720
    %v4723 = vmul.f32 %v4407, %v4699
    %v4724 = vmul.f32 %v4459, %v4700
    %v4725 = vmul.f32 %v4511, %v4701
    %v4726 = vmul.f32 %v4563, %v4702
    %v4728 = vperm.slane %v4722, 0
    %v4729 = vperm.slane %v4722, 1
    %v4730 = vperm.slane %v4722, 2
    %v4731 = vperm.slane %v4722, 3
    %v4736 = vadd.f32 %v4723, %v4728
    %v4737 = vadd.f32 %v4724, %v4729
    %v4738 = vadd.f32 %v4725, %v4730
    %v4739 = vadd.f32 %v4726, %v4731
    %v4740 = vmax.f32 %v4736, 0.0
    %v4741 = vmax.f32 %v4737, 0.0
    %v4742 = vmax.f32 %v4738, 0.0
    %v4743 = vmax.f32 %v4739, 0.0
    %v4744 = vpack.c.bf16 %v4740, %v4740
    %v4745 = vpack.c.bf16 %v4741, %v4741
    %v4746 = vpack.c.bf16 %v4742, %v4742
    %v4747 = vpack.c.bf16 %v4743, %v4743
    %v4748 = vld [vmem:[#allocation7] sm:$0xf]
    %v4749 = vld [vmem:[#allocation7 + $0x4] sm:$0xf]
    %v4750 = vld [vmem:[#allocation7 + $0x8] sm:$0xf]
    %v4751 = vld [vmem:[#allocation7 + $0xc] sm:$0xf]
    %v4752 = vld [vmem:[#allocation7 + $0x10] sm:$0xf]
    %v4753 = vld [vmem:[#allocation7 + $0x14] sm:$0xf]
    %v4754 = vld [vmem:[#allocation7 + $0x18] sm:$0xf]
    %v4755 = vld [vmem:[#allocation7 + $0x1c] sm:$0xf]
    %v4756 = vld [vmem:[#allocation7 + $0x20] sm:$0xf]
    %v4757 = vld [vmem:[#allocation7 + $0x24] sm:$0xf]
    %v4758 = vld [vmem:[#allocation7 + $0x28] sm:$0xf]
    %v4759 = vld [vmem:[#allocation7 + $0x2c] sm:$0xf]
    %v4760 = vld [vmem:[#allocation7 + $0x30] sm:$0xf]
    %v4761 = vld [vmem:[#allocation7 + $0x34] sm:$0xf]
    %v4762 = vld [vmem:[#allocation7 + $0x38] sm:$0xf]
    %v4763 = vld [vmem:[#allocation7 + $0x3c] sm:$0xf]
    %v4764 = vld [vmem:[#allocation7 + $0x40] sm:$0xf]
    %v4765 = vld [vmem:[#allocation7 + $0x44] sm:$0xf]
    %v4766 = vld [vmem:[#allocation7 + $0x48] sm:$0xf]
    %v4767 = vld [vmem:[#allocation7 + $0x4c] sm:$0xf]
    %v4768 = vld [vmem:[#allocation7 + $0x50] sm:$0xf]
    %v4769 = vld [vmem:[#allocation7 + $0x54] sm:$0xf]
    %v4770 = vld [vmem:[#allocation7 + $0x58] sm:$0xf]
    %v4771 = vld [vmem:[#allocation7 + $0x5c] sm:$0xf]
    %v4772 = vld [vmem:[#allocation7 + $0x60] sm:$0xf]
    %v4773 = vld [vmem:[#allocation7 + $0x64] sm:$0xf]
    %v4774 = vld [vmem:[#allocation7 + $0x68] sm:$0xf]
    %v4775 = vld [vmem:[#allocation7 + $0x6c] sm:$0xf]
    %v4776 = vld [vmem:[#allocation7 + $0x70] sm:$0xf]
    %v4777 = vld [vmem:[#allocation7 + $0x74] sm:$0xf]
    %v4778 = vld [vmem:[#allocation7 + $0x78] sm:$0xf]
    %v4779 = vld [vmem:[#allocation7 + $0x7c] sm:$0xf]
    %v4780 = vld [vmem:[#allocation7 + $0x80] sm:$0xf]
    %v4781 = vld [vmem:[#allocation7 + $0x84] sm:$0xf]
    %v4782 = vld [vmem:[#allocation7 + $0x88] sm:$0xf]
    %v4783 = vld [vmem:[#allocation7 + $0x8c] sm:$0xf]
    %v4784 = vld [vmem:[#allocation7 + $0x90] sm:$0xf]
    %v4785 = vld [vmem:[#allocation7 + $0x94] sm:$0xf]
    %v4786 = vld [vmem:[#allocation7 + $0x98] sm:$0xf]
    %v4787 = vld [vmem:[#allocation7 + $0x9c] sm:$0xf]
    %v4788 = vld [vmem:[#allocation7 + $0xa0] sm:$0xf]
    %v4789 = vld [vmem:[#allocation7 + $0xa4] sm:$0xf]
    %v4790 = vld [vmem:[#allocation7 + $0xa8] sm:$0xf]
    %v4791 = vld [vmem:[#allocation7 + $0xac] sm:$0xf]
    %v4792 = vld [vmem:[#allocation7 + $0xb0] sm:$0xf]
    %v4793 = vld [vmem:[#allocation7 + $0xb4] sm:$0xf]
    %v4794 = vld [vmem:[#allocation7 + $0xb8] sm:$0xf]
    %v4795 = vld [vmem:[#allocation7 + $0xbc] sm:$0xf]
    %v4796 = vld [vmem:[#allocation7 + $0xc0] sm:$0xf]
    %v4797 = vld [vmem:[#allocation7 + $0xc4] sm:$0xf]
    %v4798 = vld [vmem:[#allocation7 + $0xc8] sm:$0xf]
    %v4799 = vld [vmem:[#allocation7 + $0xcc] sm:$0xf]
    %v4800 = vld [vmem:[#allocation7 + $0xd0] sm:$0xf]
    %v4801 = vld [vmem:[#allocation7 + $0xd4] sm:$0xf]
    %v4802 = vld [vmem:[#allocation7 + $0xd8] sm:$0xf]
    %v4803 = vld [vmem:[#allocation7 + $0xdc] sm:$0xf]
    %v4804 = vld [vmem:[#allocation7 + $0xe0] sm:$0xf]
    %v4805 = vld [vmem:[#allocation7 + $0xe4] sm:$0xf]
    %v4806 = vld [vmem:[#allocation7 + $0xe8] sm:$0xf]
    %v4807 = vld [vmem:[#allocation7 + $0xec] sm:$0xf]
    %v4808 = vld [vmem:[#allocation7 + $0xf0] sm:$0xf]
    %v4809 = vld [vmem:[#allocation7 + $0xf4] sm:$0xf]
    %v4810 = vld [vmem:[#allocation7 + $0xf8] sm:$0xf]
    %v4811 = vld [vmem:[#allocation7 + $0xfc] sm:$0xf]
    %v4812 = vld [vmem:[#allocation10] sm:$0x1]
    %v4814 = vperm.slane %v4812, 0
    %v4880 = vunpack.c.l.b16 %v4748
    %v4881 = vunpack.c.l.b16 %v4749
    %v4882 = vunpack.c.l.b16 %v4750
    %v4883 = vunpack.c.l.b16 %v4751
    %v4884 = vunpack.c.l.b16 %v4752
    %v4885 = vunpack.c.l.b16 %v4753
    %v4886 = vunpack.c.l.b16 %v4754
    %v4887 = vunpack.c.l.b16 %v4755
    %v4888 = vunpack.c.l.b16 %v4756
    %v4889 = vunpack.c.l.b16 %v4757
    %v4890 = vunpack.c.l.b16 %v4758
    %v4891 = vunpack.c.l.b16 %v4759
    %v4892 = vunpack.c.l.b16 %v4760
    %v4893 = vunpack.c.l.b16 %v4761
    %v4894 = vunpack.c.l.b16 %v4762
    %v4895 = vunpack.c.l.b16 %v4763
    %v4896 = vunpack.c.l.b16 %v4764
    %v4897 = vunpack.c.l.b16 %v4765
    %v4898 = vunpack.c.l.b16 %v4766
    %v4899 = vunpack.c.l.b16 %v4767
    %v4900 = vunpack.c.l.b16 %v4768
    %v4901 = vunpack.c.l.b16 %v4769
    %v4902 = vunpack.c.l.b16 %v4770
    %v4903 = vunpack.c.l.b16 %v4771
    %v4904 = vunpack.c.l.b16 %v4772
    %v4905 = vunpack.c.l.b16 %v4773
    %v4906 = vunpack.c.l.b16 %v4774
    %v4907 = vunpack.c.l.b16 %v4775
    %v4908 = vunpack.c.l.b16 %v4776
    %v4909 = vunpack.c.l.b16 %v4777
    %v4910 = vunpack.c.l.b16 %v4778
    %v4911 = vunpack.c.l.b16 %v4779
    %v4912 = vunpack.c.l.b16 %v4780
    %v4913 = vunpack.c.l.b16 %v4781
    %v4914 = vunpack.c.l.b16 %v4782
    %v4915 = vunpack.c.l.b16 %v4783
    %v4916 = vunpack.c.l.b16 %v4784
    %v4917 = vunpack.c.l.b16 %v4785
    %v4918 = vunpack.c.l.b16 %v4786
    %v4919 = vunpack.c.l.b16 %v4787
    %v4920 = vunpack.c.l.b16 %v4788
    %v4921 = vunpack.c.l.b16 %v4789
    %v4922 = vunpack.c.l.b16 %v4790
    %v4923 = vunpack.c.l.b16 %v4791
    %v4924 = vunpack.c.l.b16 %v4792
    %v4925 = vunpack.c.l.b16 %v4793
    %v4926 = vunpack.c.l.b16 %v4794
    %v4927 = vunpack.c.l.b16 %v4795
    %v4928 = vunpack.c.l.b16 %v4796
    %v4929 = vunpack.c.l.b16 %v4797
    %v4930 = vunpack.c.l.b16 %v4798
    %v4931 = vunpack.c.l.b16 %v4799
    %v4932 = vunpack.c.l.b16 %v4800
    %v4933 = vunpack.c.l.b16 %v4801
    %v4934 = vunpack.c.l.b16 %v4802
    %v4935 = vunpack.c.l.b16 %v4803
    %v4936 = vunpack.c.l.b16 %v4804
    %v4937 = vunpack.c.l.b16 %v4805
    %v4938 = vunpack.c.l.b16 %v4806
    %v4939 = vunpack.c.l.b16 %v4807
    %v4940 = vunpack.c.l.b16 %v4808
    %v4941 = vunpack.c.l.b16 %v4809
    %v4942 = vunpack.c.l.b16 %v4810
    %v4943 = vunpack.c.l.b16 %v4811
    %v4944 = vpack.c.b16 %v4881, %v4880
    %v4945 = vpack.c.b16 %v4883, %v4882
    %v4946 = vpack.c.b16 %v4885, %v4884
    %v4947 = vpack.c.b16 %v4887, %v4886
    %v4948 = vpack.c.b16 %v4889, %v4888
    %v4949 = vpack.c.b16 %v4891, %v4890
    %v4950 = vpack.c.b16 %v4893, %v4892
    %v4951 = vpack.c.b16 %v4895, %v4894
    %v4952 = vpack.c.b16 %v4897, %v4896
    %v4953 = vpack.c.b16 %v4899, %v4898
    %v4954 = vpack.c.b16 %v4901, %v4900
    %v4955 = vpack.c.b16 %v4903, %v4902
    %v4956 = vpack.c.b16 %v4905, %v4904
    %v4957 = vpack.c.b16 %v4907, %v4906
    %v4958 = vpack.c.b16 %v4909, %v4908
    %v4959 = vpack.c.b16 %v4911, %v4910
    %v4960 = vpack.c.b16 %v4913, %v4912
    %v4961 = vpack.c.b16 %v4915, %v4914
    %v4962 = vpack.c.b16 %v4917, %v4916
    %v4963 = vpack.c.b16 %v4919, %v4918
    %v4964 = vpack.c.b16 %v4921, %v4920
    %v4965 = vpack.c.b16 %v4923, %v4922
    %v4966 = vpack.c.b16 %v4925, %v4924
    %v4967 = vpack.c.b16 %v4927, %v4926
    %v4968 = vpack.c.b16 %v4929, %v4928
    %v4969 = vpack.c.b16 %v4931, %v4930
    %v4970 = vpack.c.b16 %v4933, %v4932
    %v4971 = vpack.c.b16 %v4935, %v4934
    %v4972 = vpack.c.b16 %v4937, %v4936
    %v4973 = vpack.c.b16 %v4939, %v4938
    %v4974 = vpack.c.b16 %v4941, %v4940
    %v4975 = vpack.c.b16 %v4943, %v4942
    %5008 = vmatpush.bf16.msra.mxu0 %v4951
    %5009 = vmatpush.bf16.msra.mxu0 %v4950
    %5010 = vmatpush.bf16.msra.mxu0 %v4949
    %5011 = vmatpush.bf16.msra.mxu0 %v4948
    %5012 = vmatpush.bf16.msra.mxu0 %v4947
    %5013 = vmatpush.bf16.msra.mxu0 %v4946
    %5014 = vmatpush.bf16.msra.mxu0 %v4945
    %5015 = vmatpush.bf16.msra.mxu0 %v4944
    %5016 = vmatmul.bf16.gmra.mxu0 %v4744
    %v5017 = vpop.f32.mrf.mxu0
    %v5018 = vadd.f32 %v4814, %v5017
    %v5019 = vpop.f32.mrf.mxu0
    %5020 = vdwg.mxu0
    %5021 = vmatpush.bf16.msra.mxu0 %v4959
    %5022 = vmatpush.bf16.msra.mxu0 %v4958
    %5023 = vmatpush.bf16.msra.mxu0 %v4957
    %5024 = vmatpush.bf16.msra.mxu0 %v4956
    %5025 = vmatpush.bf16.msra.mxu0 %v4955
    %5026 = vmatpush.bf16.msra.mxu0 %v4954
    %5027 = vmatpush.bf16.msra.mxu0 %v4953
    %5028 = vmatpush.bf16.msra.mxu0 %v4952
    %5029 = vmatmul.bf16.gmra.mxu0 %v4745
    %v5030 = vpop.f32.mrf.mxu0
    %v5031 = vadd.f32 %v5018, %v5030
    %v5032 = vpop.f32.mrf.mxu0
    %5033 = vdwg.mxu0
    %5034 = vmatpush.bf16.msra.mxu0 %v4967
    %5035 = vmatpush.bf16.msra.mxu0 %v4966
    %5036 = vmatpush.bf16.msra.mxu0 %v4965
    %5037 = vmatpush.bf16.msra.mxu0 %v4964
    %5038 = vmatpush.bf16.msra.mxu0 %v4963
    %5039 = vmatpush.bf16.msra.mxu0 %v4962
    %5040 = vmatpush.bf16.msra.mxu0 %v4961
    %5041 = vmatpush.bf16.msra.mxu0 %v4960
    %5042 = vmatmul.bf16.gmra.mxu0 %v4746
    %v5043 = vpop.f32.mrf.mxu0
    %v5044 = vadd.f32 %v5031, %v5043
    %v5045 = vpop.f32.mrf.mxu0
    %5046 = vdwg.mxu0
    %5047 = vmatpush.bf16.msra.mxu0 %v4975
    %5048 = vmatpush.bf16.msra.mxu0 %v4974
    %5049 = vmatpush.bf16.msra.mxu0 %v4973
    %5050 = vmatpush.bf16.msra.mxu0 %v4972
    %5051 = vmatpush.bf16.msra.mxu0 %v4971
    %5052 = vmatpush.bf16.msra.mxu0 %v4970
    %5053 = vmatpush.bf16.msra.mxu0 %v4969
    %5054 = vmatpush.bf16.msra.mxu0 %v4968
    %5055 = vmatmul.bf16.gmra.mxu0 %v4747
    %v5056 = vpop.f32.mrf.mxu0
    %v5057 = vadd.f32 %v5044, %v5056
    %v5058 = vpop.f32.mrf.mxu0
    %5059 = vdwg.mxu0
    %5060 = vst [vmem:[#allocation11] sm:$0xff] %v5057
    // Predicated region
    $region42: #{tpu_custom_call.1} parent=1 // pred_check
      _
    $region43: #{tpu_custom_call.1} parent=1 // pred_check_branch
      %5062 = sbr.rel (0) target = $region45
    $region44: #{tpu_custom_call.1} parent=1 // pred_region
      %5064 = vsyncadd [#allocation4], 0
      %s5066 = sshll.u32 [#allocation11], 4
      %s5067 = int_to_ptr.vmem [resolvable:$true] %s5066
      %s5068 = sshll.u32 %s5, 4
      %s5069 = int_to_ptr.hbm [resolvable:$true] %s5068
      %5071 = dma.vmem_to_hbm [thread:$0]  %s5067, 128, %s5069, [#allocation4]
    $region45: #{tpu_custom_call.1} parent=1 // pred_fallthru
      _
    // Predicated region
    $region46: #{tpu_custom_call.1} parent=1 // pred_check
      _
    $region47: #{tpu_custom_call.1} parent=1 // pred_check_branch
      %5073 = sbr.rel (0) target = $region49
    $region48: #{tpu_custom_call.1} parent=1 // pred_region
      %5075 = dma.done [#allocation4], 128
    $region49: #{tpu_custom_call.1} parent=1 // pred_fallthru
      _
    %5076 = vsyncpa [#allocation3], 1
    %5077 = vsyncpa [#allocation6], 1
    %5078 = vsyncpa [#allocation9], 1
    %5079 = vsyncpa [#allocation4], 1

</llo_original>
